<compile_context>
chip_gen: v5e
topology: v5e:2x2
jax: 0.10.0
libtpu: 0.0.40
codegen_flags: <defaults>
</compile_context>

<pallas_src>
import functools

import jax
import jax.numpy as jnp
from jax import lax
from jax.experimental import pallas as pl
from jax.experimental.pallas import tpu as pltpu

MXU_DTYPE = jnp.bfloat16           # matmul operand dtype (f32 accumulation)
VMEM_LIMIT = 32 * 1024 * 1024      # within v7x 64 MiB physical / 32 MiB scoped


def _round_up(x, m):
    return (x + m - 1) // m * m


def _pick_t_block(T, rows_per_t, target_rows=512):
    """Largest divisor of T keeping ~target_rows graph rows resident per block."""
    tt = max(1, min(T, target_rows // max(1, rows_per_t)))
    while T % tt:
        tt -= 1
    return tt


# ----------------------------------------------------------------------------
# GCN kernel: one grid step per time-block, flattened 2-D MXU matmuls.
# ----------------------------------------------------------------------------
def gcn_kernel(x_ref, a_ref, w1_ref, b1_ref, w2_ref, b2_ref, o_ref):
    f32 = jnp.float32
    B, tt, N, S = x_ref.shape
    Hg = w1_ref.shape[-1]
    O = w2_ref.shape[-1]
    M = B * tt
    a = a_ref[...]                                   # (N, N), stays f32

    def mix_nodes(h):
        # out[m, n, f] = sum_k A[n, k] * h[m, k, f] as an unrolled weighted sum
        # (N = num_devices is small; avoids broadcasting A to B*T copies and
        # avoids an in-kernel major-dim transpose the MXU path would need).
        acc = h[:, 0:1, :] * a[:, 0:1].reshape(1, N, 1)
        for k in range(1, N):
            acc = acc + h[:, k:k + 1, :] * a[:, k:k + 1].reshape(1, N, 1)
        return acc

    xf = x_ref[...].reshape(M * N, S)
    h = jnp.dot(xf.astype(MXU_DTYPE), w1_ref[...].astype(MXU_DTYPE),
                preferred_element_type=f32)                       # (M*N, Hg)
    h = mix_nodes(h.reshape(M, N, Hg))                            # A (X W1)
    h = jnp.maximum(h + b1_ref[...], 0.0)                         # relu(. + b1)
    h = jnp.dot(h.reshape(M * N, Hg).astype(MXU_DTYPE),
                w2_ref[...].astype(MXU_DTYPE),
                preferred_element_type=f32)                       # (M*N, O)
    h = mix_nodes(h.reshape(M, N, O)) + b2_ref[...]               # A (H W2) + b2
    o_ref[...] = h.reshape(B, tt, N, O)


def run_gcn(x, a_norm, p, *, t_block):
    B, T, N, S = x.shape
    O = p["w2"].shape[-1]
    return pl.pallas_call(
        gcn_kernel,
        grid=(T // t_block,),
        in_specs=[
            pl.BlockSpec((B, t_block, N, S), lambda i: (0, i, 0, 0)),
            pl.BlockSpec(a_norm.shape, lambda i: (0, 0)),
            pl.BlockSpec(p["w1"].shape, lambda i: (0, 0)),
            pl.BlockSpec(p["b1"].shape, lambda i: (0, 0)),
            pl.BlockSpec(p["w2"].shape, lambda i: (0, 0)),
            pl.BlockSpec(p["b2"].shape, lambda i: (0, 0)),
        ],
        out_specs=pl.BlockSpec((B, t_block, N, O), lambda i: (0, i, 0, 0)),
        out_shape=jax.ShapeDtypeStruct((B, T, N, O), jnp.float32),
        compiler_params=pltpu.CompilerParams(
            dimension_semantics=("parallel",),
            vmem_limit_bytes=VMEM_LIMIT),
    )(x, a_norm, p["w1"], p["b1"], p["w2"], p["b2"])


# ----------------------------------------------------------------------------
# 2-layer GRU (PyTorch gate semantics, h0 = 0) + InstanceNorm, shared by
# encoder and decoder.  x: (T, Bp, F) t-major, batch padded to Bp sublanes.
# ----------------------------------------------------------------------------
def _gru2_instnorm(x, wih0f, whh0f, wih1f, whh1f, bx, bhn, gx0_ref, hseq_ref,
                   *, seq_len, bp):
    f32 = jnp.float32
    H = whh0f.shape[0]
    T = seq_len
    xf = x.reshape(T * bp, x.shape[-1])

    # Hoisted layer-0 input projection, all 3 gates fused into one matmul.
    # bx[0] = [b_ir+b_hr | b_iz+b_hz | b_in] is folded in here.
    gx0_ref[...] = (jnp.dot(xf.astype(MXU_DTYPE), wih0f.astype(MXU_DTYPE),
                            preferred_element_type=f32) + bx[0:1, :])

    whh0b = whh0f.astype(MXU_DTYPE)
    wih1b = wih1f.astype(MXU_DTYPE)
    whh1b = whh1f.astype(MXU_DTYPE)
    bx1 = bx[1:2, :]                  # (1, 3H)  layer-1 fused gate biases
    bhn0 = bhn[0:1, :]                # (1, H)   layer-0 b_hn
    bhn1 = bhn[1:2, :]                # (1, H)   layer-1 b_hn

    def step(t, carry):
        h0, h1 = carry
        row = pl.multiple_of(t * bp, bp)
        gx = gx0_ref[pl.ds(row, bp), :]                               # (Bp, 3H)
        # layer 0: one fused-gate hidden matmul
        gh0 = jnp.dot(h0.astype(MXU_DTYPE), whh0b, preferred_element_type=f32)
        r0 = jax.nn.sigmoid(gx[:, :H] + gh0[:, :H])
        z0 = jax.nn.sigmoid(gx[:, H:2 * H] + gh0[:, H:2 * H])
        n0 = jnp.tanh(gx[:, 2 * H:] + r0 * (gh0[:, 2 * H:] + bhn0))
        h0 = (1.0 - z0) * n0 + z0 * h0
        # layer 1: fused-gate input + hidden matmuls (kept separate so the
        # n-gate r-gating matches PyTorch exactly)
        gi1 = jnp.dot(h0.astype(MXU_DTYPE), wih1b, preferred_element_type=f32) + bx1
        gh1 = jnp.dot(h1.astype(MXU_DTYPE), whh1b, preferred_element_type=f32)
        r1 = jax.nn.sigmoid(gi1[:, :H] + gh1[:, :H])
        z1 = jax.nn.sigmoid(gi1[:, H:2 * H] + gh1[:, H:2 * H])
        n1 = jnp.tanh(gi1[:, 2 * H:] + r1 * (gh1[:, 2 * H:] + bhn1))
        h1 = (1.0 - z1) * n1 + z1 * h1
        hseq_ref[pl.ds(row, bp), :] = h1                              # aligned store
        return (h0, h1)

    h0 = jnp.zeros((bp, H), f32)
    h1 = jnp.zeros((bp, H), f32)
    lax.fori_loop(0, T, step, (h0, h1), unroll=T <= 16)

    # nn.InstanceNorm1d(gru_dim) on the (B, T, H) GRU output as used by the
    # reference (no permute): normalize over the hidden axis per (b, t),
    # biased variance, eps=1e-5, no affine.
    hs = hseq_ref[...]
    mean = jnp.mean(hs, axis=-1, keepdims=True)
    var = jnp.mean((hs - mean) ** 2, axis=-1, keepdims=True)
    return (hs - mean) * lax.rsqrt(var + 1e-5)


def enc_kernel(x_ref, eps_ref, wih0_ref, whh0_ref, wih1_ref, whh1_ref,
               bx_ref, bhn_ref, whead_ref, bhead_ref,
               z_ref, mulv_ref, gx0_ref, hseq_ref, *, seq_len, bp):
    T, Bp = seq_len, bp
    Z = eps_ref.shape[-1]
    hn = _gru2_instnorm(x_ref[0], wih0_ref[0], whh0_ref[0], wih1_ref[0],
                        whh1_ref[0], bx_ref[0], bhn_ref[0], gx0_ref, hseq_ref,
                        seq_len=T, bp=Bp)
    head = (jnp.dot(hn.astype(MXU_DTYPE), whead_ref[0].astype(MXU_DTYPE),
                    preferred_element_type=jnp.float32) + bhead_ref[0])   # (T*Bp, 2Z)
    mu = head[:, :Z]
    lv = head[:, Z:]
    eps = eps_ref[0].reshape(T * Bp, Z)
    z = mu + jnp.exp(0.5 * lv) * eps
    z_ref[0] = z.reshape(T, Bp, Z)
    mulv_ref[0] = head.reshape(T, Bp, 2 * Z)    # packed [mu | log_var]


def dec_kernel(z_ref, wih0_ref, whh0_ref, wih1_ref, whh1_ref,
               bx_ref, bhn_ref, wfc_ref, bfc_ref,
               o_ref, gx0_ref, hseq_ref, *, seq_len, bp):
    T, Bp = seq_len, bp
    hn = _gru2_instnorm(z_ref[0], wih0_ref[0], whh0_ref[0], wih1_ref[0],
                        whh1_ref[0], bx_ref[0], bhn_ref[0], gx0_ref, hseq_ref,
                        seq_len=T, bp=Bp)
    y = (jnp.dot(hn.astype(MXU_DTYPE), wfc_ref[0].astype(MXU_DTYPE),
                 preferred_element_type=jnp.float32) + bfc_ref[0])
    o_ref[0] = jax.nn.sigmoid(y).reshape(T, Bp, -1)


def _dev_block(shape):
    """BlockSpec partitioning only the leading (device) axis."""
    nd = len(shape)
    return pl.BlockSpec((1,) + tuple(shape[1:]),
                        lambda n, _nd=nd: (n,) + (0,) * (_nd - 1))


def run_encoder(x_n, eps_n, gp, hp, *, seq_len, bp):
    N, T, Bp, _ = x_n.shape
    H = gp["whh0"].shape[-2]
    Z = eps_n.shape[-1]
    args = (x_n, eps_n, gp["wih0"], gp["whh0"], gp["wih1"], gp["whh1"],
            gp["bx"], gp["bhn"], hp["w"], hp["b"])
    return pl.pallas_call(
        functools.partial(enc_kernel, seq_len=seq_len, bp=bp),
        grid=(N,),
        in_specs=[_dev_block(a.shape) for a in args],
        out_specs=(_dev_block((N, T, Bp, Z)), _dev_block((N, T, Bp, 2 * Z))),
        out_shape=(jax.ShapeDtypeStruct((N, T, Bp, Z), jnp.float32),
                   jax.ShapeDtypeStruct((N, T, Bp, 2 * Z), jnp.float32)),
        scratch_shapes=[pltpu.VMEM((T * Bp, 3 * H), jnp.float32),
                        pltpu.VMEM((T * Bp, H), jnp.float32)],
        compiler_params=pltpu.CompilerParams(
            dimension_semantics=("parallel",),
            vmem_limit_bytes=VMEM_LIMIT),
    )(*args)


def run_decoder(z_n, gp, fp, *, seq_len, bp):
    N, T, Bp, _ = z_n.shape
    H = gp["whh0"].shape[-2]
    S = fp["w"].shape[-1]
    args = (z_n, gp["wih0"], gp["whh0"], gp["wih1"], gp["whh1"],
            gp["bx"], gp["bhn"], fp["w"], fp["b"])
    return pl.pallas_call(
        functools.partial(dec_kernel, seq_len=seq_len, bp=bp),
        grid=(N,),
        in_specs=[_dev_block(a.shape) for a in args],
        out_specs=_dev_block((N, T, Bp, S)),
        out_shape=jax.ShapeDtypeStruct((N, T, Bp, S), jnp.float32),
        scratch_shapes=[pltpu.VMEM((T * Bp, 3 * H), jnp.float32),
                        pltpu.VMEM((T * Bp, H), jnp.float32)],
        compiler_params=pltpu.CompilerParams(
            dimension_semantics=("parallel",),
            vmem_limit_bytes=VMEM_LIMIT),
    )(*args)


# ----------------------------------------------------------------------------
# Parameter init (PyTorch-style uniform) with fused-gate packing.
# ----------------------------------------------------------------------------
def _uniform(key, shape, k):
    return jax.random.uniform(key, shape, jnp.float32, -k, k)


def _gru_stack(keys, num_devices, in_dim, gru_dim):
    N, H = num_devices, gru_dim
    k = 1.0 / jnp.sqrt(gru_dim)

    def u(shape):
        return _uniform(next(keys), shape, k)

    def fuse(w):                                   # (N, 3, D, H) -> (N, D, 3H)
        return jnp.concatenate([w[:, 0], w[:, 1], w[:, 2]], axis=-1)

    wih0, whh0 = u((N, 3, in_dim, H)), u((N, 3, H, H))
    wih1, whh1 = u((N, 3, H, H)), u((N, 3, H, H))
    bih0, bhh0 = u((N, 3, H)), u((N, 3, H))
    bih1, bhh1 = u((N, 3, H)), u((N, 3, H))

    def bx_row(bih, bhh):                          # -> (N, 3H) = [r|z|n(input)]
        return jnp.concatenate([bih[:, 0] + bhh[:, 0],
                                bih[:, 1] + bhh[:, 1],
                                bih[:, 2]], axis=-1)

    return {"wih0": fuse(wih0), "whh0": fuse(whh0),
            "wih1": fuse(wih1), "whh1": fuse(whh1),
            "bx": jnp.stack([bx_row(bih0, bhh0), bx_row(bih1, bhh1)], axis=1),
            "bhn": jnp.stack([bhh0[:, 2], bhh1[:, 2]], axis=1)}


def init_params(key, *, num_devices, num_sensors, gcn_hidden_dim, gcn_out_dim,
                gru_dim, z_dim):
    keys = iter(jax.random.split(key, 64))
    N, S, Hg, O, H, Z = (num_devices, num_sensors, gcn_hidden_dim, gcn_out_dim,
                         gru_dim, z_dim)
    p = {}
    kg, kh = 1.0 / jnp.sqrt(S), 1.0 / jnp.sqrt(Hg)
    p["gcn"] = {"w1": _uniform(next(keys), (S, Hg), kg),
                "b1": _uniform(next(keys), (1, Hg), kg),
                "w2": _uniform(next(keys), (Hg, O), kh),
                "b2": _uniform(next(keys), (1, O), kh)}
    p["enc_gru"] = _gru_stack(keys, N, O, H)
    kz = 1.0 / jnp.sqrt(H)
    w_mu = _uniform(next(keys), (N, H, Z), kz)
    w_lv = _uniform(next(keys), (N, H, Z), kz)
    b_mu = _uniform(next(keys), (N, 1, Z), kz)
    b_lv = _uniform(next(keys), (N, 1, Z), kz)
    p["enc_head"] = {"w": jnp.concatenate([w_mu, w_lv], axis=-1),   # (N, H, 2Z)
                     "b": jnp.concatenate([b_mu, b_lv], axis=-1)}   # (N, 1, 2Z)
    p["dec_gru"] = _gru_stack(keys, N, Z, H)
    p["fc"] = {"w": _uniform(next(keys), (N, H, S), kz),
               "b": _uniform(next(keys), (N, 1, S), kz)}
    return p


# ----------------------------------------------------------------------------
# Forward
# ----------------------------------------------------------------------------
def gcn_vae_forward(x, x_adj, params, noise_key):
    """x: (B, T, N, S) float32; x_adj: (B, N, N) float32."""
    B, T, N, S = x.shape
    Bp = _round_up(B, 8)

    # adjacency normalization (mirrors the torch code: uses x_adj[0])
    a = x_adj[0]
    a = jnp.eye(N, dtype=a.dtype) + a
    d = jnp.sum(a, axis=1)
    d_inv_half = jnp.diag(1.0 / jnp.sqrt(d))
    a_norm = d_inv_half @ a @ d_inv_half

    # encoder: GCN -> per-device GRU + InstanceNorm + fused VAE head
    xg = run_gcn(x, a_norm, params["gcn"],
                 t_block=_pick_t_block(T, B * N))                 # (B, T, N, O)

    # single XLA relayout into the device-major / t-major / 8-padded layout
    xg_n = jnp.transpose(xg, (2, 1, 0, 3))                        # (N, T, B, O)
    xg_n = jnp.pad(xg_n, ((0, 0), (0, 0), (0, Bp - B), (0, 0)))   # (N, T, Bp, O)

    Z = params["enc_head"]["w"].shape[-1] // 2
    eps = jax.random.normal(noise_key, (N, T, Bp, Z), jnp.float32)
    z_n, mulv_n = run_encoder(xg_n, eps, params["enc_gru"], params["enc_head"],
                              seq_len=T, bp=Bp)

    # decoder consumes z directly in its internal (N, T, Bp, Z) layout
    xhat_n = run_decoder(z_n, params["dec_gru"], params["fc"], seq_len=T, bp=Bp)

    def unpack(y):                               # (N, T, Bp, D) -> (B, T, N, D)
        return jnp.transpose(y[:, :, :B, :], (2, 1, 0, 3))

    return unpack(xhat_n), unpack(mulv_n[..., :Z]), unpack(mulv_n[..., Z:])


# ----------------------------------------------------------------------------
if __name__ == "__main__":
    B, T, N, S = 2, 6, 4, 8               # batch, seq_len, num_devices, num_sensors
    gcn_hidden_dim, gcn_out_dim = 16, S   # gcn_out must equal num_sensors (GRU input)
    gru_dim, z_dim = 32, 16

    root = jax.random.PRNGKey(0)
    k_x, k_adj, k_params, k_noise = jax.random.split(root, 4)

    x = jax.random.normal(k_x, (B, T, N, S), jnp.float32)
    x_adj = (jax.random.uniform(k_adj, (B, N, N)) > 0.5).astype(jnp.float32)

    params = init_params(k_params, num_devices=N, num_sensors=S,
                         gcn_hidden_dim=gcn_hidden_dim, gcn_out_dim=gcn_out_dim,
                         gru_dim=gru_dim, z_dim=z_dim)

    fwd = jax.jit(gcn_vae_forward)
    x_hat, mu, log_var = fwd(x, x_adj, params, k_noise)
    jax.block_until_ready((x_hat, mu, log_var))

    assert x_hat.shape == (B, T, N, S)
    assert mu.shape == (B, T, N, z_dim)
    assert log_var.shape == (B, T, N, z_dim)
    assert bool(jnp.all(jnp.isfinite(x_hat)))
    assert bool(jnp.all(jnp.isfinite(mu)))
    assert bool(jnp.all(jnp.isfinite(log_var)))
    print("KERNEL_OK")
</pallas_src>

<mosaic_0001>
module attributes {stable_mosaic.version = 11 : i64} {
  func.func @gcn_kernel(%arg0: i32, %arg1: memref<2x6x4x8xf32, #tpu.memory_space<vmem>>, %arg2: memref<4x4xf32, #tpu.memory_space<vmem>>, %arg3: memref<8x16xf32, #tpu.memory_space<vmem>>, %arg4: memref<1x16xf32, #tpu.memory_space<vmem>>, %arg5: memref<16x8xf32, #tpu.memory_space<vmem>>, %arg6: memref<1x8xf32, #tpu.memory_space<vmem>>, %arg7: memref<2x6x4x8xf32, #tpu.memory_space<vmem>>) attributes {dimension_semantics = [#tpu.dimension_semantics<parallel>], iteration_bounds = array<i64: 1>, scalar_prefetch = 0 : i64, scratch_operands = 0 : i64, tpu.core_type = #tpu.core_type<tc>, window_params = [{transform_indices = @transform_0, window_bounds = array<i64: 2, 6, 4, 8>}, {pipeline_mode = #tpu.pipeline_mode<synchronous>, transform_indices = @transform_1, window_bounds = array<i64: 4, 4>}, {pipeline_mode = #tpu.pipeline_mode<synchronous>, transform_indices = @transform_2, window_bounds = array<i64: 8, 16>}, {pipeline_mode = #tpu.pipeline_mode<synchronous>, transform_indices = @transform_3, window_bounds = array<i64: 1, 16>}, {pipeline_mode = #tpu.pipeline_mode<synchronous>, transform_indices = @transform_4, window_bounds = array<i64: 16, 8>}, {pipeline_mode = #tpu.pipeline_mode<synchronous>, transform_indices = @transform_5, window_bounds = array<i64: 1, 8>}, {transform_indices = @transform_6, window_bounds = array<i64: 2, 6, 4, 8>}]} {
    %c0 = arith.constant 0 : index
    %c0_0 = arith.constant 0 : index
    %0 = vector.load %arg2[%c0, %c0_0] : memref<4x4xf32, #tpu.memory_space<vmem>>, vector<4x4xf32>
    %c0_1 = arith.constant 0 : index
    %c0_2 = arith.constant 0 : index
    %c0_3 = arith.constant 0 : index
    %c0_4 = arith.constant 0 : index
    %1 = vector.load %arg1[%c0_1, %c0_2, %c0_3, %c0_4] : memref<2x6x4x8xf32, #tpu.memory_space<vmem>>, vector<2x6x4x8xf32>
    %2 = vector.shape_cast %1 : vector<2x6x4x8xf32> to vector<48x8xf32>
    %3 = arith.truncf %2 : vector<48x8xf32> to vector<48x8xbf16>
    %c0_5 = arith.constant 0 : index
    %c0_6 = arith.constant 0 : index
    %4 = vector.load %arg3[%c0_5, %c0_6] : memref<8x16xf32, #tpu.memory_space<vmem>>, vector<8x16xf32>
    %5 = arith.truncf %4 : vector<8x16xf32> to vector<8x16xbf16>
    %cst = arith.constant dense<0.000000e+00> : vector<48x16xf32>
    %6 = tpu.matmul %3, %5, %cst {dimension_numbers = #tpu.dot_dimension_numbers<[1], [0], [0], [1], [0, 0, 1, 1], [], []>} : vector<48x8xbf16>, vector<8x16xbf16>, vector<48x16xf32> -> vector<48x16xf32>
    %7 = vector.shape_cast %6 : vector<48x16xf32> to vector<12x4x16xf32>
    %8 = vector.extract_strided_slice %7 {offsets = [0, 0, 0], sizes = [12, 1, 16], strides = [1, 1, 1]} : vector<12x4x16xf32> to vector<12x1x16xf32>
    %9 = vector.extract_strided_slice %0 {offsets = [0, 0], sizes = [4, 1], strides = [1, 1]} : vector<4x4xf32> to vector<4x1xf32>
    %10 = vector.shape_cast %9 : vector<4x1xf32> to vector<1x4x1xf32>
    %11 = vector.broadcast %8 : vector<12x1x16xf32> to vector<12x4x16xf32>
    %12 = vector.broadcast %10 : vector<1x4x1xf32> to vector<12x4x16xf32>
    %13 = arith.mulf %11, %12 : vector<12x4x16xf32>
    %14 = vector.extract_strided_slice %7 {offsets = [0, 1, 0], sizes = [12, 1, 16], strides = [1, 1, 1]} : vector<12x4x16xf32> to vector<12x1x16xf32>
    %15 = vector.extract_strided_slice %0 {offsets = [0, 1], sizes = [4, 1], strides = [1, 1]} : vector<4x4xf32> to vector<4x1xf32>
    %16 = vector.shape_cast %15 : vector<4x1xf32> to vector<1x4x1xf32>
    %17 = vector.broadcast %14 : vector<12x1x16xf32> to vector<12x4x16xf32>
    %18 = vector.broadcast %16 : vector<1x4x1xf32> to vector<12x4x16xf32>
    %19 = arith.mulf %17, %18 : vector<12x4x16xf32>
    %20 = arith.addf %13, %19 : vector<12x4x16xf32>
    %21 = vector.extract_strided_slice %7 {offsets = [0, 2, 0], sizes = [12, 1, 16], strides = [1, 1, 1]} : vector<12x4x16xf32> to vector<12x1x16xf32>
    %22 = vector.extract_strided_slice %0 {offsets = [0, 2], sizes = [4, 1], strides = [1, 1]} : vector<4x4xf32> to vector<4x1xf32>
    %23 = vector.shape_cast %22 : vector<4x1xf32> to vector<1x4x1xf32>
    %24 = vector.broadcast %21 : vector<12x1x16xf32> to vector<12x4x16xf32>
    %25 = vector.broadcast %23 : vector<1x4x1xf32> to vector<12x4x16xf32>
    %26 = arith.mulf %24, %25 : vector<12x4x16xf32>
    %27 = arith.addf %20, %26 : vector<12x4x16xf32>
    %28 = vector.extract_strided_slice %7 {offsets = [0, 3, 0], sizes = [12, 1, 16], strides = [1, 1, 1]} : vector<12x4x16xf32> to vector<12x1x16xf32>
    %29 = vector.extract_strided_slice %0 {offsets = [0, 3], sizes = [4, 1], strides = [1, 1]} : vector<4x4xf32> to vector<4x1xf32>
    %30 = vector.shape_cast %29 : vector<4x1xf32> to vector<1x4x1xf32>
    %31 = vector.broadcast %28 : vector<12x1x16xf32> to vector<12x4x16xf32>
    %32 = vector.broadcast %30 : vector<1x4x1xf32> to vector<12x4x16xf32>
    %33 = arith.mulf %31, %32 : vector<12x4x16xf32>
    %34 = arith.addf %27, %33 : vector<12x4x16xf32>
    %c0_7 = arith.constant 0 : index
    %c0_8 = arith.constant 0 : index
    %35 = vector.load %arg4[%c0_7, %c0_8] : memref<1x16xf32, #tpu.memory_space<vmem>>, vector<1x16xf32>
    %36 = vector.shape_cast %35 : vector<1x16xf32> to vector<1x1x16xf32>
    %37 = vector.broadcast %36 : vector<1x1x16xf32> to vector<12x4x16xf32>
    %38 = arith.addf %34, %37 : vector<12x4x16xf32>
    %cst_9 = arith.constant 0.000000e+00 : f32
    %39 = vector.broadcast %cst_9 : f32 to vector<12x4x16xf32>
    %40 = arith.maximumf %38, %39 : vector<12x4x16xf32>
    %41 = vector.shape_cast %40 : vector<12x4x16xf32> to vector<48x16xf32>
    %42 = arith.truncf %41 : vector<48x16xf32> to vector<48x16xbf16>
    %c0_10 = arith.constant 0 : index
    %c0_11 = arith.constant 0 : index
    %43 = vector.load %arg5[%c0_10, %c0_11] : memref<16x8xf32, #tpu.memory_space<vmem>>, vector<16x8xf32>
    %44 = arith.truncf %43 : vector<16x8xf32> to vector<16x8xbf16>
    %cst_12 = arith.constant dense<0.000000e+00> : vector<48x8xf32>
    %45 = tpu.matmul %42, %44, %cst_12 {dimension_numbers = #tpu.dot_dimension_numbers<[1], [0], [0], [1], [0, 0, 1, 1], [], []>} : vector<48x16xbf16>, vector<16x8xbf16>, vector<48x8xf32> -> vector<48x8xf32>
    %46 = vector.shape_cast %45 : vector<48x8xf32> to vector<12x4x8xf32>
    %47 = vector.extract_strided_slice %46 {offsets = [0, 0, 0], sizes = [12, 1, 8], strides = [1, 1, 1]} : vector<12x4x8xf32> to vector<12x1x8xf32>
    %48 = vector.extract_strided_slice %0 {offsets = [0, 0], sizes = [4, 1], strides = [1, 1]} : vector<4x4xf32> to vector<4x1xf32>
    %49 = vector.shape_cast %48 : vector<4x1xf32> to vector<1x4x1xf32>
    %50 = vector.broadcast %47 : vector<12x1x8xf32> to vector<12x4x8xf32>
    %51 = vector.broadcast %49 : vector<1x4x1xf32> to vector<12x4x8xf32>
    %52 = arith.mulf %50, %51 : vector<12x4x8xf32>
    %53 = vector.extract_strided_slice %46 {offsets = [0, 1, 0], sizes = [12, 1, 8], strides = [1, 1, 1]} : vector<12x4x8xf32> to vector<12x1x8xf32>
    %54 = vector.extract_strided_slice %0 {offsets = [0, 1], sizes = [4, 1], strides = [1, 1]} : vector<4x4xf32> to vector<4x1xf32>
    %55 = vector.shape_cast %54 : vector<4x1xf32> to vector<1x4x1xf32>
    %56 = vector.broadcast %53 : vector<12x1x8xf32> to vector<12x4x8xf32>
    %57 = vector.broadcast %55 : vector<1x4x1xf32> to vector<12x4x8xf32>
    %58 = arith.mulf %56, %57 : vector<12x4x8xf32>
    %59 = arith.addf %52, %58 : vector<12x4x8xf32>
    %60 = vector.extract_strided_slice %46 {offsets = [0, 2, 0], sizes = [12, 1, 8], strides = [1, 1, 1]} : vector<12x4x8xf32> to vector<12x1x8xf32>
    %61 = vector.extract_strided_slice %0 {offsets = [0, 2], sizes = [4, 1], strides = [1, 1]} : vector<4x4xf32> to vector<4x1xf32>
    %62 = vector.shape_cast %61 : vector<4x1xf32> to vector<1x4x1xf32>
    %63 = vector.broadcast %60 : vector<12x1x8xf32> to vector<12x4x8xf32>
    %64 = vector.broadcast %62 : vector<1x4x1xf32> to vector<12x4x8xf32>
    %65 = arith.mulf %63, %64 : vector<12x4x8xf32>
    %66 = arith.addf %59, %65 : vector<12x4x8xf32>
    %67 = vector.extract_strided_slice %46 {offsets = [0, 3, 0], sizes = [12, 1, 8], strides = [1, 1, 1]} : vector<12x4x8xf32> to vector<12x1x8xf32>
    %68 = vector.extract_strided_slice %0 {offsets = [0, 3], sizes = [4, 1], strides = [1, 1]} : vector<4x4xf32> to vector<4x1xf32>
    %69 = vector.shape_cast %68 : vector<4x1xf32> to vector<1x4x1xf32>
    %70 = vector.broadcast %67 : vector<12x1x8xf32> to vector<12x4x8xf32>
    %71 = vector.broadcast %69 : vector<1x4x1xf32> to vector<12x4x8xf32>
    %72 = arith.mulf %70, %71 : vector<12x4x8xf32>
    %73 = arith.addf %66, %72 : vector<12x4x8xf32>
    %c0_13 = arith.constant 0 : index
    %c0_14 = arith.constant 0 : index
    %74 = vector.load %arg6[%c0_13, %c0_14] : memref<1x8xf32, #tpu.memory_space<vmem>>, vector<1x8xf32>
    %75 = vector.shape_cast %74 : vector<1x8xf32> to vector<1x1x8xf32>
    %76 = vector.broadcast %75 : vector<1x1x8xf32> to vector<12x4x8xf32>
    %77 = arith.addf %73, %76 : vector<12x4x8xf32>
    %78 = vector.shape_cast %77 : vector<12x4x8xf32> to vector<2x6x4x8xf32>
    %c0_15 = arith.constant 0 : index
    %c0_16 = arith.constant 0 : index
    %c0_17 = arith.constant 0 : index
    %c0_18 = arith.constant 0 : index
    %79 = vector.load %arg7[%c0_15, %c0_16, %c0_17, %c0_18] : memref<2x6x4x8xf32, #tpu.memory_space<vmem>>, vector<2x6x4x8xf32>
    tpu.vector_store %arg7[%c0_15, %c0_16, %c0_17, %c0_18], %78 {strides = array<i32>} : memref<2x6x4x8xf32, #tpu.memory_space<vmem>>, vector<2x6x4x8xf32>,
    return
  }
  func.func @transform_0(%arg0: i32) -> (i32, i32, i32, i32) {
    %c0_i32 = arith.constant 0 : i32
    %c0_i32_0 = arith.constant 0 : i32
    %c0_i32_1 = arith.constant 0 : i32
    %c0_i32_2 = arith.constant 0 : i32
    return %c0_i32, %arg0, %c0_i32_0, %c0_i32_1 : i32, i32, i32, i32
  }
  func.func @transform_1(%arg0: i32) -> (i32, i32) {
    %c0_i32 = arith.constant 0 : i32
    %c0_i32_0 = arith.constant 0 : i32
    %c0_i32_1 = arith.constant 0 : i32
    return %c0_i32, %c0_i32_0 : i32, i32
  }
  func.func @transform_2(%arg0: i32) -> (i32, i32) {
    %c0_i32 = arith.constant 0 : i32
    %c0_i32_0 = arith.constant 0 : i32
    %c0_i32_1 = arith.constant 0 : i32
    return %c0_i32, %c0_i32_0 : i32, i32
  }
  func.func @transform_3(%arg0: i32) -> (i32, i32) {
    %c0_i32 = arith.constant 0 : i32
    %c0_i32_0 = arith.constant 0 : i32
    %c0_i32_1 = arith.constant 0 : i32
    return %c0_i32, %c0_i32_0 : i32, i32
  }
  func.func @transform_4(%arg0: i32) -> (i32, i32) {
    %c0_i32 = arith.constant 0 : i32
    %c0_i32_0 = arith.constant 0 : i32
    %c0_i32_1 = arith.constant 0 : i32
    return %c0_i32, %c0_i32_0 : i32, i32
  }
  func.func @transform_5(%arg0: i32) -> (i32, i32) {
    %c0_i32 = arith.constant 0 : i32
    %c0_i32_0 = arith.constant 0 : i32
    %c0_i32_1 = arith.constant 0 : i32
    return %c0_i32, %c0_i32_0 : i32, i32
  }
  func.func @transform_6(%arg0: i32) -> (i32, i32, i32, i32) {
    %c0_i32 = arith.constant 0 : i32
    %c0_i32_0 = arith.constant 0 : i32
    %c0_i32_1 = arith.constant 0 : i32
    %c0_i32_2 = arith.constant 0 : i32
    return %c0_i32, %arg0, %c0_i32_0, %c0_i32_1 : i32, i32, i32, i32
  }
}

module attributes {stable_mosaic.version = 11 : i64} {
  func.func @enc_kernel(%arg0: i32, %arg1: memref<1x6x8x8xf32, #tpu.memory_space<vmem>>, %arg2: memref<1x6x8x16xf32, #tpu.memory_space<vmem>>, %arg3: memref<1x8x96xf32, #tpu.memory_space<vmem>>, %arg4: memref<1x32x96xf32, #tpu.memory_space<vmem>>, %arg5: memref<1x32x96xf32, #tpu.memory_space<vmem>>, %arg6: memref<1x32x96xf32, #tpu.memory_space<vmem>>, %arg7: memref<1x2x96xf32, #tpu.memory_space<vmem>>, %arg8: memref<1x2x32xf32, #tpu.memory_space<vmem>>, %arg9: memref<1x32x32xf32, #tpu.memory_space<vmem>>, %arg10: memref<1x1x32xf32, #tpu.memory_space<vmem>>, %arg11: memref<1x6x8x16xf32, #tpu.memory_space<vmem>>, %arg12: memref<1x6x8x32xf32, #tpu.memory_space<vmem>>, %arg13: memref<48x96xf32, #tpu.memory_space<vmem>>, %arg14: memref<48x32xf32, #tpu.memory_space<vmem>>) attributes {dimension_semantics = [#tpu.dimension_semantics<parallel>], iteration_bounds = array<i64: 4>, scalar_prefetch = 0 : i64, scratch_operands = 2 : i64, tpu.core_type = #tpu.core_type<tc>, window_params = [{transform_indices = @transform_0, window_bounds = array<i64: 1, 6, 8, 8>}, {transform_indices = @transform_1, window_bounds = array<i64: 1, 6, 8, 16>}, {transform_indices = @transform_2, window_bounds = array<i64: 1, 8, 96>}, {transform_indices = @transform_3, window_bounds = array<i64: 1, 32, 96>}, {transform_indices = @transform_4, window_bounds = array<i64: 1, 32, 96>}, {transform_indices = @transform_5, window_bounds = array<i64: 1, 32, 96>}, {transform_indices = @transform_6, window_bounds = array<i64: 1, 2, 96>}, {transform_indices = @transform_7, window_bounds = array<i64: 1, 2, 32>}, {transform_indices = @transform_8, window_bounds = array<i64: 1, 32, 32>}, {transform_indices = @transform_9, window_bounds = array<i64: 1, 1, 32>}, {transform_indices = @transform_10, window_bounds = array<i64: 1, 6, 8, 16>}, {transform_indices = @transform_11, window_bounds = array<i64: 1, 6, 8, 32>}]} {
    %c0 = arith.constant 0 : index
    %c0_0 = arith.constant 0 : index
    %c0_1 = arith.constant 0 : index
    %c0_2 = arith.constant 0 : index
    %0 = vector.load %arg1[%c0, %c0_0, %c0_1, %c0_2] : memref<1x6x8x8xf32, #tpu.memory_space<vmem>>, vector<1x6x8x8xf32>
    %1 = vector.shape_cast %0 : vector<1x6x8x8xf32> to vector<6x8x8xf32>
    %c0_3 = arith.constant 0 : index
    %c0_4 = arith.constant 0 : index
    %c0_5 = arith.constant 0 : index
    %2 = vector.load %arg3[%c0_3, %c0_4, %c0_5] : memref<1x8x96xf32, #tpu.memory_space<vmem>>, vector<1x8x96xf32>
    %3 = vector.shape_cast %2 : vector<1x8x96xf32> to vector<8x96xf32>
    %c0_6 = arith.constant 0 : index
    %c0_7 = arith.constant 0 : index
    %c0_8 = arith.constant 0 : index
    %4 = vector.load %arg4[%c0_6, %c0_7, %c0_8] : memref<1x32x96xf32, #tpu.memory_space<vmem>>, vector<1x32x96xf32>
    %5 = vector.shape_cast %4 : vector<1x32x96xf32> to vector<32x96xf32>
    %c0_9 = arith.constant 0 : index
    %c0_10 = arith.constant 0 : index
    %c0_11 = arith.constant 0 : index
    %6 = vector.load %arg5[%c0_9, %c0_10, %c0_11] : memref<1x32x96xf32, #tpu.memory_space<vmem>>, vector<1x32x96xf32>
    %7 = vector.shape_cast %6 : vector<1x32x96xf32> to vector<32x96xf32>
    %c0_12 = arith.constant 0 : index
    %c0_13 = arith.constant 0 : index
    %c0_14 = arith.constant 0 : index
    %8 = vector.load %arg6[%c0_12, %c0_13, %c0_14] : memref<1x32x96xf32, #tpu.memory_space<vmem>>, vector<1x32x96xf32>
    %9 = vector.shape_cast %8 : vector<1x32x96xf32> to vector<32x96xf32>
    %c0_15 = arith.constant 0 : index
    %c0_16 = arith.constant 0 : index
    %c0_17 = arith.constant 0 : index
    %10 = vector.load %arg7[%c0_15, %c0_16, %c0_17] : memref<1x2x96xf32, #tpu.memory_space<vmem>>, vector<1x2x96xf32>
    %11 = vector.shape_cast %10 : vector<1x2x96xf32> to vector<2x96xf32>
    %c0_18 = arith.constant 0 : index
    %c0_19 = arith.constant 0 : index
    %c0_20 = arith.constant 0 : index
    %12 = vector.load %arg8[%c0_18, %c0_19, %c0_20] : memref<1x2x32xf32, #tpu.memory_space<vmem>>, vector<1x2x32xf32>
    %13 = vector.shape_cast %12 : vector<1x2x32xf32> to vector<2x32xf32>
    %14 = vector.shape_cast %1 : vector<6x8x8xf32> to vector<48x8xf32>
    %15 = arith.truncf %14 : vector<48x8xf32> to vector<48x8xbf16>
    %16 = arith.truncf %3 : vector<8x96xf32> to vector<8x96xbf16>
    %cst = arith.constant dense<0.000000e+00> : vector<48x96xf32>
    %17 = tpu.matmul %15, %16, %cst {dimension_numbers = #tpu.dot_dimension_numbers<[1], [0], [0], [1], [0, 0, 1, 1], [], []>} : vector<48x8xbf16>, vector<8x96xbf16>, vector<48x96xf32> -> vector<48x96xf32>
    %18 = vector.extract_strided_slice %11 {offsets = [0, 0], sizes = [1, 96], strides = [1, 1]} : vector<2x96xf32> to vector<1x96xf32>
    %19 = vector.broadcast %18 : vector<1x96xf32> to vector<48x96xf32>
    %20 = arith.addf %17, %19 : vector<48x96xf32>
    %c0_21 = arith.constant 0 : index
    %c0_22 = arith.constant 0 : index
    %21 = vector.load %arg13[%c0_21, %c0_22] : memref<48x96xf32, #tpu.memory_space<vmem>>, vector<48x96xf32>
    tpu.vector_store %arg13[%c0_21, %c0_22], %20 {strides = array<i32>} : memref<48x96xf32, #tpu.memory_space<vmem>>, vector<48x96xf32>,
    %22 = arith.truncf %5 : vector<32x96xf32> to vector<32x96xbf16>
    %23 = arith.truncf %7 : vector<32x96xf32> to vector<32x96xbf16>
    %24 = arith.truncf %9 : vector<32x96xf32> to vector<32x96xbf16>
    %25 = vector.extract_strided_slice %11 {offsets = [1, 0], sizes = [1, 96], strides = [1, 1]} : vector<2x96xf32> to vector<1x96xf32>
    %26 = vector.extract_strided_slice %13 {offsets = [0, 0], sizes = [1, 32], strides = [1, 1]} : vector<2x32xf32> to vector<1x32xf32>
    %27 = vector.extract_strided_slice %13 {offsets = [1, 0], sizes = [1, 32], strides = [1, 1]} : vector<2x32xf32> to vector<1x32xf32>
    %cst_23 = arith.constant 0.000000e+00 : f32
    %28 = vector.broadcast %cst_23 : f32 to vector<8x32xf32>
    %cst_24 = arith.constant 0.000000e+00 : f32
    %29 = vector.broadcast %cst_24 : f32 to vector<8x32xf32>
    %c0_i32 = arith.constant 0 : i32
    %c8_i32 = arith.constant 8 : i32
    %30 = arith.muli %c0_i32, %c8_i32 : i32
    %31 = tpu.assume_multiple %30, 8 : i32
    %32 = arith.index_cast %31 : i32 to index
    %c0_25 = arith.constant 0 : index
    %33 = vector.load %arg13[%32, %c0_25] : memref<48x96xf32, #tpu.memory_space<vmem>>, vector<8x96xf32>
    %34 = arith.truncf %28 : vector<8x32xf32> to vector<8x32xbf16>
    %cst_26 = arith.constant dense<0.000000e+00> : vector<8x96xf32>
    %35 = tpu.matmul %34, %22, %cst_26 {dimension_numbers = #tpu.dot_dimension_numbers<[1], [0], [0], [1], [0, 0, 1, 1], [], []>} : vector<8x32xbf16>, vector<32x96xbf16>, vector<8x96xf32> -> vector<8x96xf32>
    %36 = vector.extract_strided_slice %33 {offsets = [0, 0], sizes = [8, 32], strides = [1, 1]} : vector<8x96xf32> to vector<8x32xf32>
    %37 = vector.extract_strided_slice %35 {offsets = [0, 0], sizes = [8, 32], strides = [1, 1]} : vector<8x96xf32> to vector<8x32xf32>
    %38 = arith.addf %36, %37 : vector<8x32xf32>
    %39 = arith.negf %38 : vector<8x32xf32>
    %40 = math.exp %39 : vector<8x32xf32>
    %cst_27 = arith.constant 1.000000e+00 : f32
    %41 = vector.broadcast %cst_27 : f32 to vector<8x32xf32>
    %42 = arith.addf %41, %40 : vector<8x32xf32>
    %43 = arith.divf %41, %42 : vector<8x32xf32>
    %44 = vector.extract_strided_slice %33 {offsets = [0, 32], sizes = [8, 32], strides = [1, 1]} : vector<8x96xf32> to vector<8x32xf32>
    %45 = vector.extract_strided_slice %35 {offsets = [0, 32], sizes = [8, 32], strides = [1, 1]} : vector<8x96xf32> to vector<8x32xf32>
    %46 = arith.addf %44, %45 : vector<8x32xf32>
    %47 = arith.negf %46 : vector<8x32xf32>
    %48 = math.exp %47 : vector<8x32xf32>
    %cst_28 = arith.constant 1.000000e+00 : f32
    %49 = vector.broadcast %cst_28 : f32 to vector<8x32xf32>
    %50 = arith.addf %49, %48 : vector<8x32xf32>
    %51 = arith.divf %49, %50 : vector<8x32xf32>
    %52 = vector.extract_strided_slice %33 {offsets = [0, 64], sizes = [8, 32], strides = [1, 1]} : vector<8x96xf32> to vector<8x32xf32>
    %53 = vector.extract_strided_slice %35 {offsets = [0, 64], sizes = [8, 32], strides = [1, 1]} : vector<8x96xf32> to vector<8x32xf32>
    %54 = vector.broadcast %26 : vector<1x32xf32> to vector<8x32xf32>
    %55 = arith.addf %53, %54 : vector<8x32xf32>
    %56 = arith.mulf %43, %55 : vector<8x32xf32>
    %57 = arith.addf %52, %56 : vector<8x32xf32>
    %58 = math.tanh %57 : vector<8x32xf32>
    %cst_29 = arith.constant 1.000000e+00 : f32
    %59 = vector.broadcast %cst_29 : f32 to vector<8x32xf32>
    %60 = arith.subf %59, %51 : vector<8x32xf32>
    %61 = arith.mulf %60, %58 : vector<8x32xf32>
    %62 = arith.mulf %51, %28 : vector<8x32xf32>
    %63 = arith.addf %61, %62 : vector<8x32xf32>
    %64 = arith.truncf %63 : vector<8x32xf32> to vector<8x32xbf16>
    %cst_30 = arith.constant dense<0.000000e+00> : vector<8x96xf32>
    %65 = tpu.matmul %64, %23, %cst_30 {dimension_numbers = #tpu.dot_dimension_numbers<[1], [0], [0], [1], [0, 0, 1, 1], [], []>} : vector<8x32xbf16>, vector<32x96xbf16>, vector<8x96xf32> -> vector<8x96xf32>
    %66 = vector.broadcast %25 : vector<1x96xf32> to vector<8x96xf32>
    %67 = arith.addf %65, %66 : vector<8x96xf32>
    %68 = arith.truncf %29 : vector<8x32xf32> to vector<8x32xbf16>
    %cst_31 = arith.constant dense<0.000000e+00> : vector<8x96xf32>
    %69 = tpu.matmul %68, %24, %cst_31 {dimension_numbers = #tpu.dot_dimension_numbers<[1], [0], [0], [1], [0, 0, 1, 1], [], []>} : vector<8x32xbf16>, vector<32x96xbf16>, vector<8x96xf32> -> vector<8x96xf32>
    %70 = vector.extract_strided_slice %67 {offsets = [0, 0], sizes = [8, 32], strides = [1, 1]} : vector<8x96xf32> to vector<8x32xf32>
    %71 = vector.extract_strided_slice %69 {offsets = [0, 0], sizes = [8, 32], strides = [1, 1]} : vector<8x96xf32> to vector<8x32xf32>
    %72 = arith.addf %70, %71 : vector<8x32xf32>
    %73 = arith.negf %72 : vector<8x32xf32>
    %74 = math.exp %73 : vector<8x32xf32>
    %cst_32 = arith.constant 1.000000e+00 : f32
    %75 = vector.broadcast %cst_32 : f32 to vector<8x32xf32>
    %76 = arith.addf %75, %74 : vector<8x32xf32>
    %77 = arith.divf %75, %76 : vector<8x32xf32>
    %78 = vector.extract_strided_slice %67 {offsets = [0, 32], sizes = [8, 32], strides = [1, 1]} : vector<8x96xf32> to vector<8x32xf32>
    %79 = vector.extract_strided_slice %69 {offsets = [0, 32], sizes = [8, 32], strides = [1, 1]} : vector<8x96xf32> to vector<8x32xf32>
    %80 = arith.addf %78, %79 : vector<8x32xf32>
    %81 = arith.negf %80 : vector<8x32xf32>
    %82 = math.exp %81 : vector<8x32xf32>
    %cst_33 = arith.constant 1.000000e+00 : f32
    %83 = vector.broadcast %cst_33 : f32 to vector<8x32xf32>
    %84 = arith.addf %83, %82 : vector<8x32xf32>
    %85 = arith.divf %83, %84 : vector<8x32xf32>
    %86 = vector.extract_strided_slice %67 {offsets = [0, 64], sizes = [8, 32], strides = [1, 1]} : vector<8x96xf32> to vector<8x32xf32>
    %87 = vector.extract_strided_slice %69 {offsets = [0, 64], sizes = [8, 32], strides = [1, 1]} : vector<8x96xf32> to vector<8x32xf32>
    %88 = vector.broadcast %27 : vector<1x32xf32> to vector<8x32xf32>
    %89 = arith.addf %87, %88 : vector<8x32xf32>
    %90 = arith.mulf %77, %89 : vector<8x32xf32>
    %91 = arith.addf %86, %90 : vector<8x32xf32>
    %92 = math.tanh %91 : vector<8x32xf32>
    %cst_34 = arith.constant 1.000000e+00 : f32
    %93 = vector.broadcast %cst_34 : f32 to vector<8x32xf32>
    %94 = arith.subf %93, %85 : vector<8x32xf32>
    %95 = arith.mulf %94, %92 : vector<8x32xf32>
    %96 = arith.mulf %85, %29 : vector<8x32xf32>
    %97 = arith.addf %95, %96 : vector<8x32xf32>
    %98 = arith.index_cast %31 : i32 to index
    %c0_35 = arith.constant 0 : index
    %99 = vector.load %arg14[%98, %c0_35] : memref<48x32xf32, #tpu.memory_space<vmem>>, vector<8x32xf32>
    tpu.vector_store %arg14[%98, %c0_35], %97 {strides = array<i32>} : memref<48x32xf32, #tpu.memory_space<vmem>>, vector<8x32xf32>,
    %c1_i32 = arith.constant 1 : i32
    %c8_i32_36 = arith.constant 8 : i32
    %100 = arith.muli %c1_i32, %c8_i32_36 : i32
    %101 = tpu.assume_multiple %100, 8 : i32
    %102 = arith.index_cast %101 : i32 to index
    %c0_37 = arith.constant 0 : index
    %103 = vector.load %arg13[%102, %c0_37] : memref<48x96xf32, #tpu.memory_space<vmem>>, vector<8x96xf32>
    %104 = arith.truncf %63 : vector<8x32xf32> to vector<8x32xbf16>
    %cst_38 = arith.constant dense<0.000000e+00> : vector<8x96xf32>
    %105 = tpu.matmul %104, %22, %cst_38 {dimension_numbers = #tpu.dot_dimension_numbers<[1], [0], [0], [1], [0, 0, 1, 1], [], []>} : vector<8x32xbf16>, vector<32x96xbf16>, vector<8x96xf32> -> vector<8x96xf32>
    %106 = vector.extract_strided_slice %103 {offsets = [0, 0], sizes = [8, 32], strides = [1, 1]} : vector<8x96xf32> to vector<8x32xf32>
    %107 = vector.extract_strided_slice %105 {offsets = [0, 0], sizes = [8, 32], strides = [1, 1]} : vector<8x96xf32> to vector<8x32xf32>
    %108 = arith.addf %106, %107 : vector<8x32xf32>
    %109 = arith.negf %108 : vector<8x32xf32>
    %110 = math.exp %109 : vector<8x32xf32>
    %cst_39 = arith.constant 1.000000e+00 : f32
    %111 = vector.broadcast %cst_39 : f32 to vector<8x32xf32>
    %112 = arith.addf %111, %110 : vector<8x32xf32>
    %113 = arith.divf %111, %112 : vector<8x32xf32>
    %114 = vector.extract_strided_slice %103 {offsets = [0, 32], sizes = [8, 32], strides = [1, 1]} : vector<8x96xf32> to vector<8x32xf32>
    %115 = vector.extract_strided_slice %105 {offsets = [0, 32], sizes = [8, 32], strides = [1, 1]} : vector<8x96xf32> to vector<8x32xf32>
    %116 = arith.addf %114, %115 : vector<8x32xf32>
    %117 = arith.negf %116 : vector<8x32xf32>
    %118 = math.exp %117 : vector<8x32xf32>
    %cst_40 = arith.constant 1.000000e+00 : f32
    %119 = vector.broadcast %cst_40 : f32 to vector<8x32xf32>
    %120 = arith.addf %119, %118 : vector<8x32xf32>
    %121 = arith.divf %119, %120 : vector<8x32xf32>
    %122 = vector.extract_strided_slice %103 {offsets = [0, 64], sizes = [8, 32], strides = [1, 1]} : vector<8x96xf32> to vector<8x32xf32>
    %123 = vector.extract_strided_slice %105 {offsets = [0, 64], sizes = [8, 32], strides = [1, 1]} : vector<8x96xf32> to vector<8x32xf32>
    %124 = vector.broadcast %26 : vector<1x32xf32> to vector<8x32xf32>
    %125 = arith.addf %123, %124 : vector<8x32xf32>
    %126 = arith.mulf %113, %125 : vector<8x32xf32>
    %127 = arith.addf %122, %126 : vector<8x32xf32>
    %128 = math.tanh %127 : vector<8x32xf32>
    %cst_41 = arith.constant 1.000000e+00 : f32
    %129 = vector.broadcast %cst_41 : f32 to vector<8x32xf32>
    %130 = arith.subf %129, %121 : vector<8x32xf32>
    %131 = arith.mulf %130, %128 : vector<8x32xf32>
    %132 = arith.mulf %121, %63 : vector<8x32xf32>
    %133 = arith.addf %131, %132 : vector<8x32xf32>
    %134 = arith.truncf %133 : vector<8x32xf32> to vector<8x32xbf16>
    %cst_42 = arith.constant dense<0.000000e+00> : vector<8x96xf32>
    %135 = tpu.matmul %134, %23, %cst_42 {dimension_numbers = #tpu.dot_dimension_numbers<[1], [0], [0], [1], [0, 0, 1, 1], [], []>} : vector<8x32xbf16>, vector<32x96xbf16>, vector<8x96xf32> -> vector<8x96xf32>
    %136 = vector.broadcast %25 : vector<1x96xf32> to vector<8x96xf32>
    %137 = arith.addf %135, %136 : vector<8x96xf32>
    %138 = arith.truncf %97 : vector<8x32xf32> to vector<8x32xbf16>
    %cst_43 = arith.constant dense<0.000000e+00> : vector<8x96xf32>
    %139 = tpu.matmul %138, %24, %cst_43 {dimension_numbers = #tpu.dot_dimension_numbers<[1], [0], [0], [1], [0, 0, 1, 1], [], []>} : vector<8x32xbf16>, vector<32x96xbf16>, vector<8x96xf32> -> vector<8x96xf32>
    %140 = vector.extract_strided_slice %137 {offsets = [0, 0], sizes = [8, 32], strides = [1, 1]} : vector<8x96xf32> to vector<8x32xf32>
    %141 = vector.extract_strided_slice %139 {offsets = [0, 0], sizes = [8, 32], strides = [1, 1]} : vector<8x96xf32> to vector<8x32xf32>
    %142 = arith.addf %140, %141 : vector<8x32xf32>
    %143 = arith.negf %142 : vector<8x32xf32>
    %144 = math.exp %143 : vector<8x32xf32>
    %cst_44 = arith.constant 1.000000e+00 : f32
    %145 = vector.broadcast %cst_44 : f32 to vector<8x32xf32>
    %146 = arith.addf %145, %144 : vector<8x32xf32>
    %147 = arith.divf %145, %146 : vector<8x32xf32>
    %148 = vector.extract_strided_slice %137 {offsets = [0, 32], sizes = [8, 32], strides = [1, 1]} : vector<8x96xf32> to vector<8x32xf32>
    %149 = vector.extract_strided_slice %139 {offsets = [0, 32], sizes = [8, 32], strides = [1, 1]} : vector<8x96xf32> to vector<8x32xf32>
    %150 = arith.addf %148, %149 : vector<8x32xf32>
    %151 = arith.negf %150 : vector<8x32xf32>
    %152 = math.exp %151 : vector<8x32xf32>
    %cst_45 = arith.constant 1.000000e+00 : f32
    %153 = vector.broadcast %cst_45 : f32 to vector<8x32xf32>
    %154 = arith.addf %153, %152 : vector<8x32xf32>
    %155 = arith.divf %153, %154 : vector<8x32xf32>
    %156 = vector.extract_strided_slice %137 {offsets = [0, 64], sizes = [8, 32], strides = [1, 1]} : vector<8x96xf32> to vector<8x32xf32>
    %157 = vector.extract_strided_slice %139 {offsets = [0, 64], sizes = [8, 32], strides = [1, 1]} : vector<8x96xf32> to vector<8x32xf32>
    %158 = vector.broadcast %27 : vector<1x32xf32> to vector<8x32xf32>
    %159 = arith.addf %157, %158 : vector<8x32xf32>
    %160 = arith.mulf %147, %159 : vector<8x32xf32>
    %161 = arith.addf %156, %160 : vector<8x32xf32>
    %162 = math.tanh %161 : vector<8x32xf32>
    %cst_46 = arith.constant 1.000000e+00 : f32
    %163 = vector.broadcast %cst_46 : f32 to vector<8x32xf32>
    %164 = arith.subf %163, %155 : vector<8x32xf32>
    %165 = arith.mulf %164, %162 : vector<8x32xf32>
    %166 = arith.mulf %155, %97 : vector<8x32xf32>
    %167 = arith.addf %165, %166 : vector<8x32xf32>
    %168 = arith.index_cast %101 : i32 to index
    %c0_47 = arith.constant 0 : index
    %169 = vector.load %arg14[%168, %c0_47] : memref<48x32xf32, #tpu.memory_space<vmem>>, vector<8x32xf32>
    tpu.vector_store %arg14[%168, %c0_47], %167 {strides = array<i32>} : memref<48x32xf32, #tpu.memory_space<vmem>>, vector<8x32xf32>,
    %c2_i32 = arith.constant 2 : i32
    %c8_i32_48 = arith.constant 8 : i32
    %170 = arith.muli %c2_i32, %c8_i32_48 : i32
    %171 = tpu.assume_multiple %170, 8 : i32
    %172 = arith.index_cast %171 : i32 to index
    %c0_49 = arith.constant 0 : index
    %173 = vector.load %arg13[%172, %c0_49] : memref<48x96xf32, #tpu.memory_space<vmem>>, vector<8x96xf32>
    %174 = arith.truncf %133 : vector<8x32xf32> to vector<8x32xbf16>
    %cst_50 = arith.constant dense<0.000000e+00> : vector<8x96xf32>
    %175 = tpu.matmul %174, %22, %cst_50 {dimension_numbers = #tpu.dot_dimension_numbers<[1], [0], [0], [1], [0, 0, 1, 1], [], []>} : vector<8x32xbf16>, vector<32x96xbf16>, vector<8x96xf32> -> vector<8x96xf32>
    %176 = vector.extract_strided_slice %173 {offsets = [0, 0], sizes = [8, 32], strides = [1, 1]} : vector<8x96xf32> to vector<8x32xf32>
    %177 = vector.extract_strided_slice %175 {offsets = [0, 0], sizes = [8, 32], strides = [1, 1]} : vector<8x96xf32> to vector<8x32xf32>
    %178 = arith.addf %176, %177 : vector<8x32xf32>
    %179 = arith.negf %178 : vector<8x32xf32>
    %180 = math.exp %179 : vector<8x32xf32>
    %cst_51 = arith.constant 1.000000e+00 : f32
    %181 = vector.broadcast %cst_51 : f32 to vector<8x32xf32>
    %182 = arith.addf %181, %180 : vector<8x32xf32>
    %183 = arith.divf %181, %182 : vector<8x32xf32>
    %184 = vector.extract_strided_slice %173 {offsets = [0, 32], sizes = [8, 32], strides = [1, 1]} : vector<8x96xf32> to vector<8x32xf32>
    %185 = vector.extract_strided_slice %175 {offsets = [0, 32], sizes = [8, 32], strides = [1, 1]} : vector<8x96xf32> to vector<8x32xf32>
    %186 = arith.addf %184, %185 : vector<8x32xf32>
    %187 = arith.negf %186 : vector<8x32xf32>
    %188 = math.exp %187 : vector<8x32xf32>
    %cst_52 = arith.constant 1.000000e+00 : f32
    %189 = vector.broadcast %cst_52 : f32 to vector<8x32xf32>
    %190 = arith.addf %189, %188 : vector<8x32xf32>
    %191 = arith.divf %189, %190 : vector<8x32xf32>
    %192 = vector.extract_strided_slice %173 {offsets = [0, 64], sizes = [8, 32], strides = [1, 1]} : vector<8x96xf32> to vector<8x32xf32>
    %193 = vector.extract_strided_slice %175 {offsets = [0, 64], sizes = [8, 32], strides = [1, 1]} : vector<8x96xf32> to vector<8x32xf32>
    %194 = vector.broadcast %26 : vector<1x32xf32> to vector<8x32xf32>
    %195 = arith.addf %193, %194 : vector<8x32xf32>
    %196 = arith.mulf %183, %195 : vector<8x32xf32>
    %197 = arith.addf %192, %196 : vector<8x32xf32>
    %198 = math.tanh %197 : vector<8x32xf32>
    %cst_53 = arith.constant 1.000000e+00 : f32
    %199 = vector.broadcast %cst_53 : f32 to vector<8x32xf32>
    %200 = arith.subf %199, %191 : vector<8x32xf32>
    %201 = arith.mulf %200, %198 : vector<8x32xf32>
    %202 = arith.mulf %191, %133 : vector<8x32xf32>
    %203 = arith.addf %201, %202 : vector<8x32xf32>
    %204 = arith.truncf %203 : vector<8x32xf32> to vector<8x32xbf16>
    %cst_54 = arith.constant dense<0.000000e+00> : vector<8x96xf32>
    %205 = tpu.matmul %204, %23, %cst_54 {dimension_numbers = #tpu.dot_dimension_numbers<[1], [0], [0], [1], [0, 0, 1, 1], [], []>} : vector<8x32xbf16>, vector<32x96xbf16>, vector<8x96xf32> -> vector<8x96xf32>
    %206 = vector.broadcast %25 : vector<1x96xf32> to vector<8x96xf32>
    %207 = arith.addf %205, %206 : vector<8x96xf32>
    %208 = arith.truncf %167 : vector<8x32xf32> to vector<8x32xbf16>
    %cst_55 = arith.constant dense<0.000000e+00> : vector<8x96xf32>
    %209 = tpu.matmul %208, %24, %cst_55 {dimension_numbers = #tpu.dot_dimension_numbers<[1], [0], [0], [1], [0, 0, 1, 1], [], []>} : vector<8x32xbf16>, vector<32x96xbf16>, vector<8x96xf32> -> vector<8x96xf32>
    %210 = vector.extract_strided_slice %207 {offsets = [0, 0], sizes = [8, 32], strides = [1, 1]} : vector<8x96xf32> to vector<8x32xf32>
    %211 = vector.extract_strided_slice %209 {offsets = [0, 0], sizes = [8, 32], strides = [1, 1]} : vector<8x96xf32> to vector<8x32xf32>
    %212 = arith.addf %210, %211 : vector<8x32xf32>
    %213 = arith.negf %212 : vector<8x32xf32>
    %214 = math.exp %213 : vector<8x32xf32>
    %cst_56 = arith.constant 1.000000e+00 : f32
    %215 = vector.broadcast %cst_56 : f32 to vector<8x32xf32>
    %216 = arith.addf %215, %214 : vector<8x32xf32>
    %217 = arith.divf %215, %216 : vector<8x32xf32>
    %218 = vector.extract_strided_slice %207 {offsets = [0, 32], sizes = [8, 32], strides = [1, 1]} : vector<8x96xf32> to vector<8x32xf32>
    %219 = vector.extract_strided_slice %209 {offsets = [0, 32], sizes = [8, 32], strides = [1, 1]} : vector<8x96xf32> to vector<8x32xf32>
    %220 = arith.addf %218, %219 : vector<8x32xf32>
    %221 = arith.negf %220 : vector<8x32xf32>
    %222 = math.exp %221 : vector<8x32xf32>
    %cst_57 = arith.constant 1.000000e+00 : f32
    %223 = vector.broadcast %cst_57 : f32 to vector<8x32xf32>
    %224 = arith.addf %223, %222 : vector<8x32xf32>
    %225 = arith.divf %223, %224 : vector<8x32xf32>
    %226 = vector.extract_strided_slice %207 {offsets = [0, 64], sizes = [8, 32], strides = [1, 1]} : vector<8x96xf32> to vector<8x32xf32>
    %227 = vector.extract_strided_slice %209 {offsets = [0, 64], sizes = [8, 32], strides = [1, 1]} : vector<8x96xf32> to vector<8x32xf32>
    %228 = vector.broadcast %27 : vector<1x32xf32> to vector<8x32xf32>
    %229 = arith.addf %227, %228 : vector<8x32xf32>
    %230 = arith.mulf %217, %229 : vector<8x32xf32>
    %231 = arith.addf %226, %230 : vector<8x32xf32>
    %232 = math.tanh %231 : vector<8x32xf32>
    %cst_58 = arith.constant 1.000000e+00 : f32
    %233 = vector.broadcast %cst_58 : f32 to vector<8x32xf32>
    %234 = arith.subf %233, %225 : vector<8x32xf32>
    %235 = arith.mulf %234, %232 : vector<8x32xf32>
    %236 = arith.mulf %225, %167 : vector<8x32xf32>
    %237 = arith.addf %235, %236 : vector<8x32xf32>
    %238 = arith.index_cast %171 : i32 to index
    %c0_59 = arith.constant 0 : index
    %239 = vector.load %arg14[%238, %c0_59] : memref<48x32xf32, #tpu.memory_space<vmem>>, vector<8x32xf32>
    tpu.vector_store %arg14[%238, %c0_59], %237 {strides = array<i32>} : memref<48x32xf32, #tpu.memory_space<vmem>>, vector<8x32xf32>,
    %c3_i32 = arith.constant 3 : i32
    %c8_i32_60 = arith.constant 8 : i32
    %240 = arith.muli %c3_i32, %c8_i32_60 : i32
    %241 = tpu.assume_multiple %240, 8 : i32
    %242 = arith.index_cast %241 : i32 to index
    %c0_61 = arith.constant 0 : index
    %243 = vector.load %arg13[%242, %c0_61] : memref<48x96xf32, #tpu.memory_space<vmem>>, vector<8x96xf32>
    %244 = arith.truncf %203 : vector<8x32xf32> to vector<8x32xbf16>
    %cst_62 = arith.constant dense<0.000000e+00> : vector<8x96xf32>
    %245 = tpu.matmul %244, %22, %cst_62 {dimension_numbers = #tpu.dot_dimension_numbers<[1], [0], [0], [1], [0, 0, 1, 1], [], []>} : vector<8x32xbf16>, vector<32x96xbf16>, vector<8x96xf32> -> vector<8x96xf32>
    %246 = vector.extract_strided_slice %243 {offsets = [0, 0], sizes = [8, 32], strides = [1, 1]} : vector<8x96xf32> to vector<8x32xf32>
    %247 = vector.extract_strided_slice %245 {offsets = [0, 0], sizes = [8, 32], strides = [1, 1]} : vector<8x96xf32> to vector<8x32xf32>
    %248 = arith.addf %246, %247 : vector<8x32xf32>
    %249 = arith.negf %248 : vector<8x32xf32>
    %250 = math.exp %249 : vector<8x32xf32>
    %cst_63 = arith.constant 1.000000e+00 : f32
    %251 = vector.broadcast %cst_63 : f32 to vector<8x32xf32>
    %252 = arith.addf %251, %250 : vector<8x32xf32>
    %253 = arith.divf %251, %252 : vector<8x32xf32>
    %254 = vector.extract_strided_slice %243 {offsets = [0, 32], sizes = [8, 32], strides = [1, 1]} : vector<8x96xf32> to vector<8x32xf32>
    %255 = vector.extract_strided_slice %245 {offsets = [0, 32], sizes = [8, 32], strides = [1, 1]} : vector<8x96xf32> to vector<8x32xf32>
    %256 = arith.addf %254, %255 : vector<8x32xf32>
    %257 = arith.negf %256 : vector<8x32xf32>
    %258 = math.exp %257 : vector<8x32xf32>
    %cst_64 = arith.constant 1.000000e+00 : f32
    %259 = vector.broadcast %cst_64 : f32 to vector<8x32xf32>
    %260 = arith.addf %259, %258 : vector<8x32xf32>
    %261 = arith.divf %259, %260 : vector<8x32xf32>
    %262 = vector.extract_strided_slice %243 {offsets = [0, 64], sizes = [8, 32], strides = [1, 1]} : vector<8x96xf32> to vector<8x32xf32>
    %263 = vector.extract_strided_slice %245 {offsets = [0, 64], sizes = [8, 32], strides = [1, 1]} : vector<8x96xf32> to vector<8x32xf32>
    %264 = vector.broadcast %26 : vector<1x32xf32> to vector<8x32xf32>
    %265 = arith.addf %263, %264 : vector<8x32xf32>
    %266 = arith.mulf %253, %265 : vector<8x32xf32>
    %267 = arith.addf %262, %266 : vector<8x32xf32>
    %268 = math.tanh %267 : vector<8x32xf32>
    %cst_65 = arith.constant 1.000000e+00 : f32
    %269 = vector.broadcast %cst_65 : f32 to vector<8x32xf32>
    %270 = arith.subf %269, %261 : vector<8x32xf32>
    %271 = arith.mulf %270, %268 : vector<8x32xf32>
    %272 = arith.mulf %261, %203 : vector<8x32xf32>
    %273 = arith.addf %271, %272 : vector<8x32xf32>
    %274 = arith.truncf %273 : vector<8x32xf32> to vector<8x32xbf16>
    %cst_66 = arith.constant dense<0.000000e+00> : vector<8x96xf32>
    %275 = tpu.matmul %274, %23, %cst_66 {dimension_numbers = #tpu.dot_dimension_numbers<[1], [0], [0], [1], [0, 0, 1, 1], [], []>} : vector<8x32xbf16>, vector<32x96xbf16>, vector<8x96xf32> -> vector<8x96xf32>
    %276 = vector.broadcast %25 : vector<1x96xf32> to vector<8x96xf32>
    %277 = arith.addf %275, %276 : vector<8x96xf32>
    %278 = arith.truncf %237 : vector<8x32xf32> to vector<8x32xbf16>
    %cst_67 = arith.constant dense<0.000000e+00> : vector<8x96xf32>
    %279 = tpu.matmul %278, %24, %cst_67 {dimension_numbers = #tpu.dot_dimension_numbers<[1], [0], [0], [1], [0, 0, 1, 1], [], []>} : vector<8x32xbf16>, vector<32x96xbf16>, vector<8x96xf32> -> vector<8x96xf32>
    %280 = vector.extract_strided_slice %277 {offsets = [0, 0], sizes = [8, 32], strides = [1, 1]} : vector<8x96xf32> to vector<8x32xf32>
    %281 = vector.extract_strided_slice %279 {offsets = [0, 0], sizes = [8, 32], strides = [1, 1]} : vector<8x96xf32> to vector<8x32xf32>
    %282 = arith.addf %280, %281 : vector<8x32xf32>
    %283 = arith.negf %282 : vector<8x32xf32>
    %284 = math.exp %283 : vector<8x32xf32>
    %cst_68 = arith.constant 1.000000e+00 : f32
    %285 = vector.broadcast %cst_68 : f32 to vector<8x32xf32>
    %286 = arith.addf %285, %284 : vector<8x32xf32>
    %287 = arith.divf %285, %286 : vector<8x32xf32>
    %288 = vector.extract_strided_slice %277 {offsets = [0, 32], sizes = [8, 32], strides = [1, 1]} : vector<8x96xf32> to vector<8x32xf32>
    %289 = vector.extract_strided_slice %279 {offsets = [0, 32], sizes = [8, 32], strides = [1, 1]} : vector<8x96xf32> to vector<8x32xf32>
    %290 = arith.addf %288, %289 : vector<8x32xf32>
    %291 = arith.negf %290 : vector<8x32xf32>
    %292 = math.exp %291 : vector<8x32xf32>
    %cst_69 = arith.constant 1.000000e+00 : f32
    %293 = vector.broadcast %cst_69 : f32 to vector<8x32xf32>
    %294 = arith.addf %293, %292 : vector<8x32xf32>
    %295 = arith.divf %293, %294 : vector<8x32xf32>
    %296 = vector.extract_strided_slice %277 {offsets = [0, 64], sizes = [8, 32], strides = [1, 1]} : vector<8x96xf32> to vector<8x32xf32>
    %297 = vector.extract_strided_slice %279 {offsets = [0, 64], sizes = [8, 32], strides = [1, 1]} : vector<8x96xf32> to vector<8x32xf32>
    %298 = vector.broadcast %27 : vector<1x32xf32> to vector<8x32xf32>
    %299 = arith.addf %297, %298 : vector<8x32xf32>
    %300 = arith.mulf %287, %299 : vector<8x32xf32>
    %301 = arith.addf %296, %300 : vector<8x32xf32>
    %302 = math.tanh %301 : vector<8x32xf32>
    %cst_70 = arith.constant 1.000000e+00 : f32
    %303 = vector.broadcast %cst_70 : f32 to vector<8x32xf32>
    %304 = arith.subf %303, %295 : vector<8x32xf32>
    %305 = arith.mulf %304, %302 : vector<8x32xf32>
    %306 = arith.mulf %295, %237 : vector<8x32xf32>
    %307 = arith.addf %305, %306 : vector<8x32xf32>
    %308 = arith.index_cast %241 : i32 to index
    %c0_71 = arith.constant 0 : index
    %309 = vector.load %arg14[%308, %c0_71] : memref<48x32xf32, #tpu.memory_space<vmem>>, vector<8x32xf32>
    tpu.vector_store %arg14[%308, %c0_71], %307 {strides = array<i32>} : memref<48x32xf32, #tpu.memory_space<vmem>>, vector<8x32xf32>,
    %c4_i32 = arith.constant 4 : i32
    %c8_i32_72 = arith.constant 8 : i32
    %310 = arith.muli %c4_i32, %c8_i32_72 : i32
    %311 = tpu.assume_multiple %310, 8 : i32
    %312 = arith.index_cast %311 : i32 to index
    %c0_73 = arith.constant 0 : index
    %313 = vector.load %arg13[%312, %c0_73] : memref<48x96xf32, #tpu.memory_space<vmem>>, vector<8x96xf32>
    %314 = arith.truncf %273 : vector<8x32xf32> to vector<8x32xbf16>
    %cst_74 = arith.constant dense<0.000000e+00> : vector<8x96xf32>
    %315 = tpu.matmul %314, %22, %cst_74 {dimension_numbers = #tpu.dot_dimension_numbers<[1], [0], [0], [1], [0, 0, 1, 1], [], []>} : vector<8x32xbf16>, vector<32x96xbf16>, vector<8x96xf32> -> vector<8x96xf32>
    %316 = vector.extract_strided_slice %313 {offsets = [0, 0], sizes = [8, 32], strides = [1, 1]} : vector<8x96xf32> to vector<8x32xf32>
    %317 = vector.extract_strided_slice %315 {offsets = [0, 0], sizes = [8, 32], strides = [1, 1]} : vector<8x96xf32> to vector<8x32xf32>
    %318 = arith.addf %316, %317 : vector<8x32xf32>
    %319 = arith.negf %318 : vector<8x32xf32>
    %320 = math.exp %319 : vector<8x32xf32>
    %cst_75 = arith.constant 1.000000e+00 : f32
    %321 = vector.broadcast %cst_75 : f32 to vector<8x32xf32>
    %322 = arith.addf %321, %320 : vector<8x32xf32>
    %323 = arith.divf %321, %322 : vector<8x32xf32>
    %324 = vector.extract_strided_slice %313 {offsets = [0, 32], sizes = [8, 32], strides = [1, 1]} : vector<8x96xf32> to vector<8x32xf32>
    %325 = vector.extract_strided_slice %315 {offsets = [0, 32], sizes = [8, 32], strides = [1, 1]} : vector<8x96xf32> to vector<8x32xf32>
    %326 = arith.addf %324, %325 : vector<8x32xf32>
    %327 = arith.negf %326 : vector<8x32xf32>
    %328 = math.exp %327 : vector<8x32xf32>
    %cst_76 = arith.constant 1.000000e+00 : f32
    %329 = vector.broadcast %cst_76 : f32 to vector<8x32xf32>
    %330 = arith.addf %329, %328 : vector<8x32xf32>
    %331 = arith.divf %329, %330 : vector<8x32xf32>
    %332 = vector.extract_strided_slice %313 {offsets = [0, 64], sizes = [8, 32], strides = [1, 1]} : vector<8x96xf32> to vector<8x32xf32>
    %333 = vector.extract_strided_slice %315 {offsets = [0, 64], sizes = [8, 32], strides = [1, 1]} : vector<8x96xf32> to vector<8x32xf32>
    %334 = vector.broadcast %26 : vector<1x32xf32> to vector<8x32xf32>
    %335 = arith.addf %333, %334 : vector<8x32xf32>
    %336 = arith.mulf %323, %335 : vector<8x32xf32>
    %337 = arith.addf %332, %336 : vector<8x32xf32>
    %338 = math.tanh %337 : vector<8x32xf32>
    %cst_77 = arith.constant 1.000000e+00 : f32
    %339 = vector.broadcast %cst_77 : f32 to vector<8x32xf32>
    %340 = arith.subf %339, %331 : vector<8x32xf32>
    %341 = arith.mulf %340, %338 : vector<8x32xf32>
    %342 = arith.mulf %331, %273 : vector<8x32xf32>
    %343 = arith.addf %341, %342 : vector<8x32xf32>
    %344 = arith.truncf %343 : vector<8x32xf32> to vector<8x32xbf16>
    %cst_78 = arith.constant dense<0.000000e+00> : vector<8x96xf32>
    %345 = tpu.matmul %344, %23, %cst_78 {dimension_numbers = #tpu.dot_dimension_numbers<[1], [0], [0], [1], [0, 0, 1, 1], [], []>} : vector<8x32xbf16>, vector<32x96xbf16>, vector<8x96xf32> -> vector<8x96xf32>
    %346 = vector.broadcast %25 : vector<1x96xf32> to vector<8x96xf32>
    %347 = arith.addf %345, %346 : vector<8x96xf32>
    %348 = arith.truncf %307 : vector<8x32xf32> to vector<8x32xbf16>
    %cst_79 = arith.constant dense<0.000000e+00> : vector<8x96xf32>
    %349 = tpu.matmul %348, %24, %cst_79 {dimension_numbers = #tpu.dot_dimension_numbers<[1], [0], [0], [1], [0, 0, 1, 1], [], []>} : vector<8x32xbf16>, vector<32x96xbf16>, vector<8x96xf32> -> vector<8x96xf32>
    %350 = vector.extract_strided_slice %347 {offsets = [0, 0], sizes = [8, 32], strides = [1, 1]} : vector<8x96xf32> to vector<8x32xf32>
    %351 = vector.extract_strided_slice %349 {offsets = [0, 0], sizes = [8, 32], strides = [1, 1]} : vector<8x96xf32> to vector<8x32xf32>
    %352 = arith.addf %350, %351 : vector<8x32xf32>
    %353 = arith.negf %352 : vector<8x32xf32>
    %354 = math.exp %353 : vector<8x32xf32>
    %cst_80 = arith.constant 1.000000e+00 : f32
    %355 = vector.broadcast %cst_80 : f32 to vector<8x32xf32>
    %356 = arith.addf %355, %354 : vector<8x32xf32>
    %357 = arith.divf %355, %356 : vector<8x32xf32>
    %358 = vector.extract_strided_slice %347 {offsets = [0, 32], sizes = [8, 32], strides = [1, 1]} : vector<8x96xf32> to vector<8x32xf32>
    %359 = vector.extract_strided_slice %349 {offsets = [0, 32], sizes = [8, 32], strides = [1, 1]} : vector<8x96xf32> to vector<8x32xf32>
    %360 = arith.addf %358, %359 : vector<8x32xf32>
    %361 = arith.negf %360 : vector<8x32xf32>
    %362 = math.exp %361 : vector<8x32xf32>
    %cst_81 = arith.constant 1.000000e+00 : f32
    %363 = vector.broadcast %cst_81 : f32 to vector<8x32xf32>
    %364 = arith.addf %363, %362 : vector<8x32xf32>
    %365 = arith.divf %363, %364 : vector<8x32xf32>
    %366 = vector.extract_strided_slice %347 {offsets = [0, 64], sizes = [8, 32], strides = [1, 1]} : vector<8x96xf32> to vector<8x32xf32>
    %367 = vector.extract_strided_slice %349 {offsets = [0, 64], sizes = [8, 32], strides = [1, 1]} : vector<8x96xf32> to vector<8x32xf32>
    %368 = vector.broadcast %27 : vector<1x32xf32> to vector<8x32xf32>
    %369 = arith.addf %367, %368 : vector<8x32xf32>
    %370 = arith.mulf %357, %369 : vector<8x32xf32>
    %371 = arith.addf %366, %370 : vector<8x32xf32>
    %372 = math.tanh %371 : vector<8x32xf32>
    %cst_82 = arith.constant 1.000000e+00 : f32
    %373 = vector.broadcast %cst_82 : f32 to vector<8x32xf32>
    %374 = arith.subf %373, %365 : vector<8x32xf32>
    %375 = arith.mulf %374, %372 : vector<8x32xf32>
    %376 = arith.mulf %365, %307 : vector<8x32xf32>
    %377 = arith.addf %375, %376 : vector<8x32xf32>
    %378 = arith.index_cast %311 : i32 to index
    %c0_83 = arith.constant 0 : index
    %379 = vector.load %arg14[%378, %c0_83] : memref<48x32xf32, #tpu.memory_space<vmem>>, vector<8x32xf32>
    tpu.vector_store %arg14[%378, %c0_83], %377 {strides = array<i32>} : memref<48x32xf32, #tpu.memory_space<vmem>>, vector<8x32xf32>,
    %c5_i32 = arith.constant 5 : i32
    %c8_i32_84 = arith.constant 8 : i32
    %380 = arith.muli %c5_i32, %c8_i32_84 : i32
    %381 = tpu.assume_multiple %380, 8 : i32
    %382 = arith.index_cast %381 : i32 to index
    %c0_85 = arith.constant 0 : index
    %383 = vector.load %arg13[%382, %c0_85] : memref<48x96xf32, #tpu.memory_space<vmem>>, vector<8x96xf32>
    %384 = arith.truncf %343 : vector<8x32xf32> to vector<8x32xbf16>
    %cst_86 = arith.constant dense<0.000000e+00> : vector<8x96xf32>
    %385 = tpu.matmul %384, %22, %cst_86 {dimension_numbers = #tpu.dot_dimension_numbers<[1], [0], [0], [1], [0, 0, 1, 1], [], []>} : vector<8x32xbf16>, vector<32x96xbf16>, vector<8x96xf32> -> vector<8x96xf32>
    %386 = vector.extract_strided_slice %383 {offsets = [0, 0], sizes = [8, 32], strides = [1, 1]} : vector<8x96xf32> to vector<8x32xf32>
    %387 = vector.extract_strided_slice %385 {offsets = [0, 0], sizes = [8, 32], strides = [1, 1]} : vector<8x96xf32> to vector<8x32xf32>
    %388 = arith.addf %386, %387 : vector<8x32xf32>
    %389 = arith.negf %388 : vector<8x32xf32>
    %390 = math.exp %389 : vector<8x32xf32>
    %cst_87 = arith.constant 1.000000e+00 : f32
    %391 = vector.broadcast %cst_87 : f32 to vector<8x32xf32>
    %392 = arith.addf %391, %390 : vector<8x32xf32>
    %393 = arith.divf %391, %392 : vector<8x32xf32>
    %394 = vector.extract_strided_slice %383 {offsets = [0, 32], sizes = [8, 32], strides = [1, 1]} : vector<8x96xf32> to vector<8x32xf32>
    %395 = vector.extract_strided_slice %385 {offsets = [0, 32], sizes = [8, 32], strides = [1, 1]} : vector<8x96xf32> to vector<8x32xf32>
    %396 = arith.addf %394, %395 : vector<8x32xf32>
    %397 = arith.negf %396 : vector<8x32xf32>
    %398 = math.exp %397 : vector<8x32xf32>
    %cst_88 = arith.constant 1.000000e+00 : f32
    %399 = vector.broadcast %cst_88 : f32 to vector<8x32xf32>
    %400 = arith.addf %399, %398 : vector<8x32xf32>
    %401 = arith.divf %399, %400 : vector<8x32xf32>
    %402 = vector.extract_strided_slice %383 {offsets = [0, 64], sizes = [8, 32], strides = [1, 1]} : vector<8x96xf32> to vector<8x32xf32>
    %403 = vector.extract_strided_slice %385 {offsets = [0, 64], sizes = [8, 32], strides = [1, 1]} : vector<8x96xf32> to vector<8x32xf32>
    %404 = vector.broadcast %26 : vector<1x32xf32> to vector<8x32xf32>
    %405 = arith.addf %403, %404 : vector<8x32xf32>
    %406 = arith.mulf %393, %405 : vector<8x32xf32>
    %407 = arith.addf %402, %406 : vector<8x32xf32>
    %408 = math.tanh %407 : vector<8x32xf32>
    %cst_89 = arith.constant 1.000000e+00 : f32
    %409 = vector.broadcast %cst_89 : f32 to vector<8x32xf32>
    %410 = arith.subf %409, %401 : vector<8x32xf32>
    %411 = arith.mulf %410, %408 : vector<8x32xf32>
    %412 = arith.mulf %401, %343 : vector<8x32xf32>
    %413 = arith.addf %411, %412 : vector<8x32xf32>
    %414 = arith.truncf %413 : vector<8x32xf32> to vector<8x32xbf16>
    %cst_90 = arith.constant dense<0.000000e+00> : vector<8x96xf32>
    %415 = tpu.matmul %414, %23, %cst_90 {dimension_numbers = #tpu.dot_dimension_numbers<[1], [0], [0], [1], [0, 0, 1, 1], [], []>} : vector<8x32xbf16>, vector<32x96xbf16>, vector<8x96xf32> -> vector<8x96xf32>
    %416 = vector.broadcast %25 : vector<1x96xf32> to vector<8x96xf32>
    %417 = arith.addf %415, %416 : vector<8x96xf32>
    %418 = arith.truncf %377 : vector<8x32xf32> to vector<8x32xbf16>
    %cst_91 = arith.constant dense<0.000000e+00> : vector<8x96xf32>
    %419 = tpu.matmul %418, %24, %cst_91 {dimension_numbers = #tpu.dot_dimension_numbers<[1], [0], [0], [1], [0, 0, 1, 1], [], []>} : vector<8x32xbf16>, vector<32x96xbf16>, vector<8x96xf32> -> vector<8x96xf32>
    %420 = vector.extract_strided_slice %417 {offsets = [0, 0], sizes = [8, 32], strides = [1, 1]} : vector<8x96xf32> to vector<8x32xf32>
    %421 = vector.extract_strided_slice %419 {offsets = [0, 0], sizes = [8, 32], strides = [1, 1]} : vector<8x96xf32> to vector<8x32xf32>
    %422 = arith.addf %420, %421 : vector<8x32xf32>
    %423 = arith.negf %422 : vector<8x32xf32>
    %424 = math.exp %423 : vector<8x32xf32>
    %cst_92 = arith.constant 1.000000e+00 : f32
    %425 = vector.broadcast %cst_92 : f32 to vector<8x32xf32>
    %426 = arith.addf %425, %424 : vector<8x32xf32>
    %427 = arith.divf %425, %426 : vector<8x32xf32>
    %428 = vector.extract_strided_slice %417 {offsets = [0, 32], sizes = [8, 32], strides = [1, 1]} : vector<8x96xf32> to vector<8x32xf32>
    %429 = vector.extract_strided_slice %419 {offsets = [0, 32], sizes = [8, 32], strides = [1, 1]} : vector<8x96xf32> to vector<8x32xf32>
    %430 = arith.addf %428, %429 : vector<8x32xf32>
    %431 = arith.negf %430 : vector<8x32xf32>
    %432 = math.exp %431 : vector<8x32xf32>
    %cst_93 = arith.constant 1.000000e+00 : f32
    %433 = vector.broadcast %cst_93 : f32 to vector<8x32xf32>
    %434 = arith.addf %433, %432 : vector<8x32xf32>
    %435 = arith.divf %433, %434 : vector<8x32xf32>
    %436 = vector.extract_strided_slice %417 {offsets = [0, 64], sizes = [8, 32], strides = [1, 1]} : vector<8x96xf32> to vector<8x32xf32>
    %437 = vector.extract_strided_slice %419 {offsets = [0, 64], sizes = [8, 32], strides = [1, 1]} : vector<8x96xf32> to vector<8x32xf32>
    %438 = vector.broadcast %27 : vector<1x32xf32> to vector<8x32xf32>
    %439 = arith.addf %437, %438 : vector<8x32xf32>
    %440 = arith.mulf %427, %439 : vector<8x32xf32>
    %441 = arith.addf %436, %440 : vector<8x32xf32>
    %442 = math.tanh %441 : vector<8x32xf32>
    %cst_94 = arith.constant 1.000000e+00 : f32
    %443 = vector.broadcast %cst_94 : f32 to vector<8x32xf32>
    %444 = arith.subf %443, %435 : vector<8x32xf32>
    %445 = arith.mulf %444, %442 : vector<8x32xf32>
    %446 = arith.mulf %435, %377 : vector<8x32xf32>
    %447 = arith.addf %445, %446 : vector<8x32xf32>
    %448 = arith.index_cast %381 : i32 to index
    %c0_95 = arith.constant 0 : index
    %449 = vector.load %arg14[%448, %c0_95] : memref<48x32xf32, #tpu.memory_space<vmem>>, vector<8x32xf32>
    tpu.vector_store %arg14[%448, %c0_95], %447 {strides = array<i32>} : memref<48x32xf32, #tpu.memory_space<vmem>>, vector<8x32xf32>,
    %c6_i32 = arith.constant 6 : i32
    %c0_96 = arith.constant 0 : index
    %c0_97 = arith.constant 0 : index
    %450 = vector.load %arg14[%c0_96, %c0_97] : memref<48x32xf32, #tpu.memory_space<vmem>>, vector<48x32xf32>
    %cst_98 = arith.constant dense<0.000000e+00> : vector<48xf32>
    %451 = vector.multi_reduction <add>, %450, %cst_98 [1] : vector<48x32xf32> to vector<48xf32>
    %452 = vector.shape_cast %451 : vector<48xf32> to vector<48x1xf32>
    %cst_99 = arith.constant 3.200000e+01 : f32
    %453 = vector.broadcast %cst_99 : f32 to vector<48x1xf32>
    %454 = arith.divf %452, %453 : vector<48x1xf32>
    %455 = vector.broadcast %454 : vector<48x1xf32> to vector<48x32xf32>
    %456 = arith.subf %450, %455 : vector<48x32xf32>
    %457 = arith.mulf %456, %456 : vector<48x32xf32>
    %cst_100 = arith.constant dense<0.000000e+00> : vector<48xf32>
    %458 = vector.multi_reduction <add>, %457, %cst_100 [1] : vector<48x32xf32> to vector<48xf32>
    %459 = vector.shape_cast %458 : vector<48xf32> to vector<48x1xf32>
    %cst_101 = arith.constant 3.200000e+01 : f32
    %460 = vector.broadcast %cst_101 : f32 to vector<48x1xf32>
    %461 = arith.divf %459, %460 : vector<48x1xf32>
    %462 = vector.broadcast %454 : vector<48x1xf32> to vector<48x32xf32>
    %463 = arith.subf %450, %462 : vector<48x32xf32>
    %cst_102 = arith.constant 9.99999974E-6 : f32
    %464 = vector.broadcast %cst_102 : f32 to vector<48x1xf32>
    %465 = arith.addf %461, %464 : vector<48x1xf32>
    %466 = math.rsqrt %465 : vector<48x1xf32>
    %467 = vector.broadcast %466 : vector<48x1xf32> to vector<48x32xf32>
    %468 = arith.mulf %463, %467 : vector<48x32xf32>
    %469 = arith.truncf %468 : vector<48x32xf32> to vector<48x32xbf16>
    %c0_103 = arith.constant 0 : index
    %c0_104 = arith.constant 0 : index
    %c0_105 = arith.constant 0 : index
    %470 = vector.load %arg9[%c0_103, %c0_104, %c0_105] : memref<1x32x32xf32, #tpu.memory_space<vmem>>, vector<1x32x32xf32>
    %471 = vector.shape_cast %470 : vector<1x32x32xf32> to vector<32x32xf32>
    %472 = arith.truncf %471 : vector<32x32xf32> to vector<32x32xbf16>
    %cst_106 = arith.constant dense<0.000000e+00> : vector<48x32xf32>
    %473 = tpu.matmul %469, %472, %cst_106 {dimension_numbers = #tpu.dot_dimension_numbers<[1], [0], [0], [1], [0, 0, 1, 1], [], []>} : vector<48x32xbf16>, vector<32x32xbf16>, vector<48x32xf32> -> vector<48x32xf32>
    %c0_107 = arith.constant 0 : index
    %c0_108 = arith.constant 0 : index
    %c0_109 = arith.constant 0 : index
    %474 = vector.load %arg10[%c0_107, %c0_108, %c0_109] : memref<1x1x32xf32, #tpu.memory_space<vmem>>, vector<1x1x32xf32>
    %475 = vector.shape_cast %474 : vector<1x1x32xf32> to vector<1x32xf32>
    %476 = vector.broadcast %475 : vector<1x32xf32> to vector<48x32xf32>
    %477 = arith.addf %473, %476 : vector<48x32xf32>
    %478 = vector.extract_strided_slice %477 {offsets = [0, 0], sizes = [48, 16], strides = [1, 1]} : vector<48x32xf32> to vector<48x16xf32>
    %479 = vector.extract_strided_slice %477 {offsets = [0, 16], sizes = [48, 16], strides = [1, 1]} : vector<48x32xf32> to vector<48x16xf32>
    %c0_110 = arith.constant 0 : index
    %c0_111 = arith.constant 0 : index
    %c0_112 = arith.constant 0 : index
    %c0_113 = arith.constant 0 : index
    %480 = vector.load %arg2[%c0_110, %c0_111, %c0_112, %c0_113] : memref<1x6x8x16xf32, #tpu.memory_space<vmem>>, vector<1x6x8x16xf32>
    %481 = vector.shape_cast %480 : vector<1x6x8x16xf32> to vector<6x8x16xf32>
    %482 = vector.shape_cast %481 : vector<6x8x16xf32> to vector<48x16xf32>
    %cst_114 = arith.constant 5.000000e-01 : f32
    %483 = vector.broadcast %cst_114 : f32 to vector<48x16xf32>
    %484 = arith.mulf %483, %479 : vector<48x16xf32>
    %485 = math.exp %484 : vector<48x16xf32>
    %486 = arith.mulf %485, %482 : vector<48x16xf32>
    %487 = arith.addf %478, %486 : vector<48x16xf32>
    %488 = vector.shape_cast %487 : vector<48x16xf32> to vector<6x8x16xf32>
    %c0_115 = arith.constant 0 : index
    %c0_116 = arith.constant 0 : index
    %c0_117 = arith.constant 0 : index
    %c0_118 = arith.constant 0 : index
    %489 = vector.load %arg11[%c0_115, %c0_116, %c0_117, %c0_118] : memref<1x6x8x16xf32, #tpu.memory_space<vmem>>, vector<1x6x8x16xf32>
    %490 = vector.shape_cast %489 : vector<1x6x8x16xf32> to vector<6x8x16xf32>
    %491 = vector.shape_cast %488 : vector<6x8x16xf32> to vector<1x6x8x16xf32>
    tpu.vector_store %arg11[%c0_115, %c0_116, %c0_117, %c0_118], %491 {strides = array<i32>} : memref<1x6x8x16xf32, #tpu.memory_space<vmem>>, vector<1x6x8x16xf32>,
    %492 = vector.shape_cast %477 : vector<48x32xf32> to vector<6x8x32xf32>
    %c0_119 = arith.constant 0 : index
    %c0_120 = arith.constant 0 : index
    %c0_121 = arith.constant 0 : index
    %c0_122 = arith.constant 0 : index
    %493 = vector.load %arg12[%c0_119, %c0_120, %c0_121, %c0_122] : memref<1x6x8x32xf32, #tpu.memory_space<vmem>>, vector<1x6x8x32xf32>
    %494 = vector.shape_cast %493 : vector<1x6x8x32xf32> to vector<6x8x32xf32>
    %495 = vector.shape_cast %492 : vector<6x8x32xf32> to vector<1x6x8x32xf32>
    tpu.vector_store %arg12[%c0_119, %c0_120, %c0_121, %c0_122], %495 {strides = array<i32>} : memref<1x6x8x32xf32, #tpu.memory_space<vmem>>, vector<1x6x8x32xf32>,
    return
  }
  func.func @transform_0(%arg0: i32) -> (i32, i32, i32, i32) {
    %c0_i32 = arith.constant 0 : i32
    %c0_i32_0 = arith.constant 0 : i32
    %c0_i32_1 = arith.constant 0 : i32
    %c0_i32_2 = arith.constant 0 : i32
    return %arg0, %c0_i32, %c0_i32_0, %c0_i32_1 : i32, i32, i32, i32
  }
  func.func @transform_1(%arg0: i32) -> (i32, i32, i32, i32) {
    %c0_i32 = arith.constant 0 : i32
    %c0_i32_0 = arith.constant 0 : i32
    %c0_i32_1 = arith.constant 0 : i32
    %c0_i32_2 = arith.constant 0 : i32
    return %arg0, %c0_i32, %c0_i32_0, %c0_i32_1 : i32, i32, i32, i32
  }
  func.func @transform_2(%arg0: i32) -> (i32, i32, i32) {
    %c0_i32 = arith.constant 0 : i32
    %c0_i32_0 = arith.constant 0 : i32
    %c0_i32_1 = arith.constant 0 : i32
    return %arg0, %c0_i32, %c0_i32_0 : i32, i32, i32
  }
  func.func @transform_3(%arg0: i32) -> (i32, i32, i32) {
    %c0_i32 = arith.constant 0 : i32
    %c0_i32_0 = arith.constant 0 : i32
    %c0_i32_1 = arith.constant 0 : i32
    return %arg0, %c0_i32, %c0_i32_0 : i32, i32, i32
  }
  func.func @transform_4(%arg0: i32) -> (i32, i32, i32) {
    %c0_i32 = arith.constant 0 : i32
    %c0_i32_0 = arith.constant 0 : i32
    %c0_i32_1 = arith.constant 0 : i32
    return %arg0, %c0_i32, %c0_i32_0 : i32, i32, i32
  }
  func.func @transform_5(%arg0: i32) -> (i32, i32, i32) {
    %c0_i32 = arith.constant 0 : i32
    %c0_i32_0 = arith.constant 0 : i32
    %c0_i32_1 = arith.constant 0 : i32
    return %arg0, %c0_i32, %c0_i32_0 : i32, i32, i32
  }
  func.func @transform_6(%arg0: i32) -> (i32, i32, i32) {
    %c0_i32 = arith.constant 0 : i32
    %c0_i32_0 = arith.constant 0 : i32
    %c0_i32_1 = arith.constant 0 : i32
    return %arg0, %c0_i32, %c0_i32_0 : i32, i32, i32
  }
  func.func @transform_7(%arg0: i32) -> (i32, i32, i32) {
    %c0_i32 = arith.constant 0 : i32
    %c0_i32_0 = arith.constant 0 : i32
    %c0_i32_1 = arith.constant 0 : i32
    return %arg0, %c0_i32, %c0_i32_0 : i32, i32, i32
  }
  func.func @transform_8(%arg0: i32) -> (i32, i32, i32) {
    %c0_i32 = arith.constant 0 : i32
    %c0_i32_0 = arith.constant 0 : i32
    %c0_i32_1 = arith.constant 0 : i32
    return %arg0, %c0_i32, %c0_i32_0 : i32, i32, i32
  }
  func.func @transform_9(%arg0: i32) -> (i32, i32, i32) {
    %c0_i32 = arith.constant 0 : i32
    %c0_i32_0 = arith.constant 0 : i32
    %c0_i32_1 = arith.constant 0 : i32
    return %arg0, %c0_i32, %c0_i32_0 : i32, i32, i32
  }
  func.func @transform_10(%arg0: i32) -> (i32, i32, i32, i32) {
    %c0_i32 = arith.constant 0 : i32
    %c0_i32_0 = arith.constant 0 : i32
    %c0_i32_1 = arith.constant 0 : i32
    %c0_i32_2 = arith.constant 0 : i32
    return %arg0, %c0_i32, %c0_i32_0, %c0_i32_1 : i32, i32, i32, i32
  }
  func.func @transform_11(%arg0: i32) -> (i32, i32, i32, i32) {
    %c0_i32 = arith.constant 0 : i32
    %c0_i32_0 = arith.constant 0 : i32
    %c0_i32_1 = arith.constant 0 : i32
    %c0_i32_2 = arith.constant 0 : i32
    return %arg0, %c0_i32, %c0_i32_0, %c0_i32_1 : i32, i32, i32, i32
  }
}

module attributes {stable_mosaic.version = 11 : i64} {
  func.func @dec_kernel(%arg0: i32, %arg1: memref<1x6x8x16xf32, #tpu.memory_space<vmem>>, %arg2: memref<1x16x96xf32, #tpu.memory_space<vmem>>, %arg3: memref<1x32x96xf32, #tpu.memory_space<vmem>>, %arg4: memref<1x32x96xf32, #tpu.memory_space<vmem>>, %arg5: memref<1x32x96xf32, #tpu.memory_space<vmem>>, %arg6: memref<1x2x96xf32, #tpu.memory_space<vmem>>, %arg7: memref<1x2x32xf32, #tpu.memory_space<vmem>>, %arg8: memref<1x32x8xf32, #tpu.memory_space<vmem>>, %arg9: memref<1x1x8xf32, #tpu.memory_space<vmem>>, %arg10: memref<1x6x8x8xf32, #tpu.memory_space<vmem>>, %arg11: memref<48x96xf32, #tpu.memory_space<vmem>>, %arg12: memref<48x32xf32, #tpu.memory_space<vmem>>) attributes {dimension_semantics = [#tpu.dimension_semantics<parallel>], iteration_bounds = array<i64: 4>, scalar_prefetch = 0 : i64, scratch_operands = 2 : i64, tpu.core_type = #tpu.core_type<tc>, window_params = [{transform_indices = @transform_0, window_bounds = array<i64: 1, 6, 8, 16>}, {transform_indices = @transform_1, window_bounds = array<i64: 1, 16, 96>}, {transform_indices = @transform_2, window_bounds = array<i64: 1, 32, 96>}, {transform_indices = @transform_3, window_bounds = array<i64: 1, 32, 96>}, {transform_indices = @transform_4, window_bounds = array<i64: 1, 32, 96>}, {transform_indices = @transform_5, window_bounds = array<i64: 1, 2, 96>}, {transform_indices = @transform_6, window_bounds = array<i64: 1, 2, 32>}, {transform_indices = @transform_7, window_bounds = array<i64: 1, 32, 8>}, {transform_indices = @transform_8, window_bounds = array<i64: 1, 1, 8>}, {transform_indices = @transform_9, window_bounds = array<i64: 1, 6, 8, 8>}]} {
    %c0 = arith.constant 0 : index
    %c0_0 = arith.constant 0 : index
    %c0_1 = arith.constant 0 : index
    %c0_2 = arith.constant 0 : index
    %0 = vector.load %arg1[%c0, %c0_0, %c0_1, %c0_2] : memref<1x6x8x16xf32, #tpu.memory_space<vmem>>, vector<1x6x8x16xf32>
    %1 = vector.shape_cast %0 : vector<1x6x8x16xf32> to vector<6x8x16xf32>
    %c0_3 = arith.constant 0 : index
    %c0_4 = arith.constant 0 : index
    %c0_5 = arith.constant 0 : index
    %2 = vector.load %arg2[%c0_3, %c0_4, %c0_5] : memref<1x16x96xf32, #tpu.memory_space<vmem>>, vector<1x16x96xf32>
    %3 = vector.shape_cast %2 : vector<1x16x96xf32> to vector<16x96xf32>
    %c0_6 = arith.constant 0 : index
    %c0_7 = arith.constant 0 : index
    %c0_8 = arith.constant 0 : index
    %4 = vector.load %arg3[%c0_6, %c0_7, %c0_8] : memref<1x32x96xf32, #tpu.memory_space<vmem>>, vector<1x32x96xf32>
    %5 = vector.shape_cast %4 : vector<1x32x96xf32> to vector<32x96xf32>
    %c0_9 = arith.constant 0 : index
    %c0_10 = arith.constant 0 : index
    %c0_11 = arith.constant 0 : index
    %6 = vector.load %arg4[%c0_9, %c0_10, %c0_11] : memref<1x32x96xf32, #tpu.memory_space<vmem>>, vector<1x32x96xf32>
    %7 = vector.shape_cast %6 : vector<1x32x96xf32> to vector<32x96xf32>
    %c0_12 = arith.constant 0 : index
    %c0_13 = arith.constant 0 : index
    %c0_14 = arith.constant 0 : index
    %8 = vector.load %arg5[%c0_12, %c0_13, %c0_14] : memref<1x32x96xf32, #tpu.memory_space<vmem>>, vector<1x32x96xf32>
    %9 = vector.shape_cast %8 : vector<1x32x96xf32> to vector<32x96xf32>
    %c0_15 = arith.constant 0 : index
    %c0_16 = arith.constant 0 : index
    %c0_17 = arith.constant 0 : index
    %10 = vector.load %arg6[%c0_15, %c0_16, %c0_17] : memref<1x2x96xf32, #tpu.memory_space<vmem>>, vector<1x2x96xf32>
    %11 = vector.shape_cast %10 : vector<1x2x96xf32> to vector<2x96xf32>
    %c0_18 = arith.constant 0 : index
    %c0_19 = arith.constant 0 : index
    %c0_20 = arith.constant 0 : index
    %12 = vector.load %arg7[%c0_18, %c0_19, %c0_20] : memref<1x2x32xf32, #tpu.memory_space<vmem>>, vector<1x2x32xf32>
    %13 = vector.shape_cast %12 : vector<1x2x32xf32> to vector<2x32xf32>
    %14 = vector.shape_cast %1 : vector<6x8x16xf32> to vector<48x16xf32>
    %15 = arith.truncf %14 : vector<48x16xf32> to vector<48x16xbf16>
    %16 = arith.truncf %3 : vector<16x96xf32> to vector<16x96xbf16>
    %cst = arith.constant dense<0.000000e+00> : vector<48x96xf32>
    %17 = tpu.matmul %15, %16, %cst {dimension_numbers = #tpu.dot_dimension_numbers<[1], [0], [0], [1], [0, 0, 1, 1], [], []>} : vector<48x16xbf16>, vector<16x96xbf16>, vector<48x96xf32> -> vector<48x96xf32>
    %18 = vector.extract_strided_slice %11 {offsets = [0, 0], sizes = [1, 96], strides = [1, 1]} : vector<2x96xf32> to vector<1x96xf32>
    %19 = vector.broadcast %18 : vector<1x96xf32> to vector<48x96xf32>
    %20 = arith.addf %17, %19 : vector<48x96xf32>
    %c0_21 = arith.constant 0 : index
    %c0_22 = arith.constant 0 : index
    %21 = vector.load %arg11[%c0_21, %c0_22] : memref<48x96xf32, #tpu.memory_space<vmem>>, vector<48x96xf32>
    tpu.vector_store %arg11[%c0_21, %c0_22], %20 {strides = array<i32>} : memref<48x96xf32, #tpu.memory_space<vmem>>, vector<48x96xf32>,
    %22 = arith.truncf %5 : vector<32x96xf32> to vector<32x96xbf16>
    %23 = arith.truncf %7 : vector<32x96xf32> to vector<32x96xbf16>
    %24 = arith.truncf %9 : vector<32x96xf32> to vector<32x96xbf16>
    %25 = vector.extract_strided_slice %11 {offsets = [1, 0], sizes = [1, 96], strides = [1, 1]} : vector<2x96xf32> to vector<1x96xf32>
    %26 = vector.extract_strided_slice %13 {offsets = [0, 0], sizes = [1, 32], strides = [1, 1]} : vector<2x32xf32> to vector<1x32xf32>
    %27 = vector.extract_strided_slice %13 {offsets = [1, 0], sizes = [1, 32], strides = [1, 1]} : vector<2x32xf32> to vector<1x32xf32>
    %cst_23 = arith.constant 0.000000e+00 : f32
    %28 = vector.broadcast %cst_23 : f32 to vector<8x32xf32>
    %cst_24 = arith.constant 0.000000e+00 : f32
    %29 = vector.broadcast %cst_24 : f32 to vector<8x32xf32>
    %c0_i32 = arith.constant 0 : i32
    %c8_i32 = arith.constant 8 : i32
    %30 = arith.muli %c0_i32, %c8_i32 : i32
    %31 = tpu.assume_multiple %30, 8 : i32
    %32 = arith.index_cast %31 : i32 to index
    %c0_25 = arith.constant 0 : index
    %33 = vector.load %arg11[%32, %c0_25] : memref<48x96xf32, #tpu.memory_space<vmem>>, vector<8x96xf32>
    %34 = arith.truncf %28 : vector<8x32xf32> to vector<8x32xbf16>
    %cst_26 = arith.constant dense<0.000000e+00> : vector<8x96xf32>
    %35 = tpu.matmul %34, %22, %cst_26 {dimension_numbers = #tpu.dot_dimension_numbers<[1], [0], [0], [1], [0, 0, 1, 1], [], []>} : vector<8x32xbf16>, vector<32x96xbf16>, vector<8x96xf32> -> vector<8x96xf32>
    %36 = vector.extract_strided_slice %33 {offsets = [0, 0], sizes = [8, 32], strides = [1, 1]} : vector<8x96xf32> to vector<8x32xf32>
    %37 = vector.extract_strided_slice %35 {offsets = [0, 0], sizes = [8, 32], strides = [1, 1]} : vector<8x96xf32> to vector<8x32xf32>
    %38 = arith.addf %36, %37 : vector<8x32xf32>
    %39 = arith.negf %38 : vector<8x32xf32>
    %40 = math.exp %39 : vector<8x32xf32>
    %cst_27 = arith.constant 1.000000e+00 : f32
    %41 = vector.broadcast %cst_27 : f32 to vector<8x32xf32>
    %42 = arith.addf %41, %40 : vector<8x32xf32>
    %43 = arith.divf %41, %42 : vector<8x32xf32>
    %44 = vector.extract_strided_slice %33 {offsets = [0, 32], sizes = [8, 32], strides = [1, 1]} : vector<8x96xf32> to vector<8x32xf32>
    %45 = vector.extract_strided_slice %35 {offsets = [0, 32], sizes = [8, 32], strides = [1, 1]} : vector<8x96xf32> to vector<8x32xf32>
    %46 = arith.addf %44, %45 : vector<8x32xf32>
    %47 = arith.negf %46 : vector<8x32xf32>
    %48 = math.exp %47 : vector<8x32xf32>
    %cst_28 = arith.constant 1.000000e+00 : f32
    %49 = vector.broadcast %cst_28 : f32 to vector<8x32xf32>
    %50 = arith.addf %49, %48 : vector<8x32xf32>
    %51 = arith.divf %49, %50 : vector<8x32xf32>
    %52 = vector.extract_strided_slice %33 {offsets = [0, 64], sizes = [8, 32], strides = [1, 1]} : vector<8x96xf32> to vector<8x32xf32>
    %53 = vector.extract_strided_slice %35 {offsets = [0, 64], sizes = [8, 32], strides = [1, 1]} : vector<8x96xf32> to vector<8x32xf32>
    %54 = vector.broadcast %26 : vector<1x32xf32> to vector<8x32xf32>
    %55 = arith.addf %53, %54 : vector<8x32xf32>
    %56 = arith.mulf %43, %55 : vector<8x32xf32>
    %57 = arith.addf %52, %56 : vector<8x32xf32>
    %58 = math.tanh %57 : vector<8x32xf32>
    %cst_29 = arith.constant 1.000000e+00 : f32
    %59 = vector.broadcast %cst_29 : f32 to vector<8x32xf32>
    %60 = arith.subf %59, %51 : vector<8x32xf32>
    %61 = arith.mulf %60, %58 : vector<8x32xf32>
    %62 = arith.mulf %51, %28 : vector<8x32xf32>
    %63 = arith.addf %61, %62 : vector<8x32xf32>
    %64 = arith.truncf %63 : vector<8x32xf32> to vector<8x32xbf16>
    %cst_30 = arith.constant dense<0.000000e+00> : vector<8x96xf32>
    %65 = tpu.matmul %64, %23, %cst_30 {dimension_numbers = #tpu.dot_dimension_numbers<[1], [0], [0], [1], [0, 0, 1, 1], [], []>} : vector<8x32xbf16>, vector<32x96xbf16>, vector<8x96xf32> -> vector<8x96xf32>
    %66 = vector.broadcast %25 : vector<1x96xf32> to vector<8x96xf32>
    %67 = arith.addf %65, %66 : vector<8x96xf32>
    %68 = arith.truncf %29 : vector<8x32xf32> to vector<8x32xbf16>
    %cst_31 = arith.constant dense<0.000000e+00> : vector<8x96xf32>
    %69 = tpu.matmul %68, %24, %cst_31 {dimension_numbers = #tpu.dot_dimension_numbers<[1], [0], [0], [1], [0, 0, 1, 1], [], []>} : vector<8x32xbf16>, vector<32x96xbf16>, vector<8x96xf32> -> vector<8x96xf32>
    %70 = vector.extract_strided_slice %67 {offsets = [0, 0], sizes = [8, 32], strides = [1, 1]} : vector<8x96xf32> to vector<8x32xf32>
    %71 = vector.extract_strided_slice %69 {offsets = [0, 0], sizes = [8, 32], strides = [1, 1]} : vector<8x96xf32> to vector<8x32xf32>
    %72 = arith.addf %70, %71 : vector<8x32xf32>
    %73 = arith.negf %72 : vector<8x32xf32>
    %74 = math.exp %73 : vector<8x32xf32>
    %cst_32 = arith.constant 1.000000e+00 : f32
    %75 = vector.broadcast %cst_32 : f32 to vector<8x32xf32>
    %76 = arith.addf %75, %74 : vector<8x32xf32>
    %77 = arith.divf %75, %76 : vector<8x32xf32>
    %78 = vector.extract_strided_slice %67 {offsets = [0, 32], sizes = [8, 32], strides = [1, 1]} : vector<8x96xf32> to vector<8x32xf32>
    %79 = vector.extract_strided_slice %69 {offsets = [0, 32], sizes = [8, 32], strides = [1, 1]} : vector<8x96xf32> to vector<8x32xf32>
    %80 = arith.addf %78, %79 : vector<8x32xf32>
    %81 = arith.negf %80 : vector<8x32xf32>
    %82 = math.exp %81 : vector<8x32xf32>
    %cst_33 = arith.constant 1.000000e+00 : f32
    %83 = vector.broadcast %cst_33 : f32 to vector<8x32xf32>
    %84 = arith.addf %83, %82 : vector<8x32xf32>
    %85 = arith.divf %83, %84 : vector<8x32xf32>
    %86 = vector.extract_strided_slice %67 {offsets = [0, 64], sizes = [8, 32], strides = [1, 1]} : vector<8x96xf32> to vector<8x32xf32>
    %87 = vector.extract_strided_slice %69 {offsets = [0, 64], sizes = [8, 32], strides = [1, 1]} : vector<8x96xf32> to vector<8x32xf32>
    %88 = vector.broadcast %27 : vector<1x32xf32> to vector<8x32xf32>
    %89 = arith.addf %87, %88 : vector<8x32xf32>
    %90 = arith.mulf %77, %89 : vector<8x32xf32>
    %91 = arith.addf %86, %90 : vector<8x32xf32>
    %92 = math.tanh %91 : vector<8x32xf32>
    %cst_34 = arith.constant 1.000000e+00 : f32
    %93 = vector.broadcast %cst_34 : f32 to vector<8x32xf32>
    %94 = arith.subf %93, %85 : vector<8x32xf32>
    %95 = arith.mulf %94, %92 : vector<8x32xf32>
    %96 = arith.mulf %85, %29 : vector<8x32xf32>
    %97 = arith.addf %95, %96 : vector<8x32xf32>
    %98 = arith.index_cast %31 : i32 to index
    %c0_35 = arith.constant 0 : index
    %99 = vector.load %arg12[%98, %c0_35] : memref<48x32xf32, #tpu.memory_space<vmem>>, vector<8x32xf32>
    tpu.vector_store %arg12[%98, %c0_35], %97 {strides = array<i32>} : memref<48x32xf32, #tpu.memory_space<vmem>>, vector<8x32xf32>,
    %c1_i32 = arith.constant 1 : i32
    %c8_i32_36 = arith.constant 8 : i32
    %100 = arith.muli %c1_i32, %c8_i32_36 : i32
    %101 = tpu.assume_multiple %100, 8 : i32
    %102 = arith.index_cast %101 : i32 to index
    %c0_37 = arith.constant 0 : index
    %103 = vector.load %arg11[%102, %c0_37] : memref<48x96xf32, #tpu.memory_space<vmem>>, vector<8x96xf32>
    %104 = arith.truncf %63 : vector<8x32xf32> to vector<8x32xbf16>
    %cst_38 = arith.constant dense<0.000000e+00> : vector<8x96xf32>
    %105 = tpu.matmul %104, %22, %cst_38 {dimension_numbers = #tpu.dot_dimension_numbers<[1], [0], [0], [1], [0, 0, 1, 1], [], []>} : vector<8x32xbf16>, vector<32x96xbf16>, vector<8x96xf32> -> vector<8x96xf32>
    %106 = vector.extract_strided_slice %103 {offsets = [0, 0], sizes = [8, 32], strides = [1, 1]} : vector<8x96xf32> to vector<8x32xf32>
    %107 = vector.extract_strided_slice %105 {offsets = [0, 0], sizes = [8, 32], strides = [1, 1]} : vector<8x96xf32> to vector<8x32xf32>
    %108 = arith.addf %106, %107 : vector<8x32xf32>
    %109 = arith.negf %108 : vector<8x32xf32>
    %110 = math.exp %109 : vector<8x32xf32>
    %cst_39 = arith.constant 1.000000e+00 : f32
    %111 = vector.broadcast %cst_39 : f32 to vector<8x32xf32>
    %112 = arith.addf %111, %110 : vector<8x32xf32>
    %113 = arith.divf %111, %112 : vector<8x32xf32>
    %114 = vector.extract_strided_slice %103 {offsets = [0, 32], sizes = [8, 32], strides = [1, 1]} : vector<8x96xf32> to vector<8x32xf32>
    %115 = vector.extract_strided_slice %105 {offsets = [0, 32], sizes = [8, 32], strides = [1, 1]} : vector<8x96xf32> to vector<8x32xf32>
    %116 = arith.addf %114, %115 : vector<8x32xf32>
    %117 = arith.negf %116 : vector<8x32xf32>
    %118 = math.exp %117 : vector<8x32xf32>
    %cst_40 = arith.constant 1.000000e+00 : f32
    %119 = vector.broadcast %cst_40 : f32 to vector<8x32xf32>
    %120 = arith.addf %119, %118 : vector<8x32xf32>
    %121 = arith.divf %119, %120 : vector<8x32xf32>
    %122 = vector.extract_strided_slice %103 {offsets = [0, 64], sizes = [8, 32], strides = [1, 1]} : vector<8x96xf32> to vector<8x32xf32>
    %123 = vector.extract_strided_slice %105 {offsets = [0, 64], sizes = [8, 32], strides = [1, 1]} : vector<8x96xf32> to vector<8x32xf32>
    %124 = vector.broadcast %26 : vector<1x32xf32> to vector<8x32xf32>
    %125 = arith.addf %123, %124 : vector<8x32xf32>
    %126 = arith.mulf %113, %125 : vector<8x32xf32>
    %127 = arith.addf %122, %126 : vector<8x32xf32>
    %128 = math.tanh %127 : vector<8x32xf32>
    %cst_41 = arith.constant 1.000000e+00 : f32
    %129 = vector.broadcast %cst_41 : f32 to vector<8x32xf32>
    %130 = arith.subf %129, %121 : vector<8x32xf32>
    %131 = arith.mulf %130, %128 : vector<8x32xf32>
    %132 = arith.mulf %121, %63 : vector<8x32xf32>
    %133 = arith.addf %131, %132 : vector<8x32xf32>
    %134 = arith.truncf %133 : vector<8x32xf32> to vector<8x32xbf16>
    %cst_42 = arith.constant dense<0.000000e+00> : vector<8x96xf32>
    %135 = tpu.matmul %134, %23, %cst_42 {dimension_numbers = #tpu.dot_dimension_numbers<[1], [0], [0], [1], [0, 0, 1, 1], [], []>} : vector<8x32xbf16>, vector<32x96xbf16>, vector<8x96xf32> -> vector<8x96xf32>
    %136 = vector.broadcast %25 : vector<1x96xf32> to vector<8x96xf32>
    %137 = arith.addf %135, %136 : vector<8x96xf32>
    %138 = arith.truncf %97 : vector<8x32xf32> to vector<8x32xbf16>
    %cst_43 = arith.constant dense<0.000000e+00> : vector<8x96xf32>
    %139 = tpu.matmul %138, %24, %cst_43 {dimension_numbers = #tpu.dot_dimension_numbers<[1], [0], [0], [1], [0, 0, 1, 1], [], []>} : vector<8x32xbf16>, vector<32x96xbf16>, vector<8x96xf32> -> vector<8x96xf32>
    %140 = vector.extract_strided_slice %137 {offsets = [0, 0], sizes = [8, 32], strides = [1, 1]} : vector<8x96xf32> to vector<8x32xf32>
    %141 = vector.extract_strided_slice %139 {offsets = [0, 0], sizes = [8, 32], strides = [1, 1]} : vector<8x96xf32> to vector<8x32xf32>
    %142 = arith.addf %140, %141 : vector<8x32xf32>
    %143 = arith.negf %142 : vector<8x32xf32>
    %144 = math.exp %143 : vector<8x32xf32>
    %cst_44 = arith.constant 1.000000e+00 : f32
    %145 = vector.broadcast %cst_44 : f32 to vector<8x32xf32>
    %146 = arith.addf %145, %144 : vector<8x32xf32>
    %147 = arith.divf %145, %146 : vector<8x32xf32>
    %148 = vector.extract_strided_slice %137 {offsets = [0, 32], sizes = [8, 32], strides = [1, 1]} : vector<8x96xf32> to vector<8x32xf32>
    %149 = vector.extract_strided_slice %139 {offsets = [0, 32], sizes = [8, 32], strides = [1, 1]} : vector<8x96xf32> to vector<8x32xf32>
    %150 = arith.addf %148, %149 : vector<8x32xf32>
    %151 = arith.negf %150 : vector<8x32xf32>
    %152 = math.exp %151 : vector<8x32xf32>
    %cst_45 = arith.constant 1.000000e+00 : f32
    %153 = vector.broadcast %cst_45 : f32 to vector<8x32xf32>
    %154 = arith.addf %153, %152 : vector<8x32xf32>
    %155 = arith.divf %153, %154 : vector<8x32xf32>
    %156 = vector.extract_strided_slice %137 {offsets = [0, 64], sizes = [8, 32], strides = [1, 1]} : vector<8x96xf32> to vector<8x32xf32>
    %157 = vector.extract_strided_slice %139 {offsets = [0, 64], sizes = [8, 32], strides = [1, 1]} : vector<8x96xf32> to vector<8x32xf32>
    %158 = vector.broadcast %27 : vector<1x32xf32> to vector<8x32xf32>
    %159 = arith.addf %157, %158 : vector<8x32xf32>
    %160 = arith.mulf %147, %159 : vector<8x32xf32>
    %161 = arith.addf %156, %160 : vector<8x32xf32>
    %162 = math.tanh %161 : vector<8x32xf32>
    %cst_46 = arith.constant 1.000000e+00 : f32
    %163 = vector.broadcast %cst_46 : f32 to vector<8x32xf32>
    %164 = arith.subf %163, %155 : vector<8x32xf32>
    %165 = arith.mulf %164, %162 : vector<8x32xf32>
    %166 = arith.mulf %155, %97 : vector<8x32xf32>
    %167 = arith.addf %165, %166 : vector<8x32xf32>
    %168 = arith.index_cast %101 : i32 to index
    %c0_47 = arith.constant 0 : index
    %169 = vector.load %arg12[%168, %c0_47] : memref<48x32xf32, #tpu.memory_space<vmem>>, vector<8x32xf32>
    tpu.vector_store %arg12[%168, %c0_47], %167 {strides = array<i32>} : memref<48x32xf32, #tpu.memory_space<vmem>>, vector<8x32xf32>,
    %c2_i32 = arith.constant 2 : i32
    %c8_i32_48 = arith.constant 8 : i32
    %170 = arith.muli %c2_i32, %c8_i32_48 : i32
    %171 = tpu.assume_multiple %170, 8 : i32
    %172 = arith.index_cast %171 : i32 to index
    %c0_49 = arith.constant 0 : index
    %173 = vector.load %arg11[%172, %c0_49] : memref<48x96xf32, #tpu.memory_space<vmem>>, vector<8x96xf32>
    %174 = arith.truncf %133 : vector<8x32xf32> to vector<8x32xbf16>
    %cst_50 = arith.constant dense<0.000000e+00> : vector<8x96xf32>
    %175 = tpu.matmul %174, %22, %cst_50 {dimension_numbers = #tpu.dot_dimension_numbers<[1], [0], [0], [1], [0, 0, 1, 1], [], []>} : vector<8x32xbf16>, vector<32x96xbf16>, vector<8x96xf32> -> vector<8x96xf32>
    %176 = vector.extract_strided_slice %173 {offsets = [0, 0], sizes = [8, 32], strides = [1, 1]} : vector<8x96xf32> to vector<8x32xf32>
    %177 = vector.extract_strided_slice %175 {offsets = [0, 0], sizes = [8, 32], strides = [1, 1]} : vector<8x96xf32> to vector<8x32xf32>
    %178 = arith.addf %176, %177 : vector<8x32xf32>
    %179 = arith.negf %178 : vector<8x32xf32>
    %180 = math.exp %179 : vector<8x32xf32>
    %cst_51 = arith.constant 1.000000e+00 : f32
    %181 = vector.broadcast %cst_51 : f32 to vector<8x32xf32>
    %182 = arith.addf %181, %180 : vector<8x32xf32>
    %183 = arith.divf %181, %182 : vector<8x32xf32>
    %184 = vector.extract_strided_slice %173 {offsets = [0, 32], sizes = [8, 32], strides = [1, 1]} : vector<8x96xf32> to vector<8x32xf32>
    %185 = vector.extract_strided_slice %175 {offsets = [0, 32], sizes = [8, 32], strides = [1, 1]} : vector<8x96xf32> to vector<8x32xf32>
    %186 = arith.addf %184, %185 : vector<8x32xf32>
    %187 = arith.negf %186 : vector<8x32xf32>
    %188 = math.exp %187 : vector<8x32xf32>
    %cst_52 = arith.constant 1.000000e+00 : f32
    %189 = vector.broadcast %cst_52 : f32 to vector<8x32xf32>
    %190 = arith.addf %189, %188 : vector<8x32xf32>
    %191 = arith.divf %189, %190 : vector<8x32xf32>
    %192 = vector.extract_strided_slice %173 {offsets = [0, 64], sizes = [8, 32], strides = [1, 1]} : vector<8x96xf32> to vector<8x32xf32>
    %193 = vector.extract_strided_slice %175 {offsets = [0, 64], sizes = [8, 32], strides = [1, 1]} : vector<8x96xf32> to vector<8x32xf32>
    %194 = vector.broadcast %26 : vector<1x32xf32> to vector<8x32xf32>
    %195 = arith.addf %193, %194 : vector<8x32xf32>
    %196 = arith.mulf %183, %195 : vector<8x32xf32>
    %197 = arith.addf %192, %196 : vector<8x32xf32>
    %198 = math.tanh %197 : vector<8x32xf32>
    %cst_53 = arith.constant 1.000000e+00 : f32
    %199 = vector.broadcast %cst_53 : f32 to vector<8x32xf32>
    %200 = arith.subf %199, %191 : vector<8x32xf32>
    %201 = arith.mulf %200, %198 : vector<8x32xf32>
    %202 = arith.mulf %191, %133 : vector<8x32xf32>
    %203 = arith.addf %201, %202 : vector<8x32xf32>
    %204 = arith.truncf %203 : vector<8x32xf32> to vector<8x32xbf16>
    %cst_54 = arith.constant dense<0.000000e+00> : vector<8x96xf32>
    %205 = tpu.matmul %204, %23, %cst_54 {dimension_numbers = #tpu.dot_dimension_numbers<[1], [0], [0], [1], [0, 0, 1, 1], [], []>} : vector<8x32xbf16>, vector<32x96xbf16>, vector<8x96xf32> -> vector<8x96xf32>
    %206 = vector.broadcast %25 : vector<1x96xf32> to vector<8x96xf32>
    %207 = arith.addf %205, %206 : vector<8x96xf32>
    %208 = arith.truncf %167 : vector<8x32xf32> to vector<8x32xbf16>
    %cst_55 = arith.constant dense<0.000000e+00> : vector<8x96xf32>
    %209 = tpu.matmul %208, %24, %cst_55 {dimension_numbers = #tpu.dot_dimension_numbers<[1], [0], [0], [1], [0, 0, 1, 1], [], []>} : vector<8x32xbf16>, vector<32x96xbf16>, vector<8x96xf32> -> vector<8x96xf32>
    %210 = vector.extract_strided_slice %207 {offsets = [0, 0], sizes = [8, 32], strides = [1, 1]} : vector<8x96xf32> to vector<8x32xf32>
    %211 = vector.extract_strided_slice %209 {offsets = [0, 0], sizes = [8, 32], strides = [1, 1]} : vector<8x96xf32> to vector<8x32xf32>
    %212 = arith.addf %210, %211 : vector<8x32xf32>
    %213 = arith.negf %212 : vector<8x32xf32>
    %214 = math.exp %213 : vector<8x32xf32>
    %cst_56 = arith.constant 1.000000e+00 : f32
    %215 = vector.broadcast %cst_56 : f32 to vector<8x32xf32>
    %216 = arith.addf %215, %214 : vector<8x32xf32>
    %217 = arith.divf %215, %216 : vector<8x32xf32>
    %218 = vector.extract_strided_slice %207 {offsets = [0, 32], sizes = [8, 32], strides = [1, 1]} : vector<8x96xf32> to vector<8x32xf32>
    %219 = vector.extract_strided_slice %209 {offsets = [0, 32], sizes = [8, 32], strides = [1, 1]} : vector<8x96xf32> to vector<8x32xf32>
    %220 = arith.addf %218, %219 : vector<8x32xf32>
    %221 = arith.negf %220 : vector<8x32xf32>
    %222 = math.exp %221 : vector<8x32xf32>
    %cst_57 = arith.constant 1.000000e+00 : f32
    %223 = vector.broadcast %cst_57 : f32 to vector<8x32xf32>
    %224 = arith.addf %223, %222 : vector<8x32xf32>
    %225 = arith.divf %223, %224 : vector<8x32xf32>
    %226 = vector.extract_strided_slice %207 {offsets = [0, 64], sizes = [8, 32], strides = [1, 1]} : vector<8x96xf32> to vector<8x32xf32>
    %227 = vector.extract_strided_slice %209 {offsets = [0, 64], sizes = [8, 32], strides = [1, 1]} : vector<8x96xf32> to vector<8x32xf32>
    %228 = vector.broadcast %27 : vector<1x32xf32> to vector<8x32xf32>
    %229 = arith.addf %227, %228 : vector<8x32xf32>
    %230 = arith.mulf %217, %229 : vector<8x32xf32>
    %231 = arith.addf %226, %230 : vector<8x32xf32>
    %232 = math.tanh %231 : vector<8x32xf32>
    %cst_58 = arith.constant 1.000000e+00 : f32
    %233 = vector.broadcast %cst_58 : f32 to vector<8x32xf32>
    %234 = arith.subf %233, %225 : vector<8x32xf32>
    %235 = arith.mulf %234, %232 : vector<8x32xf32>
    %236 = arith.mulf %225, %167 : vector<8x32xf32>
    %237 = arith.addf %235, %236 : vector<8x32xf32>
    %238 = arith.index_cast %171 : i32 to index
    %c0_59 = arith.constant 0 : index
    %239 = vector.load %arg12[%238, %c0_59] : memref<48x32xf32, #tpu.memory_space<vmem>>, vector<8x32xf32>
    tpu.vector_store %arg12[%238, %c0_59], %237 {strides = array<i32>} : memref<48x32xf32, #tpu.memory_space<vmem>>, vector<8x32xf32>,
    %c3_i32 = arith.constant 3 : i32
    %c8_i32_60 = arith.constant 8 : i32
    %240 = arith.muli %c3_i32, %c8_i32_60 : i32
    %241 = tpu.assume_multiple %240, 8 : i32
    %242 = arith.index_cast %241 : i32 to index
    %c0_61 = arith.constant 0 : index
    %243 = vector.load %arg11[%242, %c0_61] : memref<48x96xf32, #tpu.memory_space<vmem>>, vector<8x96xf32>
    %244 = arith.truncf %203 : vector<8x32xf32> to vector<8x32xbf16>
    %cst_62 = arith.constant dense<0.000000e+00> : vector<8x96xf32>
    %245 = tpu.matmul %244, %22, %cst_62 {dimension_numbers = #tpu.dot_dimension_numbers<[1], [0], [0], [1], [0, 0, 1, 1], [], []>} : vector<8x32xbf16>, vector<32x96xbf16>, vector<8x96xf32> -> vector<8x96xf32>
    %246 = vector.extract_strided_slice %243 {offsets = [0, 0], sizes = [8, 32], strides = [1, 1]} : vector<8x96xf32> to vector<8x32xf32>
    %247 = vector.extract_strided_slice %245 {offsets = [0, 0], sizes = [8, 32], strides = [1, 1]} : vector<8x96xf32> to vector<8x32xf32>
    %248 = arith.addf %246, %247 : vector<8x32xf32>
    %249 = arith.negf %248 : vector<8x32xf32>
    %250 = math.exp %249 : vector<8x32xf32>
    %cst_63 = arith.constant 1.000000e+00 : f32
    %251 = vector.broadcast %cst_63 : f32 to vector<8x32xf32>
    %252 = arith.addf %251, %250 : vector<8x32xf32>
    %253 = arith.divf %251, %252 : vector<8x32xf32>
    %254 = vector.extract_strided_slice %243 {offsets = [0, 32], sizes = [8, 32], strides = [1, 1]} : vector<8x96xf32> to vector<8x32xf32>
    %255 = vector.extract_strided_slice %245 {offsets = [0, 32], sizes = [8, 32], strides = [1, 1]} : vector<8x96xf32> to vector<8x32xf32>
    %256 = arith.addf %254, %255 : vector<8x32xf32>
    %257 = arith.negf %256 : vector<8x32xf32>
    %258 = math.exp %257 : vector<8x32xf32>
    %cst_64 = arith.constant 1.000000e+00 : f32
    %259 = vector.broadcast %cst_64 : f32 to vector<8x32xf32>
    %260 = arith.addf %259, %258 : vector<8x32xf32>
    %261 = arith.divf %259, %260 : vector<8x32xf32>
    %262 = vector.extract_strided_slice %243 {offsets = [0, 64], sizes = [8, 32], strides = [1, 1]} : vector<8x96xf32> to vector<8x32xf32>
    %263 = vector.extract_strided_slice %245 {offsets = [0, 64], sizes = [8, 32], strides = [1, 1]} : vector<8x96xf32> to vector<8x32xf32>
    %264 = vector.broadcast %26 : vector<1x32xf32> to vector<8x32xf32>
    %265 = arith.addf %263, %264 : vector<8x32xf32>
    %266 = arith.mulf %253, %265 : vector<8x32xf32>
    %267 = arith.addf %262, %266 : vector<8x32xf32>
    %268 = math.tanh %267 : vector<8x32xf32>
    %cst_65 = arith.constant 1.000000e+00 : f32
    %269 = vector.broadcast %cst_65 : f32 to vector<8x32xf32>
    %270 = arith.subf %269, %261 : vector<8x32xf32>
    %271 = arith.mulf %270, %268 : vector<8x32xf32>
    %272 = arith.mulf %261, %203 : vector<8x32xf32>
    %273 = arith.addf %271, %272 : vector<8x32xf32>
    %274 = arith.truncf %273 : vector<8x32xf32> to vector<8x32xbf16>
    %cst_66 = arith.constant dense<0.000000e+00> : vector<8x96xf32>
    %275 = tpu.matmul %274, %23, %cst_66 {dimension_numbers = #tpu.dot_dimension_numbers<[1], [0], [0], [1], [0, 0, 1, 1], [], []>} : vector<8x32xbf16>, vector<32x96xbf16>, vector<8x96xf32> -> vector<8x96xf32>
    %276 = vector.broadcast %25 : vector<1x96xf32> to vector<8x96xf32>
    %277 = arith.addf %275, %276 : vector<8x96xf32>
    %278 = arith.truncf %237 : vector<8x32xf32> to vector<8x32xbf16>
    %cst_67 = arith.constant dense<0.000000e+00> : vector<8x96xf32>
    %279 = tpu.matmul %278, %24, %cst_67 {dimension_numbers = #tpu.dot_dimension_numbers<[1], [0], [0], [1], [0, 0, 1, 1], [], []>} : vector<8x32xbf16>, vector<32x96xbf16>, vector<8x96xf32> -> vector<8x96xf32>
    %280 = vector.extract_strided_slice %277 {offsets = [0, 0], sizes = [8, 32], strides = [1, 1]} : vector<8x96xf32> to vector<8x32xf32>
    %281 = vector.extract_strided_slice %279 {offsets = [0, 0], sizes = [8, 32], strides = [1, 1]} : vector<8x96xf32> to vector<8x32xf32>
    %282 = arith.addf %280, %281 : vector<8x32xf32>
    %283 = arith.negf %282 : vector<8x32xf32>
    %284 = math.exp %283 : vector<8x32xf32>
    %cst_68 = arith.constant 1.000000e+00 : f32
    %285 = vector.broadcast %cst_68 : f32 to vector<8x32xf32>
    %286 = arith.addf %285, %284 : vector<8x32xf32>
    %287 = arith.divf %285, %286 : vector<8x32xf32>
    %288 = vector.extract_strided_slice %277 {offsets = [0, 32], sizes = [8, 32], strides = [1, 1]} : vector<8x96xf32> to vector<8x32xf32>
    %289 = vector.extract_strided_slice %279 {offsets = [0, 32], sizes = [8, 32], strides = [1, 1]} : vector<8x96xf32> to vector<8x32xf32>
    %290 = arith.addf %288, %289 : vector<8x32xf32>
    %291 = arith.negf %290 : vector<8x32xf32>
    %292 = math.exp %291 : vector<8x32xf32>
    %cst_69 = arith.constant 1.000000e+00 : f32
    %293 = vector.broadcast %cst_69 : f32 to vector<8x32xf32>
    %294 = arith.addf %293, %292 : vector<8x32xf32>
    %295 = arith.divf %293, %294 : vector<8x32xf32>
    %296 = vector.extract_strided_slice %277 {offsets = [0, 64], sizes = [8, 32], strides = [1, 1]} : vector<8x96xf32> to vector<8x32xf32>
    %297 = vector.extract_strided_slice %279 {offsets = [0, 64], sizes = [8, 32], strides = [1, 1]} : vector<8x96xf32> to vector<8x32xf32>
    %298 = vector.broadcast %27 : vector<1x32xf32> to vector<8x32xf32>
    %299 = arith.addf %297, %298 : vector<8x32xf32>
    %300 = arith.mulf %287, %299 : vector<8x32xf32>
    %301 = arith.addf %296, %300 : vector<8x32xf32>
    %302 = math.tanh %301 : vector<8x32xf32>
    %cst_70 = arith.constant 1.000000e+00 : f32
    %303 = vector.broadcast %cst_70 : f32 to vector<8x32xf32>
    %304 = arith.subf %303, %295 : vector<8x32xf32>
    %305 = arith.mulf %304, %302 : vector<8x32xf32>
    %306 = arith.mulf %295, %237 : vector<8x32xf32>
    %307 = arith.addf %305, %306 : vector<8x32xf32>
    %308 = arith.index_cast %241 : i32 to index
    %c0_71 = arith.constant 0 : index
    %309 = vector.load %arg12[%308, %c0_71] : memref<48x32xf32, #tpu.memory_space<vmem>>, vector<8x32xf32>
    tpu.vector_store %arg12[%308, %c0_71], %307 {strides = array<i32>} : memref<48x32xf32, #tpu.memory_space<vmem>>, vector<8x32xf32>,
    %c4_i32 = arith.constant 4 : i32
    %c8_i32_72 = arith.constant 8 : i32
    %310 = arith.muli %c4_i32, %c8_i32_72 : i32
    %311 = tpu.assume_multiple %310, 8 : i32
    %312 = arith.index_cast %311 : i32 to index
    %c0_73 = arith.constant 0 : index
    %313 = vector.load %arg11[%312, %c0_73] : memref<48x96xf32, #tpu.memory_space<vmem>>, vector<8x96xf32>
    %314 = arith.truncf %273 : vector<8x32xf32> to vector<8x32xbf16>
    %cst_74 = arith.constant dense<0.000000e+00> : vector<8x96xf32>
    %315 = tpu.matmul %314, %22, %cst_74 {dimension_numbers = #tpu.dot_dimension_numbers<[1], [0], [0], [1], [0, 0, 1, 1], [], []>} : vector<8x32xbf16>, vector<32x96xbf16>, vector<8x96xf32> -> vector<8x96xf32>
    %316 = vector.extract_strided_slice %313 {offsets = [0, 0], sizes = [8, 32], strides = [1, 1]} : vector<8x96xf32> to vector<8x32xf32>
    %317 = vector.extract_strided_slice %315 {offsets = [0, 0], sizes = [8, 32], strides = [1, 1]} : vector<8x96xf32> to vector<8x32xf32>
    %318 = arith.addf %316, %317 : vector<8x32xf32>
    %319 = arith.negf %318 : vector<8x32xf32>
    %320 = math.exp %319 : vector<8x32xf32>
    %cst_75 = arith.constant 1.000000e+00 : f32
    %321 = vector.broadcast %cst_75 : f32 to vector<8x32xf32>
    %322 = arith.addf %321, %320 : vector<8x32xf32>
    %323 = arith.divf %321, %322 : vector<8x32xf32>
    %324 = vector.extract_strided_slice %313 {offsets = [0, 32], sizes = [8, 32], strides = [1, 1]} : vector<8x96xf32> to vector<8x32xf32>
    %325 = vector.extract_strided_slice %315 {offsets = [0, 32], sizes = [8, 32], strides = [1, 1]} : vector<8x96xf32> to vector<8x32xf32>
    %326 = arith.addf %324, %325 : vector<8x32xf32>
    %327 = arith.negf %326 : vector<8x32xf32>
    %328 = math.exp %327 : vector<8x32xf32>
    %cst_76 = arith.constant 1.000000e+00 : f32
    %329 = vector.broadcast %cst_76 : f32 to vector<8x32xf32>
    %330 = arith.addf %329, %328 : vector<8x32xf32>
    %331 = arith.divf %329, %330 : vector<8x32xf32>
    %332 = vector.extract_strided_slice %313 {offsets = [0, 64], sizes = [8, 32], strides = [1, 1]} : vector<8x96xf32> to vector<8x32xf32>
    %333 = vector.extract_strided_slice %315 {offsets = [0, 64], sizes = [8, 32], strides = [1, 1]} : vector<8x96xf32> to vector<8x32xf32>
    %334 = vector.broadcast %26 : vector<1x32xf32> to vector<8x32xf32>
    %335 = arith.addf %333, %334 : vector<8x32xf32>
    %336 = arith.mulf %323, %335 : vector<8x32xf32>
    %337 = arith.addf %332, %336 : vector<8x32xf32>
    %338 = math.tanh %337 : vector<8x32xf32>
    %cst_77 = arith.constant 1.000000e+00 : f32
    %339 = vector.broadcast %cst_77 : f32 to vector<8x32xf32>
    %340 = arith.subf %339, %331 : vector<8x32xf32>
    %341 = arith.mulf %340, %338 : vector<8x32xf32>
    %342 = arith.mulf %331, %273 : vector<8x32xf32>
    %343 = arith.addf %341, %342 : vector<8x32xf32>
    %344 = arith.truncf %343 : vector<8x32xf32> to vector<8x32xbf16>
    %cst_78 = arith.constant dense<0.000000e+00> : vector<8x96xf32>
    %345 = tpu.matmul %344, %23, %cst_78 {dimension_numbers = #tpu.dot_dimension_numbers<[1], [0], [0], [1], [0, 0, 1, 1], [], []>} : vector<8x32xbf16>, vector<32x96xbf16>, vector<8x96xf32> -> vector<8x96xf32>
    %346 = vector.broadcast %25 : vector<1x96xf32> to vector<8x96xf32>
    %347 = arith.addf %345, %346 : vector<8x96xf32>
    %348 = arith.truncf %307 : vector<8x32xf32> to vector<8x32xbf16>
    %cst_79 = arith.constant dense<0.000000e+00> : vector<8x96xf32>
    %349 = tpu.matmul %348, %24, %cst_79 {dimension_numbers = #tpu.dot_dimension_numbers<[1], [0], [0], [1], [0, 0, 1, 1], [], []>} : vector<8x32xbf16>, vector<32x96xbf16>, vector<8x96xf32> -> vector<8x96xf32>
    %350 = vector.extract_strided_slice %347 {offsets = [0, 0], sizes = [8, 32], strides = [1, 1]} : vector<8x96xf32> to vector<8x32xf32>
    %351 = vector.extract_strided_slice %349 {offsets = [0, 0], sizes = [8, 32], strides = [1, 1]} : vector<8x96xf32> to vector<8x32xf32>
    %352 = arith.addf %350, %351 : vector<8x32xf32>
    %353 = arith.negf %352 : vector<8x32xf32>
    %354 = math.exp %353 : vector<8x32xf32>
    %cst_80 = arith.constant 1.000000e+00 : f32
    %355 = vector.broadcast %cst_80 : f32 to vector<8x32xf32>
    %356 = arith.addf %355, %354 : vector<8x32xf32>
    %357 = arith.divf %355, %356 : vector<8x32xf32>
    %358 = vector.extract_strided_slice %347 {offsets = [0, 32], sizes = [8, 32], strides = [1, 1]} : vector<8x96xf32> to vector<8x32xf32>
    %359 = vector.extract_strided_slice %349 {offsets = [0, 32], sizes = [8, 32], strides = [1, 1]} : vector<8x96xf32> to vector<8x32xf32>
    %360 = arith.addf %358, %359 : vector<8x32xf32>
    %361 = arith.negf %360 : vector<8x32xf32>
    %362 = math.exp %361 : vector<8x32xf32>
    %cst_81 = arith.constant 1.000000e+00 : f32
    %363 = vector.broadcast %cst_81 : f32 to vector<8x32xf32>
    %364 = arith.addf %363, %362 : vector<8x32xf32>
    %365 = arith.divf %363, %364 : vector<8x32xf32>
    %366 = vector.extract_strided_slice %347 {offsets = [0, 64], sizes = [8, 32], strides = [1, 1]} : vector<8x96xf32> to vector<8x32xf32>
    %367 = vector.extract_strided_slice %349 {offsets = [0, 64], sizes = [8, 32], strides = [1, 1]} : vector<8x96xf32> to vector<8x32xf32>
    %368 = vector.broadcast %27 : vector<1x32xf32> to vector<8x32xf32>
    %369 = arith.addf %367, %368 : vector<8x32xf32>
    %370 = arith.mulf %357, %369 : vector<8x32xf32>
    %371 = arith.addf %366, %370 : vector<8x32xf32>
    %372 = math.tanh %371 : vector<8x32xf32>
    %cst_82 = arith.constant 1.000000e+00 : f32
    %373 = vector.broadcast %cst_82 : f32 to vector<8x32xf32>
    %374 = arith.subf %373, %365 : vector<8x32xf32>
    %375 = arith.mulf %374, %372 : vector<8x32xf32>
    %376 = arith.mulf %365, %307 : vector<8x32xf32>
    %377 = arith.addf %375, %376 : vector<8x32xf32>
    %378 = arith.index_cast %311 : i32 to index
    %c0_83 = arith.constant 0 : index
    %379 = vector.load %arg12[%378, %c0_83] : memref<48x32xf32, #tpu.memory_space<vmem>>, vector<8x32xf32>
    tpu.vector_store %arg12[%378, %c0_83], %377 {strides = array<i32>} : memref<48x32xf32, #tpu.memory_space<vmem>>, vector<8x32xf32>,
    %c5_i32 = arith.constant 5 : i32
    %c8_i32_84 = arith.constant 8 : i32
    %380 = arith.muli %c5_i32, %c8_i32_84 : i32
    %381 = tpu.assume_multiple %380, 8 : i32
    %382 = arith.index_cast %381 : i32 to index
    %c0_85 = arith.constant 0 : index
    %383 = vector.load %arg11[%382, %c0_85] : memref<48x96xf32, #tpu.memory_space<vmem>>, vector<8x96xf32>
    %384 = arith.truncf %343 : vector<8x32xf32> to vector<8x32xbf16>
    %cst_86 = arith.constant dense<0.000000e+00> : vector<8x96xf32>
    %385 = tpu.matmul %384, %22, %cst_86 {dimension_numbers = #tpu.dot_dimension_numbers<[1], [0], [0], [1], [0, 0, 1, 1], [], []>} : vector<8x32xbf16>, vector<32x96xbf16>, vector<8x96xf32> -> vector<8x96xf32>
    %386 = vector.extract_strided_slice %383 {offsets = [0, 0], sizes = [8, 32], strides = [1, 1]} : vector<8x96xf32> to vector<8x32xf32>
    %387 = vector.extract_strided_slice %385 {offsets = [0, 0], sizes = [8, 32], strides = [1, 1]} : vector<8x96xf32> to vector<8x32xf32>
    %388 = arith.addf %386, %387 : vector<8x32xf32>
    %389 = arith.negf %388 : vector<8x32xf32>
    %390 = math.exp %389 : vector<8x32xf32>
    %cst_87 = arith.constant 1.000000e+00 : f32
    %391 = vector.broadcast %cst_87 : f32 to vector<8x32xf32>
    %392 = arith.addf %391, %390 : vector<8x32xf32>
    %393 = arith.divf %391, %392 : vector<8x32xf32>
    %394 = vector.extract_strided_slice %383 {offsets = [0, 32], sizes = [8, 32], strides = [1, 1]} : vector<8x96xf32> to vector<8x32xf32>
    %395 = vector.extract_strided_slice %385 {offsets = [0, 32], sizes = [8, 32], strides = [1, 1]} : vector<8x96xf32> to vector<8x32xf32>
    %396 = arith.addf %394, %395 : vector<8x32xf32>
    %397 = arith.negf %396 : vector<8x32xf32>
    %398 = math.exp %397 : vector<8x32xf32>
    %cst_88 = arith.constant 1.000000e+00 : f32
    %399 = vector.broadcast %cst_88 : f32 to vector<8x32xf32>
    %400 = arith.addf %399, %398 : vector<8x32xf32>
    %401 = arith.divf %399, %400 : vector<8x32xf32>
    %402 = vector.extract_strided_slice %383 {offsets = [0, 64], sizes = [8, 32], strides = [1, 1]} : vector<8x96xf32> to vector<8x32xf32>
    %403 = vector.extract_strided_slice %385 {offsets = [0, 64], sizes = [8, 32], strides = [1, 1]} : vector<8x96xf32> to vector<8x32xf32>
    %404 = vector.broadcast %26 : vector<1x32xf32> to vector<8x32xf32>
    %405 = arith.addf %403, %404 : vector<8x32xf32>
    %406 = arith.mulf %393, %405 : vector<8x32xf32>
    %407 = arith.addf %402, %406 : vector<8x32xf32>
    %408 = math.tanh %407 : vector<8x32xf32>
    %cst_89 = arith.constant 1.000000e+00 : f32
    %409 = vector.broadcast %cst_89 : f32 to vector<8x32xf32>
    %410 = arith.subf %409, %401 : vector<8x32xf32>
    %411 = arith.mulf %410, %408 : vector<8x32xf32>
    %412 = arith.mulf %401, %343 : vector<8x32xf32>
    %413 = arith.addf %411, %412 : vector<8x32xf32>
    %414 = arith.truncf %413 : vector<8x32xf32> to vector<8x32xbf16>
    %cst_90 = arith.constant dense<0.000000e+00> : vector<8x96xf32>
    %415 = tpu.matmul %414, %23, %cst_90 {dimension_numbers = #tpu.dot_dimension_numbers<[1], [0], [0], [1], [0, 0, 1, 1], [], []>} : vector<8x32xbf16>, vector<32x96xbf16>, vector<8x96xf32> -> vector<8x96xf32>
    %416 = vector.broadcast %25 : vector<1x96xf32> to vector<8x96xf32>
    %417 = arith.addf %415, %416 : vector<8x96xf32>
    %418 = arith.truncf %377 : vector<8x32xf32> to vector<8x32xbf16>
    %cst_91 = arith.constant dense<0.000000e+00> : vector<8x96xf32>
    %419 = tpu.matmul %418, %24, %cst_91 {dimension_numbers = #tpu.dot_dimension_numbers<[1], [0], [0], [1], [0, 0, 1, 1], [], []>} : vector<8x32xbf16>, vector<32x96xbf16>, vector<8x96xf32> -> vector<8x96xf32>
    %420 = vector.extract_strided_slice %417 {offsets = [0, 0], sizes = [8, 32], strides = [1, 1]} : vector<8x96xf32> to vector<8x32xf32>
    %421 = vector.extract_strided_slice %419 {offsets = [0, 0], sizes = [8, 32], strides = [1, 1]} : vector<8x96xf32> to vector<8x32xf32>
    %422 = arith.addf %420, %421 : vector<8x32xf32>
    %423 = arith.negf %422 : vector<8x32xf32>
    %424 = math.exp %423 : vector<8x32xf32>
    %cst_92 = arith.constant 1.000000e+00 : f32
    %425 = vector.broadcast %cst_92 : f32 to vector<8x32xf32>
    %426 = arith.addf %425, %424 : vector<8x32xf32>
    %427 = arith.divf %425, %426 : vector<8x32xf32>
    %428 = vector.extract_strided_slice %417 {offsets = [0, 32], sizes = [8, 32], strides = [1, 1]} : vector<8x96xf32> to vector<8x32xf32>
    %429 = vector.extract_strided_slice %419 {offsets = [0, 32], sizes = [8, 32], strides = [1, 1]} : vector<8x96xf32> to vector<8x32xf32>
    %430 = arith.addf %428, %429 : vector<8x32xf32>
    %431 = arith.negf %430 : vector<8x32xf32>
    %432 = math.exp %431 : vector<8x32xf32>
    %cst_93 = arith.constant 1.000000e+00 : f32
    %433 = vector.broadcast %cst_93 : f32 to vector<8x32xf32>
    %434 = arith.addf %433, %432 : vector<8x32xf32>
    %435 = arith.divf %433, %434 : vector<8x32xf32>
    %436 = vector.extract_strided_slice %417 {offsets = [0, 64], sizes = [8, 32], strides = [1, 1]} : vector<8x96xf32> to vector<8x32xf32>
    %437 = vector.extract_strided_slice %419 {offsets = [0, 64], sizes = [8, 32], strides = [1, 1]} : vector<8x96xf32> to vector<8x32xf32>
    %438 = vector.broadcast %27 : vector<1x32xf32> to vector<8x32xf32>
    %439 = arith.addf %437, %438 : vector<8x32xf32>
    %440 = arith.mulf %427, %439 : vector<8x32xf32>
    %441 = arith.addf %436, %440 : vector<8x32xf32>
    %442 = math.tanh %441 : vector<8x32xf32>
    %cst_94 = arith.constant 1.000000e+00 : f32
    %443 = vector.broadcast %cst_94 : f32 to vector<8x32xf32>
    %444 = arith.subf %443, %435 : vector<8x32xf32>
    %445 = arith.mulf %444, %442 : vector<8x32xf32>
    %446 = arith.mulf %435, %377 : vector<8x32xf32>
    %447 = arith.addf %445, %446 : vector<8x32xf32>
    %448 = arith.index_cast %381 : i32 to index
    %c0_95 = arith.constant 0 : index
    %449 = vector.load %arg12[%448, %c0_95] : memref<48x32xf32, #tpu.memory_space<vmem>>, vector<8x32xf32>
    tpu.vector_store %arg12[%448, %c0_95], %447 {strides = array<i32>} : memref<48x32xf32, #tpu.memory_space<vmem>>, vector<8x32xf32>,
    %c6_i32 = arith.constant 6 : i32
    %c0_96 = arith.constant 0 : index
    %c0_97 = arith.constant 0 : index
    %450 = vector.load %arg12[%c0_96, %c0_97] : memref<48x32xf32, #tpu.memory_space<vmem>>, vector<48x32xf32>
    %cst_98 = arith.constant dense<0.000000e+00> : vector<48xf32>
    %451 = vector.multi_reduction <add>, %450, %cst_98 [1] : vector<48x32xf32> to vector<48xf32>
    %452 = vector.shape_cast %451 : vector<48xf32> to vector<48x1xf32>
    %cst_99 = arith.constant 3.200000e+01 : f32
    %453 = vector.broadcast %cst_99 : f32 to vector<48x1xf32>
    %454 = arith.divf %452, %453 : vector<48x1xf32>
    %455 = vector.broadcast %454 : vector<48x1xf32> to vector<48x32xf32>
    %456 = arith.subf %450, %455 : vector<48x32xf32>
    %457 = arith.mulf %456, %456 : vector<48x32xf32>
    %cst_100 = arith.constant dense<0.000000e+00> : vector<48xf32>
    %458 = vector.multi_reduction <add>, %457, %cst_100 [1] : vector<48x32xf32> to vector<48xf32>
    %459 = vector.shape_cast %458 : vector<48xf32> to vector<48x1xf32>
    %cst_101 = arith.constant 3.200000e+01 : f32
    %460 = vector.broadcast %cst_101 : f32 to vector<48x1xf32>
    %461 = arith.divf %459, %460 : vector<48x1xf32>
    %462 = vector.broadcast %454 : vector<48x1xf32> to vector<48x32xf32>
    %463 = arith.subf %450, %462 : vector<48x32xf32>
    %cst_102 = arith.constant 9.99999974E-6 : f32
    %464 = vector.broadcast %cst_102 : f32 to vector<48x1xf32>
    %465 = arith.addf %461, %464 : vector<48x1xf32>
    %466 = math.rsqrt %465 : vector<48x1xf32>
    %467 = vector.broadcast %466 : vector<48x1xf32> to vector<48x32xf32>
    %468 = arith.mulf %463, %467 : vector<48x32xf32>
    %469 = arith.truncf %468 : vector<48x32xf32> to vector<48x32xbf16>
    %c0_103 = arith.constant 0 : index
    %c0_104 = arith.constant 0 : index
    %c0_105 = arith.constant 0 : index
    %470 = vector.load %arg8[%c0_103, %c0_104, %c0_105] : memref<1x32x8xf32, #tpu.memory_space<vmem>>, vector<1x32x8xf32>
    %471 = vector.shape_cast %470 : vector<1x32x8xf32> to vector<32x8xf32>
    %472 = arith.truncf %471 : vector<32x8xf32> to vector<32x8xbf16>
    %cst_106 = arith.constant dense<0.000000e+00> : vector<48x8xf32>
    %473 = tpu.matmul %469, %472, %cst_106 {dimension_numbers = #tpu.dot_dimension_numbers<[1], [0], [0], [1], [0, 0, 1, 1], [], []>} : vector<48x32xbf16>, vector<32x8xbf16>, vector<48x8xf32> -> vector<48x8xf32>
    %c0_107 = arith.constant 0 : index
    %c0_108 = arith.constant 0 : index
    %c0_109 = arith.constant 0 : index
    %474 = vector.load %arg9[%c0_107, %c0_108, %c0_109] : memref<1x1x8xf32, #tpu.memory_space<vmem>>, vector<1x1x8xf32>
    %475 = vector.shape_cast %474 : vector<1x1x8xf32> to vector<1x8xf32>
    %476 = vector.broadcast %475 : vector<1x8xf32> to vector<48x8xf32>
    %477 = arith.addf %473, %476 : vector<48x8xf32>
    %478 = arith.negf %477 : vector<48x8xf32>
    %479 = math.exp %478 : vector<48x8xf32>
    %cst_110 = arith.constant 1.000000e+00 : f32
    %480 = vector.broadcast %cst_110 : f32 to vector<48x8xf32>
    %481 = arith.addf %480, %479 : vector<48x8xf32>
    %482 = arith.divf %480, %481 : vector<48x8xf32>
    %483 = vector.shape_cast %482 : vector<48x8xf32> to vector<6x8x8xf32>
    %c0_111 = arith.constant 0 : index
    %c0_112 = arith.constant 0 : index
    %c0_113 = arith.constant 0 : index
    %c0_114 = arith.constant 0 : index
    %484 = vector.load %arg10[%c0_111, %c0_112, %c0_113, %c0_114] : memref<1x6x8x8xf32, #tpu.memory_space<vmem>>, vector<1x6x8x8xf32>
    %485 = vector.shape_cast %484 : vector<1x6x8x8xf32> to vector<6x8x8xf32>
    %486 = vector.shape_cast %483 : vector<6x8x8xf32> to vector<1x6x8x8xf32>
    tpu.vector_store %arg10[%c0_111, %c0_112, %c0_113, %c0_114], %486 {strides = array<i32>} : memref<1x6x8x8xf32, #tpu.memory_space<vmem>>, vector<1x6x8x8xf32>,
    return
  }
  func.func @transform_0(%arg0: i32) -> (i32, i32, i32, i32) {
    %c0_i32 = arith.constant 0 : i32
    %c0_i32_0 = arith.constant 0 : i32
    %c0_i32_1 = arith.constant 0 : i32
    %c0_i32_2 = arith.constant 0 : i32
    return %arg0, %c0_i32, %c0_i32_0, %c0_i32_1 : i32, i32, i32, i32
  }
  func.func @transform_1(%arg0: i32) -> (i32, i32, i32) {
    %c0_i32 = arith.constant 0 : i32
    %c0_i32_0 = arith.constant 0 : i32
    %c0_i32_1 = arith.constant 0 : i32
    return %arg0, %c0_i32, %c0_i32_0 : i32, i32, i32
  }
  func.func @transform_2(%arg0: i32) -> (i32, i32, i32) {
    %c0_i32 = arith.constant 0 : i32
    %c0_i32_0 = arith.constant 0 : i32
    %c0_i32_1 = arith.constant 0 : i32
    return %arg0, %c0_i32, %c0_i32_0 : i32, i32, i32
  }
  func.func @transform_3(%arg0: i32) -> (i32, i32, i32) {
    %c0_i32 = arith.constant 0 : i32
    %c0_i32_0 = arith.constant 0 : i32
    %c0_i32_1 = arith.constant 0 : i32
    return %arg0, %c0_i32, %c0_i32_0 : i32, i32, i32
  }
  func.func @transform_4(%arg0: i32) -> (i32, i32, i32) {
    %c0_i32 = arith.constant 0 : i32
    %c0_i32_0 = arith.constant 0 : i32
    %c0_i32_1 = arith.constant 0 : i32
    return %arg0, %c0_i32, %c0_i32_0 : i32, i32, i32
  }
  func.func @transform_5(%arg0: i32) -> (i32, i32, i32) {
    %c0_i32 = arith.constant 0 : i32
    %c0_i32_0 = arith.constant 0 : i32
    %c0_i32_1 = arith.constant 0 : i32
    return %arg0, %c0_i32, %c0_i32_0 : i32, i32, i32
  }
  func.func @transform_6(%arg0: i32) -> (i32, i32, i32) {
    %c0_i32 = arith.constant 0 : i32
    %c0_i32_0 = arith.constant 0 : i32
    %c0_i32_1 = arith.constant 0 : i32
    return %arg0, %c0_i32, %c0_i32_0 : i32, i32, i32
  }
  func.func @transform_7(%arg0: i32) -> (i32, i32, i32) {
    %c0_i32 = arith.constant 0 : i32
    %c0_i32_0 = arith.constant 0 : i32
    %c0_i32_1 = arith.constant 0 : i32
    return %arg0, %c0_i32, %c0_i32_0 : i32, i32, i32
  }
  func.func @transform_8(%arg0: i32) -> (i32, i32, i32) {
    %c0_i32 = arith.constant 0 : i32
    %c0_i32_0 = arith.constant 0 : i32
    %c0_i32_1 = arith.constant 0 : i32
    return %arg0, %c0_i32, %c0_i32_0 : i32, i32, i32
  }
  func.func @transform_9(%arg0: i32) -> (i32, i32, i32, i32) {
    %c0_i32 = arith.constant 0 : i32
    %c0_i32_0 = arith.constant 0 : i32
    %c0_i32_1 = arith.constant 0 : i32
    %c0_i32_2 = arith.constant 0 : i32
    return %arg0, %c0_i32, %c0_i32_0, %c0_i32_1 : i32, i32, i32, i32
  }
}

</mosaic_0001>

<llo_original>
// kernel: gcn_vae_forward.3
$region0: #{gcn_vae_forward.3}
  #allocation0 [shape = 'u32[]', space=smem, size = 0x4, offset = 0x4, fixed_abs, tag = 'smem constant byte address 0x4 - core index']
  #allocation1 [shape = 'u32[72,128]{1,0:T(1,128)}', space=vmem, size = 0x9000, scoped, tag = 'internal scratch']
  %s0 = inlined_call_operand.vmem [shape: f32[2,6,4,8], index: 0, kind: input, shape index: {}]
  %s1 = inlined_call_operand.vmem [shape: f32[4,4], index: 1, kind: input, shape index: {}]
  %s2 = inlined_call_operand.vmem [shape: f32[8,16], index: 2, kind: input, shape index: {}]
  %s3 = inlined_call_operand.vmem [shape: f32[1,16], index: 3, kind: input, shape index: {}]
  %s4 = inlined_call_operand.vmem [shape: f32[16,8], index: 4, kind: input, shape index: {}]
  %s5 = inlined_call_operand.vmem [shape: f32[1,8], index: 5, kind: input, shape index: {}]
  %s6 = inlined_call_operand.vmem [shape: f32[2,6,4,8], index: 6, kind: output, shape index: {}]
  %s7 = sld [smem:[#allocation0]]
  $region34: #{gcn_vae_forward.3} parent=0
    _
  %s9 = ssub.s32 1, %s7
  %s10 = scalar_select 0, %s9, %s7
  // Predicated region
  $region2: #{gcn_vae_forward.3} parent=0 // pred_check
    _
  $region3: #{gcn_vae_forward.3} parent=0 // pred_check_branch
    %12 = sbr.rel (0) target = $region5
  $region4: #{gcn_vae_forward.3} parent=0 // pred_region
    _
  $region5: #{gcn_vae_forward.3} parent=0 // pred_fallthru
    _
  // Predicated region
  $region6: #{gcn_vae_forward.3} parent=0 // pred_check
    _
  $region7: #{gcn_vae_forward.3} parent=0 // pred_check_branch
    %14 = sbr.rel (0) target = $region9
  $region8: #{gcn_vae_forward.3} parent=0 // pred_region
    _
  $region9: #{gcn_vae_forward.3} parent=0 // pred_fallthru
    _
  // Predicated region
  $region10: #{gcn_vae_forward.3} parent=0 // pred_check
    _
  $region11: #{gcn_vae_forward.3} parent=0 // pred_check_branch
    %16 = sbr.rel (0) target = $region13
  $region12: #{gcn_vae_forward.3} parent=0 // pred_region
    _
  $region13: #{gcn_vae_forward.3} parent=0 // pred_fallthru
    _
  // Predicated region
  $region14: #{gcn_vae_forward.3} parent=0 // pred_check
    _
  $region15: #{gcn_vae_forward.3} parent=0 // pred_check_branch
    %18 = sbr.rel (0) target = $region17
  $region16: #{gcn_vae_forward.3} parent=0 // pred_region
    _
  $region17: #{gcn_vae_forward.3} parent=0 // pred_fallthru
    _
  // Predicated region
  $region18: #{gcn_vae_forward.3} parent=0 // pred_check
    _
  $region19: #{gcn_vae_forward.3} parent=0 // pred_check_branch
    %20 = sbr.rel (0) target = $region21
  $region20: #{gcn_vae_forward.3} parent=0 // pred_region
    _
  $region21: #{gcn_vae_forward.3} parent=0 // pred_fallthru
    _
  // Predicated region
  $region22: #{gcn_vae_forward.3} parent=0 // pred_check
    _
  $region23: #{gcn_vae_forward.3} parent=0 // pred_check_branch
    %22 = sbr.rel (0) target = $region25
  $region24: #{gcn_vae_forward.3} parent=0 // pred_region
    _
  $region25: #{gcn_vae_forward.3} parent=0 // pred_fallthru
    _
  %v24 = vld [vmem:[%s1] sm:$0xf]
  %v25 = vld [vmem:[%s0] sm:$0xf]
  %v26 = vld [vmem:[%s0 + $0x4] sm:$0xf]
  %v27 = vld [vmem:[%s0 + $0x8] sm:$0xf]
  %v28 = vld [vmem:[%s0 + $0xc] sm:$0xf]
  %v29 = vld [vmem:[%s0 + $0x10] sm:$0xf]
  %v30 = vld [vmem:[%s0 + $0x14] sm:$0xf]
  %v31 = vld [vmem:[%s0 + $0x18] sm:$0xf]
  %v32 = vld [vmem:[%s0 + $0x1c] sm:$0xf]
  %v33 = vld [vmem:[%s0 + $0x20] sm:$0xf]
  %v34 = vld [vmem:[%s0 + $0x24] sm:$0xf]
  %v35 = vld [vmem:[%s0 + $0x28] sm:$0xf]
  %v36 = vld [vmem:[%s0 + $0x2c] sm:$0xf]
  %49 = vst [vmem:[#allocation1] ss:$2 sm:$0xff] %v25
  %s50 = scalar_lea.vmem [#allocation1], 1
  %51 = vst [vmem:[%s50] ss:$2 sm:$0xff] %v26
  %s52 = scalar_lea.vmem [#allocation1], 16
  %53 = vst [vmem:[%s52] ss:$2 sm:$0xff] %v27
  %s54 = scalar_lea.vmem [#allocation1], 17
  %55 = vst [vmem:[%s54] ss:$2 sm:$0xff] %v28
  %s56 = scalar_lea.vmem [#allocation1], 32
  %57 = vst [vmem:[%s56] ss:$2 sm:$0xff] %v29
  %s58 = scalar_lea.vmem [#allocation1], 33
  %59 = vst [vmem:[%s58] ss:$2 sm:$0xff] %v30
  %s60 = scalar_lea.vmem [#allocation1], 48
  %61 = vst [vmem:[%s60] ss:$2 sm:$0xff] %v31
  %s62 = scalar_lea.vmem [#allocation1], 49
  %63 = vst [vmem:[%s62] ss:$2 sm:$0xff] %v32
  %v64 = vld.sshfl [vmem:[#allocation1] sm:$0xff pattern:$0x75316420]
  %v65 = vld.sshfl [vmem:[#allocation1 + $0x10] sm:$0xff pattern:$0x75316420]
  %v66 = vld.sshfl [vmem:[#allocation1 + $0x20] sm:$0xff pattern:$0x75316420]
  %v67 = vld.sshfl [vmem:[#allocation1 + $0x30] sm:$0xff pattern:$0x75316420]
  %68 = vst [vmem:[#allocation1] ss:$2 sm:$0xff] %v33
  %69 = vst [vmem:[%s50] ss:$2 sm:$0xff] %v34
  %70 = vst [vmem:[%s52] ss:$2 sm:$0xff] %v35
  %71 = vst [vmem:[%s54] ss:$2 sm:$0xff] %v36
  %v72 = vld.sshfl [vmem:[#allocation1] sm:$0xff pattern:$0x75316420]
  %v73 = vld.sshfl [vmem:[#allocation1 + $0x10] sm:$0xff pattern:$0x75316420]
  %v80 = vpack.c.bf16 %v65, %v64
  %v81 = vpack.c.bf16 %v67, %v66
  %v82 = vpack.c.bf16 %v73, %v72
  %v83 = vld [vmem:[%s2] sm:$0xff]
  %v84 = vpack.c.bf16 %v83, %v83
  %vm85 = vcmask 64512
  %v87 = vsel %vm85, %v80, 0
  %v90 = vsel %vm85, %v81, 0
  %v93 = vsel %vm85, %v82, 0
  %vm95 = vcmask 1043456
  %v97 = vsel %vm95, %v84, 0
  %99 = vmatpush.bf16.msra.mxu0 0
  %100 = vmatpush.bf16.msra.mxu0 0
  %101 = vmatpush.bf16.msra.mxu0 0
  %102 = vmatpush.bf16.msra.mxu0 0
  %103 = vmatpush.bf16.msra.mxu0 0
  %104 = vmatpush.bf16.msra.mxu0 0
  %105 = vmatpush.bf16.msra.mxu0 0
  %106 = vmatpush.bf16.msra.mxu0 %v97
  %107 = vmatmul.bf16.gmra.mxu0 %v87
  %v108 = vpop.f32.mrf.mxu0
  %v109 = vadd.f32 0.0, %v108
  %v110 = vpop.f32.mrf.mxu0
  %v111 = vadd.f32 0.0, %v110
  %112 = vmatmul.bf16.gmra.mxu0 %v90
  %v113 = vpop.f32.mrf.mxu0
  %v114 = vadd.f32 0.0, %v113
  %v115 = vpop.f32.mrf.mxu0
  %v116 = vadd.f32 0.0, %v115
  %117 = vmatmul.bf16.gmra.mxu0 %v93
  %v118 = vpop.f32.mrf.mxu0
  %v119 = vadd.f32 0.0, %v118
  %v120 = vpop.f32.mrf.mxu0
  %v121 = vadd.f32 0.0, %v120
  %122 = vdwg.mxu0
  %v129 = vrot.slane %v109, 4
  %v130 = vrot.slane %v111, 4
  %v131 = vrot.slane %v114, 4
  %v132 = vrot.slane %v116, 4
  %v133 = vrot.slane %v119, 4
  %v134 = vrot.slane %v121, 4
  %v141 = vperm.slane %v109, 0
  %v142 = vperm.slane %v129, 0
  %v143 = vperm.slane %v111, 0
  %v144 = vperm.slane %v130, 0
  %v145 = vperm.slane %v114, 0
  %v146 = vperm.slane %v131, 0
  %v147 = vperm.slane %v116, 0
  %v148 = vperm.slane %v132, 0
  %v149 = vperm.slane %v119, 0
  %v150 = vperm.slane %v133, 0
  %v151 = vperm.slane %v121, 0
  %v152 = vperm.slane %v134, 0
  %154 = vset.pattern.permute.xlu0 0
  %155 = vperm.xlu0 %154, %v24
  %v156 = vpop.permute.xlu0 %155
  %v158 = vmul.f32 %v141, %v156
  %v159 = vmul.f32 %v142, %v156
  %v160 = vmul.f32 %v143, %v156
  %v161 = vmul.f32 %v144, %v156
  %v162 = vmul.f32 %v145, %v156
  %v163 = vmul.f32 %v146, %v156
  %v164 = vmul.f32 %v147, %v156
  %v165 = vmul.f32 %v148, %v156
  %v166 = vmul.f32 %v149, %v156
  %v167 = vmul.f32 %v150, %v156
  %v168 = vmul.f32 %v151, %v156
  %v169 = vmul.f32 %v152, %v156
  %v170 = vperm.slane %v109, 1
  %v171 = vperm.slane %v129, 1
  %v172 = vperm.slane %v111, 1
  %v173 = vperm.slane %v130, 1
  %v174 = vperm.slane %v114, 1
  %v175 = vperm.slane %v131, 1
  %v176 = vperm.slane %v116, 1
  %v177 = vperm.slane %v132, 1
  %v178 = vperm.slane %v119, 1
  %v179 = vperm.slane %v133, 1
  %v180 = vperm.slane %v121, 1
  %v181 = vperm.slane %v134, 1
  %182 = vset.pattern.permute.xlu0 1
  %183 = vperm.xlu0 %182, %v24
  %v184 = vpop.permute.xlu0 %183
  %v186 = vmul.f32 %v170, %v184
  %v187 = vmul.f32 %v171, %v184
  %v188 = vmul.f32 %v172, %v184
  %v189 = vmul.f32 %v173, %v184
  %v190 = vmul.f32 %v174, %v184
  %v191 = vmul.f32 %v175, %v184
  %v192 = vmul.f32 %v176, %v184
  %v193 = vmul.f32 %v177, %v184
  %v194 = vmul.f32 %v178, %v184
  %v195 = vmul.f32 %v179, %v184
  %v196 = vmul.f32 %v180, %v184
  %v197 = vmul.f32 %v181, %v184
  %v198 = vadd.f32 %v158, %v186
  %v199 = vadd.f32 %v159, %v187
  %v200 = vadd.f32 %v160, %v188
  %v201 = vadd.f32 %v161, %v189
  %v202 = vadd.f32 %v162, %v190
  %v203 = vadd.f32 %v163, %v191
  %v204 = vadd.f32 %v164, %v192
  %v205 = vadd.f32 %v165, %v193
  %v206 = vadd.f32 %v166, %v194
  %v207 = vadd.f32 %v167, %v195
  %v208 = vadd.f32 %v168, %v196
  %v209 = vadd.f32 %v169, %v197
  %v210 = vperm.slane %v109, 2
  %v211 = vperm.slane %v129, 2
  %v212 = vperm.slane %v111, 2
  %v213 = vperm.slane %v130, 2
  %v214 = vperm.slane %v114, 2
  %v215 = vperm.slane %v131, 2
  %v216 = vperm.slane %v116, 2
  %v217 = vperm.slane %v132, 2
  %v218 = vperm.slane %v119, 2
  %v219 = vperm.slane %v133, 2
  %v220 = vperm.slane %v121, 2
  %v221 = vperm.slane %v134, 2
  %222 = vset.pattern.permute.xlu0 2
  %223 = vperm.xlu0 %222, %v24
  %v224 = vpop.permute.xlu0 %223
  %v226 = vmul.f32 %v210, %v224
  %v227 = vmul.f32 %v211, %v224
  %v228 = vmul.f32 %v212, %v224
  %v229 = vmul.f32 %v213, %v224
  %v230 = vmul.f32 %v214, %v224
  %v231 = vmul.f32 %v215, %v224
  %v232 = vmul.f32 %v216, %v224
  %v233 = vmul.f32 %v217, %v224
  %v234 = vmul.f32 %v218, %v224
  %v235 = vmul.f32 %v219, %v224
  %v236 = vmul.f32 %v220, %v224
  %v237 = vmul.f32 %v221, %v224
  %v238 = vadd.f32 %v198, %v226
  %v239 = vadd.f32 %v199, %v227
  %v240 = vadd.f32 %v200, %v228
  %v241 = vadd.f32 %v201, %v229
  %v242 = vadd.f32 %v202, %v230
  %v243 = vadd.f32 %v203, %v231
  %v244 = vadd.f32 %v204, %v232
  %v245 = vadd.f32 %v205, %v233
  %v246 = vadd.f32 %v206, %v234
  %v247 = vadd.f32 %v207, %v235
  %v248 = vadd.f32 %v208, %v236
  %v249 = vadd.f32 %v209, %v237
  %v250 = vperm.slane %v109, 3
  %v251 = vperm.slane %v129, 3
  %v252 = vperm.slane %v111, 3
  %v253 = vperm.slane %v130, 3
  %v254 = vperm.slane %v114, 3
  %v255 = vperm.slane %v131, 3
  %v256 = vperm.slane %v116, 3
  %v257 = vperm.slane %v132, 3
  %v258 = vperm.slane %v119, 3
  %v259 = vperm.slane %v133, 3
  %v260 = vperm.slane %v121, 3
  %v261 = vperm.slane %v134, 3
  %262 = vset.pattern.permute.xlu0 3
  %263 = vperm.xlu0 %262, %v24
  %v264 = vpop.permute.xlu0 %263
  %v266 = vmul.f32 %v250, %v264
  %v267 = vmul.f32 %v251, %v264
  %v268 = vmul.f32 %v252, %v264
  %v269 = vmul.f32 %v253, %v264
  %v270 = vmul.f32 %v254, %v264
  %v271 = vmul.f32 %v255, %v264
  %v272 = vmul.f32 %v256, %v264
  %v273 = vmul.f32 %v257, %v264
  %v274 = vmul.f32 %v258, %v264
  %v275 = vmul.f32 %v259, %v264
  %v276 = vmul.f32 %v260, %v264
  %v277 = vmul.f32 %v261, %v264
  %v278 = vadd.f32 %v238, %v266
  %v279 = vadd.f32 %v239, %v267
  %v280 = vadd.f32 %v240, %v268
  %v281 = vadd.f32 %v241, %v269
  %v282 = vadd.f32 %v242, %v270
  %v283 = vadd.f32 %v243, %v271
  %v284 = vadd.f32 %v244, %v272
  %v285 = vadd.f32 %v245, %v273
  %v286 = vadd.f32 %v246, %v274
  %v287 = vadd.f32 %v247, %v275
  %v288 = vadd.f32 %v248, %v276
  %v289 = vadd.f32 %v249, %v277
  %v290 = vld [vmem:[%s3] sm:$0x1]
  %v292 = vperm.slane %v290, 0
  %v294 = vadd.f32 %v278, %v292
  %v295 = vadd.f32 %v279, %v292
  %v296 = vadd.f32 %v280, %v292
  %v297 = vadd.f32 %v281, %v292
  %v298 = vadd.f32 %v282, %v292
  %v299 = vadd.f32 %v283, %v292
  %v300 = vadd.f32 %v284, %v292
  %v301 = vadd.f32 %v285, %v292
  %v302 = vadd.f32 %v286, %v292
  %v303 = vadd.f32 %v287, %v292
  %v304 = vadd.f32 %v288, %v292
  %v305 = vadd.f32 %v289, %v292
  %v306 = vmax.f32 %v294, 0.0
  %v307 = vmax.f32 %v295, 0.0
  %v308 = vmax.f32 %v296, 0.0
  %v309 = vmax.f32 %v297, 0.0
  %v310 = vmax.f32 %v298, 0.0
  %v311 = vmax.f32 %v299, 0.0
  %v312 = vmax.f32 %v300, 0.0
  %v313 = vmax.f32 %v301, 0.0
  %v314 = vmax.f32 %v302, 0.0
  %v315 = vmax.f32 %v303, 0.0
  %v316 = vmax.f32 %v304, 0.0
  %v317 = vmax.f32 %v305, 0.0
  %330 = vst [vmem:[#allocation1] ss:$2 sm:$0xff] %v306
  %s331 = scalar_lea.vmem [#allocation1], 1
  %332 = vst [vmem:[%s331] ss:$2 sm:$0xff] %v307
  %s333 = scalar_lea.vmem [#allocation1], 16
  %334 = vst [vmem:[%s333] ss:$2 sm:$0xff] %v308
  %s335 = scalar_lea.vmem [#allocation1], 17
  %336 = vst [vmem:[%s335] ss:$2 sm:$0xff] %v309
  %s337 = scalar_lea.vmem [#allocation1], 32
  %338 = vst [vmem:[%s337] ss:$2 sm:$0xff] %v310
  %s339 = scalar_lea.vmem [#allocation1], 33
  %340 = vst [vmem:[%s339] ss:$2 sm:$0xff] %v311
  %s341 = scalar_lea.vmem [#allocation1], 48
  %342 = vst [vmem:[%s341] ss:$2 sm:$0xff] %v312
  %s343 = scalar_lea.vmem [#allocation1], 49
  %344 = vst [vmem:[%s343] ss:$2 sm:$0xff] %v313
  %v345 = vld.sshfl [vmem:[#allocation1] sm:$0xff pattern:$0x75316420]
  %v346 = vld.sshfl [vmem:[#allocation1 + $0x10] sm:$0xff pattern:$0x75316420]
  %v347 = vld.sshfl [vmem:[#allocation1 + $0x20] sm:$0xff pattern:$0x75316420]
  %v348 = vld.sshfl [vmem:[#allocation1 + $0x30] sm:$0xff pattern:$0x75316420]
  %349 = vst [vmem:[#allocation1] ss:$2 sm:$0xff] %v314
  %350 = vst [vmem:[%s331] ss:$2 sm:$0xff] %v315
  %351 = vst [vmem:[%s333] ss:$2 sm:$0xff] %v316
  %352 = vst [vmem:[%s335] ss:$2 sm:$0xff] %v317
  %v353 = vld.sshfl [vmem:[#allocation1] sm:$0xff pattern:$0x75316420]
  %v354 = vld.sshfl [vmem:[#allocation1 + $0x10] sm:$0xff pattern:$0x75316420]
  %v361 = vpack.c.bf16 %v346, %v345
  %v362 = vpack.c.bf16 %v348, %v347
  %v363 = vpack.c.bf16 %v354, %v353
  %v364 = vld [vmem:[%s4] sm:$0xff]
  %v365 = vld [vmem:[%s4 + $0x8] sm:$0xff]
  %v366 = vpack.c.bf16 %v365, %v364
  %vm367 = vcmask 130048
  %v369 = vsel %vm367, %v361, 0
  %v372 = vsel %vm367, %v362, 0
  %v375 = vsel %vm367, %v363, 0
  %377 = vmatpush.bf16.msra.mxu0 0
  %378 = vmatpush.bf16.msra.mxu0 0
  %379 = vmatpush.bf16.msra.mxu0 0
  %380 = vmatpush.bf16.msra.mxu0 0
  %381 = vmatpush.bf16.msra.mxu0 0
  %382 = vmatpush.bf16.msra.mxu0 0
  %383 = vmatpush.bf16.msra.mxu0 0
  %384 = vmatpush.bf16.msra.mxu0 %v366
  %385 = vmatmul.bf16.gmra.mxu0 %v369
  %v386 = vpop.f32.mrf.mxu0
  %v387 = vadd.f32 0.0, %v386
  %v388 = vpop.f32.mrf.mxu0
  %v389 = vadd.f32 0.0, %v388
  %390 = vmatmul.bf16.gmra.mxu0 %v372
  %v391 = vpop.f32.mrf.mxu0
  %v392 = vadd.f32 0.0, %v391
  %v393 = vpop.f32.mrf.mxu0
  %v394 = vadd.f32 0.0, %v393
  %395 = vmatmul.bf16.gmra.mxu0 %v375
  %v396 = vpop.f32.mrf.mxu0
  %v397 = vadd.f32 0.0, %v396
  %v398 = vpop.f32.mrf.mxu0
  %v399 = vadd.f32 0.0, %v398
  %400 = vdwg.mxu0
  %v407 = vrot.slane %v387, 4
  %v408 = vrot.slane %v389, 4
  %v409 = vrot.slane %v392, 4
  %v410 = vrot.slane %v394, 4
  %v411 = vrot.slane %v397, 4
  %v412 = vrot.slane %v399, 4
  %v419 = vperm.slane %v387, 0
  %v420 = vperm.slane %v407, 0
  %v421 = vperm.slane %v389, 0
  %v422 = vperm.slane %v408, 0
  %v423 = vperm.slane %v392, 0
  %v424 = vperm.slane %v409, 0
  %v425 = vperm.slane %v394, 0
  %v426 = vperm.slane %v410, 0
  %v427 = vperm.slane %v397, 0
  %v428 = vperm.slane %v411, 0
  %v429 = vperm.slane %v399, 0
  %v430 = vperm.slane %v412, 0
  %v431 = vmul.f32 %v419, %v156
  %v432 = vmul.f32 %v420, %v156
  %v433 = vmul.f32 %v421, %v156
  %v434 = vmul.f32 %v422, %v156
  %v435 = vmul.f32 %v423, %v156
  %v436 = vmul.f32 %v424, %v156
  %v437 = vmul.f32 %v425, %v156
  %v438 = vmul.f32 %v426, %v156
  %v439 = vmul.f32 %v427, %v156
  %v440 = vmul.f32 %v428, %v156
  %v441 = vmul.f32 %v429, %v156
  %v442 = vmul.f32 %v430, %v156
  %v443 = vperm.slane %v387, 1
  %v444 = vperm.slane %v407, 1
  %v445 = vperm.slane %v389, 1
  %v446 = vperm.slane %v408, 1
  %v447 = vperm.slane %v392, 1
  %v448 = vperm.slane %v409, 1
  %v449 = vperm.slane %v394, 1
  %v450 = vperm.slane %v410, 1
  %v451 = vperm.slane %v397, 1
  %v452 = vperm.slane %v411, 1
  %v453 = vperm.slane %v399, 1
  %v454 = vperm.slane %v412, 1
  %v455 = vmul.f32 %v443, %v184
  %v456 = vmul.f32 %v444, %v184
  %v457 = vmul.f32 %v445, %v184
  %v458 = vmul.f32 %v446, %v184
  %v459 = vmul.f32 %v447, %v184
  %v460 = vmul.f32 %v448, %v184
  %v461 = vmul.f32 %v449, %v184
  %v462 = vmul.f32 %v450, %v184
  %v463 = vmul.f32 %v451, %v184
  %v464 = vmul.f32 %v452, %v184
  %v465 = vmul.f32 %v453, %v184
  %v466 = vmul.f32 %v454, %v184
  %v467 = vadd.f32 %v431, %v455
  %v468 = vadd.f32 %v432, %v456
  %v469 = vadd.f32 %v433, %v457
  %v470 = vadd.f32 %v434, %v458
  %v471 = vadd.f32 %v435, %v459
  %v472 = vadd.f32 %v436, %v460
  %v473 = vadd.f32 %v437, %v461
  %v474 = vadd.f32 %v438, %v462
  %v475 = vadd.f32 %v439, %v463
  %v476 = vadd.f32 %v440, %v464
  %v477 = vadd.f32 %v441, %v465
  %v478 = vadd.f32 %v442, %v466
  %v479 = vperm.slane %v387, 2
  %v480 = vperm.slane %v407, 2
  %v481 = vperm.slane %v389, 2
  %v482 = vperm.slane %v408, 2
  %v483 = vperm.slane %v392, 2
  %v484 = vperm.slane %v409, 2
  %v485 = vperm.slane %v394, 2
  %v486 = vperm.slane %v410, 2
  %v487 = vperm.slane %v397, 2
  %v488 = vperm.slane %v411, 2
  %v489 = vperm.slane %v399, 2
  %v490 = vperm.slane %v412, 2
  %v491 = vmul.f32 %v479, %v224
  %v492 = vmul.f32 %v480, %v224
  %v493 = vmul.f32 %v481, %v224
  %v494 = vmul.f32 %v482, %v224
  %v495 = vmul.f32 %v483, %v224
  %v496 = vmul.f32 %v484, %v224
  %v497 = vmul.f32 %v485, %v224
  %v498 = vmul.f32 %v486, %v224
  %v499 = vmul.f32 %v487, %v224
  %v500 = vmul.f32 %v488, %v224
  %v501 = vmul.f32 %v489, %v224
  %v502 = vmul.f32 %v490, %v224
  %v503 = vadd.f32 %v467, %v491
  %v504 = vadd.f32 %v468, %v492
  %v505 = vadd.f32 %v469, %v493
  %v506 = vadd.f32 %v470, %v494
  %v507 = vadd.f32 %v471, %v495
  %v508 = vadd.f32 %v472, %v496
  %v509 = vadd.f32 %v473, %v497
  %v510 = vadd.f32 %v474, %v498
  %v511 = vadd.f32 %v475, %v499
  %v512 = vadd.f32 %v476, %v500
  %v513 = vadd.f32 %v477, %v501
  %v514 = vadd.f32 %v478, %v502
  %v515 = vperm.slane %v387, 3
  %v516 = vperm.slane %v407, 3
  %v517 = vperm.slane %v389, 3
  %v518 = vperm.slane %v408, 3
  %v519 = vperm.slane %v392, 3
  %v520 = vperm.slane %v409, 3
  %v521 = vperm.slane %v394, 3
  %v522 = vperm.slane %v410, 3
  %v523 = vperm.slane %v397, 3
  %v524 = vperm.slane %v411, 3
  %v525 = vperm.slane %v399, 3
  %v526 = vperm.slane %v412, 3
  %v527 = vmul.f32 %v515, %v264
  %v528 = vmul.f32 %v516, %v264
  %v529 = vmul.f32 %v517, %v264
  %v530 = vmul.f32 %v518, %v264
  %v531 = vmul.f32 %v519, %v264
  %v532 = vmul.f32 %v520, %v264
  %v533 = vmul.f32 %v521, %v264
  %v534 = vmul.f32 %v522, %v264
  %v535 = vmul.f32 %v523, %v264
  %v536 = vmul.f32 %v524, %v264
  %v537 = vmul.f32 %v525, %v264
  %v538 = vmul.f32 %v526, %v264
  %v539 = vadd.f32 %v503, %v527
  %v540 = vadd.f32 %v504, %v528
  %v541 = vadd.f32 %v505, %v529
  %v542 = vadd.f32 %v506, %v530
  %v543 = vadd.f32 %v507, %v531
  %v544 = vadd.f32 %v508, %v532
  %v545 = vadd.f32 %v509, %v533
  %v546 = vadd.f32 %v510, %v534
  %v547 = vadd.f32 %v511, %v535
  %v548 = vadd.f32 %v512, %v536
  %v549 = vadd.f32 %v513, %v537
  %v550 = vadd.f32 %v514, %v538
  %v551 = vld [vmem:[%s5] sm:$0x1]
  %v553 = vperm.slane %v551, 0
  %v555 = vadd.f32 %v539, %v553
  %v556 = vadd.f32 %v540, %v553
  %v557 = vadd.f32 %v541, %v553
  %v558 = vadd.f32 %v542, %v553
  %v559 = vadd.f32 %v543, %v553
  %v560 = vadd.f32 %v544, %v553
  %v561 = vadd.f32 %v545, %v553
  %v562 = vadd.f32 %v546, %v553
  %v563 = vadd.f32 %v547, %v553
  %v564 = vadd.f32 %v548, %v553
  %v565 = vadd.f32 %v549, %v553
  %v566 = vadd.f32 %v550, %v553
  %vm567 = vcmask 60416
  %568 = vst.msk [vmem:[%s6] sm:$0xf] %vm567, %v555
  %569 = vst.msk [vmem:[%s6 + $0x4] sm:$0xf] %vm567, %v556
  %570 = vst.msk [vmem:[%s6 + $0x8] sm:$0xf] %vm567, %v557
  %571 = vst.msk [vmem:[%s6 + $0xc] sm:$0xf] %vm567, %v558
  %572 = vst.msk [vmem:[%s6 + $0x10] sm:$0xf] %vm567, %v559
  %573 = vst.msk [vmem:[%s6 + $0x14] sm:$0xf] %vm567, %v560
  %574 = vst.msk [vmem:[%s6 + $0x18] sm:$0xf] %vm567, %v561
  %575 = vst.msk [vmem:[%s6 + $0x1c] sm:$0xf] %vm567, %v562
  %576 = vst.msk [vmem:[%s6 + $0x20] sm:$0xf] %vm567, %v563
  %577 = vst.msk [vmem:[%s6 + $0x24] sm:$0xf] %vm567, %v564
  %578 = vst.msk [vmem:[%s6 + $0x28] sm:$0xf] %vm567, %v565
  %579 = vst.msk [vmem:[%s6 + $0x2c] sm:$0xf] %vm567, %v566
  // Predicated region
  $region26: #{gcn_vae_forward.3} parent=0 // pred_check
    _
  $region27: #{gcn_vae_forward.3} parent=0 // pred_check_branch
    %581 = sbr.rel (0) target = $region29
  $region28: #{gcn_vae_forward.3} parent=0 // pred_region
    _
  $region29: #{gcn_vae_forward.3} parent=0 // pred_fallthru
    _
  // Predicated region
  $region30: #{gcn_vae_forward.3} parent=0 // pred_check
    _
  $region31: #{gcn_vae_forward.3} parent=0 // pred_check_branch
    %583 = sbr.rel (0) target = $region33
  $region32: #{gcn_vae_forward.3} parent=0 // pred_region
    _
  $region33: #{gcn_vae_forward.3} parent=0 // pred_fallthru
    _

// kernel: gcn_vae_forward.4
$region0: #{gcn_vae_forward.4}
  #allocation0 [shape = 'u32[]', space=smem, size = 0x4, offset = 0x4, fixed_abs, tag = 'smem constant byte address 0x4 - core index']
  #allocation1 [shape = 'u32[72,128]{1,0:T(1,128)}', space=vmem, size = 0x9000, scoped, tag = 'internal scratch']
  #allocation2 [shape = 'f32[48,96]{1,0:T(8,128)}', space=vmem, size = 0x6000, scoped, tag = 'scratch operand']
  #allocation3 [shape = 'f32[48,32]{1,0:T(8,128)}', space=vmem, size = 0x6000, scoped, tag = 'scratch operand']
  %s0 = inlined_call_operand.vmem [shape: f32[4,6,8,8], index: 0, kind: input, shape index: {}]
  %s1 = inlined_call_operand.vmem [shape: f32[4,6,8,16], index: 1, kind: input, shape index: {}]
  %s2 = inlined_call_operand.vmem [shape: f32[4,8,96], index: 2, kind: input, shape index: {}]
  %s3 = inlined_call_operand.vmem [shape: f32[4,32,96], index: 3, kind: input, shape index: {}]
  %s4 = inlined_call_operand.vmem [shape: f32[4,32,96], index: 4, kind: input, shape index: {}]
  %s5 = inlined_call_operand.vmem [shape: f32[4,32,96], index: 5, kind: input, shape index: {}]
  %s6 = inlined_call_operand.vmem [shape: f32[4,2,96], index: 6, kind: input, shape index: {}]
  %s7 = inlined_call_operand.vmem [shape: f32[4,2,32], index: 7, kind: input, shape index: {}]
  %s8 = inlined_call_operand.hbm [shape: f32[4,32,32], index: 8, kind: input, shape index: {}]
  %s9 = inlined_call_operand.vmem [shape: f32[4,1,32], index: 9, kind: input, shape index: {}]
  %s10 = inlined_call_operand.vmem [shape: f32[4,6,8,16], index: 10, kind: output, shape index: {0}]
  %s11 = inlined_call_operand.vmem [shape: f32[4,6,8,32], index: 11, kind: output, shape index: {1}]
  %12 = xla_tuple %s10, %s11
  %s13 = sld [smem:[#allocation0]]
  $region85: #{gcn_vae_forward.4} parent=0
    _
  %s15 = ssub.s32 1, %s13
  %s16 = scalar_select 0, %s15, %s13
  $region1: #{gcn_vae_forward.4} parent=0
    #allocation4 [shape = 'u8[32768]{0}', space=vmem, size = 0x8000, scoped, tag = 'input window, operand 8']
    #allocation5 [shape = 's32[2]{0}', space=sflag, size = 0x8, scoped, tag = 'scoped memory for gcn_vae_forward.4']
    %17 = vsyncpa [#allocation5], 0
    %s18 = scalar_lea.sflag [#allocation5], 1
    %19 = vsyncpa %s18, 0
    loop: start=0, step=1, limit=6
    $region2: #{gcn_vae_forward.4} parent=1 // loop_pre_header
      _
    $region3: #{gcn_vae_forward.4} parent=1 // loop_header
      %s21 = sphi 0, %s25
      %p22 = scmp.ge.s32.totalorder %s21, 6
      %s31 = sphi 0, %s33
      %s34 = sphi 0, %s31
      %s35 = sphi 0, %s34
      %s51 = sphi 0, %s35
      %s57 = sphi 0, %s59
      %s60 = sphi 0, %s57
      %s61 = sphi 0, %s60
      %s77 = sphi 0, %s61
      %s83 = sphi 0, %s85
      %s86 = sphi 0, %s83
      %s87 = sphi 0, %s86
      %s103 = sphi 0, %s87
      %s109 = sphi 0, %s111
      %s112 = sphi 0, %s109
      %s113 = sphi 0, %s112
      %s129 = sphi 0, %s113
      %s135 = sphi 0, %s137
      %s138 = sphi 0, %s135
      %s139 = sphi 0, %s138
      %s155 = sphi 0, %s139
      %s161 = sphi 0, %s163
      %s164 = sphi 0, %s161
      %s165 = sphi 0, %s164
      %s181 = sphi 0, %s165
      %s187 = sphi 0, %s189
      %s190 = sphi 0, %s187
      %s191 = sphi 0, %s190
      %s207 = sphi 0, %s191
      %s213 = sphi 0, %s215
      %s216 = sphi 0, %s213
      %s217 = sphi 0, %s216
      %s233 = sphi 0, %s217
      %s239 = sphi 0, %s241
      %s242 = sphi 0, %s239
      %s243 = sphi 0, %s242
      %s259 = sphi 0, %s243
      %s265 = sphi 0, %s267
      %s268 = sphi 0, %s265
      %s269 = sphi 0, %s268
      %s285 = sphi 0, %s269
      %s291 = sphi 0, %s293
      %s294 = sphi 0, %s291
      %s295 = sphi 0, %s294
      %s311 = sphi 0, %s295
      %s317 = sphi 0, %s319
      %s320 = sphi 0, %s317
      %s321 = sphi 0, %s320
      %s337 = sphi 0, %s321
    $region4: #{gcn_vae_forward.4} parent=1 // loop_header_branch
      %24 = sbr.rel (%p22) target = $region8
    $region5: #{gcn_vae_forward.4} parent=1 // loop_body
      %s26 = ssub.s32 %s21, 1
      %s27 = ssub.s32 %s21, 2
      %s28 = sadd.s32 %s21, 1
      %s29 = ssub.s32 %s21, %s28
      %p30 = scmp.eq.s32.totalorder %s29, 0
      %s32 = sadd.s32 %s31, 1
      %s33 = scalar_select %p30, %s31, %s32
      %p36 = pneg %p30
      %p37 = scmp.eq.s32.totalorder %s21, 3
      %p38 = por %p36, %p37
      %p39 = scmp.ne.s32.totalorder %s31, %s34
      %p40 = scmp.eq.s32.totalorder %s21, 0
      %p41 = por %p39, %p40
      %p42 = scmp.ne.s32.totalorder %s31, %s34
      %p43 = scmp.eq.s32.totalorder %s26, 3
      %p44 = por %p42, %p43
      %p45 = scmp.ne.s32.totalorder %s34, %s35
      %p46 = scmp.eq.s32.totalorder %s26, 0
      %p47 = por %p45, %p46
      %p48 = scmp.ne.s32.totalorder %s34, %s35
      %p49 = scmp.eq.s32.totalorder %s27, 3
      %p50 = por %p48, %p49
      %p52 = scmp.ne.s32.totalorder %s35, %s51
      %p53 = scmp.eq.s32.totalorder %s27, 0
      %p54 = por %p52, %p53
      %s55 = ssub.s32 %s21, %s28
      %p56 = scmp.eq.s32.totalorder %s55, 0
      %s58 = sadd.s32 %s57, 1
      %s59 = scalar_select %p56, %s57, %s58
      %p62 = pneg %p56
      %p63 = scmp.eq.s32.totalorder %s21, 3
      %p64 = por %p62, %p63
      %p65 = scmp.ne.s32.totalorder %s57, %s60
      %p66 = scmp.eq.s32.totalorder %s21, 0
      %p67 = por %p65, %p66
      %p68 = scmp.ne.s32.totalorder %s57, %s60
      %p69 = scmp.eq.s32.totalorder %s26, 3
      %p70 = por %p68, %p69
      %p71 = scmp.ne.s32.totalorder %s60, %s61
      %p72 = scmp.eq.s32.totalorder %s26, 0
      %p73 = por %p71, %p72
      %p74 = scmp.ne.s32.totalorder %s60, %s61
      %p75 = scmp.eq.s32.totalorder %s27, 3
      %p76 = por %p74, %p75
      %p78 = scmp.ne.s32.totalorder %s61, %s77
      %p79 = scmp.eq.s32.totalorder %s27, 0
      %p80 = por %p78, %p79
      %s81 = ssub.s32 %s21, %s28
      %p82 = scmp.eq.s32.totalorder %s81, 0
      %s84 = sadd.s32 %s83, 1
      %s85 = scalar_select %p82, %s83, %s84
      %p88 = pneg %p82
      %p89 = scmp.eq.s32.totalorder %s21, 3
      %p90 = por %p88, %p89
      %p91 = scmp.ne.s32.totalorder %s83, %s86
      %p92 = scmp.eq.s32.totalorder %s21, 0
      %p93 = por %p91, %p92
      %p94 = scmp.ne.s32.totalorder %s83, %s86
      %p95 = scmp.eq.s32.totalorder %s26, 3
      %p96 = por %p94, %p95
      %p97 = scmp.ne.s32.totalorder %s86, %s87
      %p98 = scmp.eq.s32.totalorder %s26, 0
      %p99 = por %p97, %p98
      %p100 = scmp.ne.s32.totalorder %s86, %s87
      %p101 = scmp.eq.s32.totalorder %s27, 3
      %p102 = por %p100, %p101
      %p104 = scmp.ne.s32.totalorder %s87, %s103
      %p105 = scmp.eq.s32.totalorder %s27, 0
      %p106 = por %p104, %p105
      %s107 = ssub.s32 %s21, %s28
      %p108 = scmp.eq.s32.totalorder %s107, 0
      %s110 = sadd.s32 %s109, 1
      %s111 = scalar_select %p108, %s109, %s110
      %p114 = pneg %p108
      %p115 = scmp.eq.s32.totalorder %s21, 3
      %p116 = por %p114, %p115
      %p117 = scmp.ne.s32.totalorder %s109, %s112
      %p118 = scmp.eq.s32.totalorder %s21, 0
      %p119 = por %p117, %p118
      %p120 = scmp.ne.s32.totalorder %s109, %s112
      %p121 = scmp.eq.s32.totalorder %s26, 3
      %p122 = por %p120, %p121
      %p123 = scmp.ne.s32.totalorder %s112, %s113
      %p124 = scmp.eq.s32.totalorder %s26, 0
      %p125 = por %p123, %p124
      %p126 = scmp.ne.s32.totalorder %s112, %s113
      %p127 = scmp.eq.s32.totalorder %s27, 3
      %p128 = por %p126, %p127
      %p130 = scmp.ne.s32.totalorder %s113, %s129
      %p131 = scmp.eq.s32.totalorder %s27, 0
      %p132 = por %p130, %p131
      %s133 = ssub.s32 %s21, %s28
      %p134 = scmp.eq.s32.totalorder %s133, 0
      %s136 = sadd.s32 %s135, 1
      %s137 = scalar_select %p134, %s135, %s136
      %p140 = pneg %p134
      %p141 = scmp.eq.s32.totalorder %s21, 3
      %p142 = por %p140, %p141
      %p143 = scmp.ne.s32.totalorder %s135, %s138
      %p144 = scmp.eq.s32.totalorder %s21, 0
      %p145 = por %p143, %p144
      %p146 = scmp.ne.s32.totalorder %s135, %s138
      %p147 = scmp.eq.s32.totalorder %s26, 3
      %p148 = por %p146, %p147
      %p149 = scmp.ne.s32.totalorder %s138, %s139
      %p150 = scmp.eq.s32.totalorder %s26, 0
      %p151 = por %p149, %p150
      %p152 = scmp.ne.s32.totalorder %s138, %s139
      %p153 = scmp.eq.s32.totalorder %s27, 3
      %p154 = por %p152, %p153
      %p156 = scmp.ne.s32.totalorder %s139, %s155
      %p157 = scmp.eq.s32.totalorder %s27, 0
      %p158 = por %p156, %p157
      %s159 = ssub.s32 %s21, %s28
      %p160 = scmp.eq.s32.totalorder %s159, 0
      %s162 = sadd.s32 %s161, 1
      %s163 = scalar_select %p160, %s161, %s162
      %p166 = pneg %p160
      %p167 = scmp.eq.s32.totalorder %s21, 3
      %p168 = por %p166, %p167
      %p169 = scmp.ne.s32.totalorder %s161, %s164
      %p170 = scmp.eq.s32.totalorder %s21, 0
      %p171 = por %p169, %p170
      %p172 = scmp.ne.s32.totalorder %s161, %s164
      %p173 = scmp.eq.s32.totalorder %s26, 3
      %p174 = por %p172, %p173
      %p175 = scmp.ne.s32.totalorder %s164, %s165
      %p176 = scmp.eq.s32.totalorder %s26, 0
      %p177 = por %p175, %p176
      %p178 = scmp.ne.s32.totalorder %s164, %s165
      %p179 = scmp.eq.s32.totalorder %s27, 3
      %p180 = por %p178, %p179
      %p182 = scmp.ne.s32.totalorder %s165, %s181
      %p183 = scmp.eq.s32.totalorder %s27, 0
      %p184 = por %p182, %p183
      %s185 = ssub.s32 %s21, %s28
      %p186 = scmp.eq.s32.totalorder %s185, 0
      %s188 = sadd.s32 %s187, 1
      %s189 = scalar_select %p186, %s187, %s188
      %p192 = pneg %p186
      %p193 = scmp.eq.s32.totalorder %s21, 3
      %p194 = por %p192, %p193
      %p195 = scmp.ne.s32.totalorder %s187, %s190
      %p196 = scmp.eq.s32.totalorder %s21, 0
      %p197 = por %p195, %p196
      %p198 = scmp.ne.s32.totalorder %s187, %s190
      %p199 = scmp.eq.s32.totalorder %s26, 3
      %p200 = por %p198, %p199
      %p201 = scmp.ne.s32.totalorder %s190, %s191
      %p202 = scmp.eq.s32.totalorder %s26, 0
      %p203 = por %p201, %p202
      %p204 = scmp.ne.s32.totalorder %s190, %s191
      %p205 = scmp.eq.s32.totalorder %s27, 3
      %p206 = por %p204, %p205
      %p208 = scmp.ne.s32.totalorder %s191, %s207
      %p209 = scmp.eq.s32.totalorder %s27, 0
      %p210 = por %p208, %p209
      %s211 = ssub.s32 %s21, %s28
      %p212 = scmp.eq.s32.totalorder %s211, 0
      %s214 = sadd.s32 %s213, 1
      %s215 = scalar_select %p212, %s213, %s214
      %p218 = pneg %p212
      %p219 = scmp.eq.s32.totalorder %s21, 3
      %p220 = por %p218, %p219
      %p221 = scmp.ne.s32.totalorder %s213, %s216
      %p222 = scmp.eq.s32.totalorder %s21, 0
      %p223 = por %p221, %p222
      %p224 = scmp.ne.s32.totalorder %s213, %s216
      %p225 = scmp.eq.s32.totalorder %s26, 3
      %p226 = por %p224, %p225
      %p227 = scmp.ne.s32.totalorder %s216, %s217
      %p228 = scmp.eq.s32.totalorder %s26, 0
      %p229 = por %p227, %p228
      %p230 = scmp.ne.s32.totalorder %s216, %s217
      %p231 = scmp.eq.s32.totalorder %s27, 3
      %p232 = por %p230, %p231
      %p234 = scmp.ne.s32.totalorder %s217, %s233
      %p235 = scmp.eq.s32.totalorder %s27, 0
      %p236 = por %p234, %p235
      %s237 = ssub.s32 %s21, %s28
      %p238 = scmp.eq.s32.totalorder %s237, 0
      %s240 = sadd.s32 %s239, 1
      %s241 = scalar_select %p238, %s239, %s240
      %p244 = pneg %p238
      %p245 = scmp.eq.s32.totalorder %s21, 3
      %p246 = por %p244, %p245
      %p247 = scmp.ne.s32.totalorder %s239, %s242
      %p248 = scmp.eq.s32.totalorder %s21, 0
      %p249 = por %p247, %p248
      %p250 = scmp.ne.s32.totalorder %s239, %s242
      %p251 = scmp.eq.s32.totalorder %s26, 3
      %p252 = por %p250, %p251
      %p253 = scmp.ne.s32.totalorder %s242, %s243
      %p254 = scmp.eq.s32.totalorder %s26, 0
      %p255 = por %p253, %p254
      %p256 = scmp.ne.s32.totalorder %s242, %s243
      %p257 = scmp.eq.s32.totalorder %s27, 3
      %p258 = por %p256, %p257
      %p260 = scmp.ne.s32.totalorder %s243, %s259
      %p261 = scmp.eq.s32.totalorder %s27, 0
      %p262 = por %p260, %p261
      %s263 = ssub.s32 %s21, %s28
      %p264 = scmp.eq.s32.totalorder %s263, 0
      %s266 = sadd.s32 %s265, 1
      %s267 = scalar_select %p264, %s265, %s266
      %p270 = pneg %p264
      %p271 = scmp.eq.s32.totalorder %s21, 3
      %p272 = por %p270, %p271
      %p273 = scmp.ne.s32.totalorder %s265, %s268
      %p274 = scmp.eq.s32.totalorder %s21, 0
      %p275 = por %p273, %p274
      %p276 = scmp.ne.s32.totalorder %s265, %s268
      %p277 = scmp.eq.s32.totalorder %s26, 3
      %p278 = por %p276, %p277
      %p279 = scmp.ne.s32.totalorder %s268, %s269
      %p280 = scmp.eq.s32.totalorder %s26, 0
      %p281 = por %p279, %p280
      %p282 = scmp.ne.s32.totalorder %s268, %s269
      %p283 = scmp.eq.s32.totalorder %s27, 3
      %p284 = por %p282, %p283
      %p286 = scmp.ne.s32.totalorder %s269, %s285
      %p287 = scmp.eq.s32.totalorder %s27, 0
      %p288 = por %p286, %p287
      %s289 = ssub.s32 %s21, %s28
      %p290 = scmp.eq.s32.totalorder %s289, 0
      %s292 = sadd.s32 %s291, 1
      %s293 = scalar_select %p290, %s291, %s292
      %p296 = pneg %p290
      %p297 = scmp.eq.s32.totalorder %s21, 3
      %p298 = por %p296, %p297
      %p299 = scmp.ne.s32.totalorder %s291, %s294
      %p300 = scmp.eq.s32.totalorder %s21, 0
      %p301 = por %p299, %p300
      %p302 = scmp.ne.s32.totalorder %s291, %s294
      %p303 = scmp.eq.s32.totalorder %s26, 3
      %p304 = por %p302, %p303
      %p305 = scmp.ne.s32.totalorder %s294, %s295
      %p306 = scmp.eq.s32.totalorder %s26, 0
      %p307 = por %p305, %p306
      %p308 = scmp.ne.s32.totalorder %s294, %s295
      %p309 = scmp.eq.s32.totalorder %s27, 3
      %p310 = por %p308, %p309
      %p312 = scmp.ne.s32.totalorder %s295, %s311
      %p313 = scmp.eq.s32.totalorder %s27, 0
      %p314 = por %p312, %p313
      %s315 = ssub.s32 %s21, %s28
      %p316 = scmp.eq.s32.totalorder %s315, 0
      %s318 = sadd.s32 %s317, 1
      %s319 = scalar_select %p316, %s317, %s318
      %p322 = pneg %p316
      %p323 = scmp.eq.s32.totalorder %s21, 3
      %p324 = por %p322, %p323
      %p325 = scmp.ne.s32.totalorder %s317, %s320
      %p326 = scmp.eq.s32.totalorder %s21, 0
      %p327 = por %p325, %p326
      %p328 = scmp.ne.s32.totalorder %s317, %s320
      %p329 = scmp.eq.s32.totalorder %s26, 3
      %p330 = por %p328, %p329
      %p331 = scmp.ne.s32.totalorder %s320, %s321
      %p332 = scmp.eq.s32.totalorder %s26, 0
      %p333 = por %p331, %p332
      %p334 = scmp.ne.s32.totalorder %s320, %s321
      %p335 = scmp.eq.s32.totalorder %s27, 3
      %p336 = por %p334, %p335
      %p338 = scmp.ne.s32.totalorder %s321, %s337
      %p339 = scmp.eq.s32.totalorder %s27, 0
      %p340 = por %p338, %p339
      %p341 = scmp.le.s32.totalorder 1, %s21
      %p342 = scmp.lt.s32.totalorder %s21, 5
      %p343 = pnand %p341, %p342
      %p344 = pneg %p343
      // Predicated region
      $region9: #{gcn_vae_forward.4} parent=5 // pred_check
        _
      $region10: #{gcn_vae_forward.4} parent=5 // pred_check_branch
        %346 = sbr.rel (%p343) target = $region12
      $region11: #{gcn_vae_forward.4} parent=5 // pred_region
        %s347 = ssub.s32 %s21, 1
      $region12: #{gcn_vae_forward.4} parent=5 // pred_fallthru
        _
      %p348 = scmp.lt.s32.totalorder %s21, 4
      // Predicated region
      $region13: #{gcn_vae_forward.4} parent=5 // pred_check
        %p349 = pneg %p348
      $region14: #{gcn_vae_forward.4} parent=5 // pred_check_branch
        %351 = sbr.rel (%p349) target = $region16
      $region15: #{gcn_vae_forward.4} parent=5 // pred_region
        // Predicated region
        $region17: #{gcn_vae_forward.4} parent=15 // pred_check
          %p352 = pneg %p41
        $region18: #{gcn_vae_forward.4} parent=15 // pred_check_branch
          %354 = sbr.rel (%p352) target = $region20
        $region19: #{gcn_vae_forward.4} parent=15 // pred_region
          %p355 = scmp.lt.s32.totalorder %s21, 3
          %s356 = scalar_select %p355, %s21, 3
          %s357 = smul.addr %s356, 6
          %s358 = smul.addr %s357, 8
          %s359 = scalar_lea.vmem %s0, %s358
        $region20: #{gcn_vae_forward.4} parent=15 // pred_fallthru
          _
        // Predicated region
        $region21: #{gcn_vae_forward.4} parent=15 // pred_check
          %p360 = pneg %p67
        $region22: #{gcn_vae_forward.4} parent=15 // pred_check_branch
          %362 = sbr.rel (%p360) target = $region24
        $region23: #{gcn_vae_forward.4} parent=15 // pred_region
          %p363 = scmp.lt.s32.totalorder %s21, 3
          %s364 = scalar_select %p363, %s21, 3
          %s365 = smul.addr %s364, 6
          %s366 = smul.addr %s365, 8
          %s367 = scalar_lea.vmem %s1, %s366
        $region24: #{gcn_vae_forward.4} parent=15 // pred_fallthru
          _
        // Predicated region
        $region25: #{gcn_vae_forward.4} parent=15 // pred_check
          %p368 = pneg %p93
        $region26: #{gcn_vae_forward.4} parent=15 // pred_check_branch
          %370 = sbr.rel (%p368) target = $region28
        $region27: #{gcn_vae_forward.4} parent=15 // pred_region
          %p371 = scmp.lt.s32.totalorder %s21, 3
          %s372 = scalar_select %p371, %s21, 3
          %s373 = smul.addr %s372, 8
          %s374 = scalar_lea.vmem %s2, %s373
        $region28: #{gcn_vae_forward.4} parent=15 // pred_fallthru
          _
        // Predicated region
        $region29: #{gcn_vae_forward.4} parent=15 // pred_check
          %p375 = pneg %p119
        $region30: #{gcn_vae_forward.4} parent=15 // pred_check_branch
          %377 = sbr.rel (%p375) target = $region32
        $region31: #{gcn_vae_forward.4} parent=15 // pred_region
          %p378 = scmp.lt.s32.totalorder %s21, 3
          %s379 = scalar_select %p378, %s21, 3
          %s380 = smul.addr %s379, 4
          %s381 = smul.addr %s380, 8
          %s382 = scalar_lea.vmem %s3, %s381
        $region32: #{gcn_vae_forward.4} parent=15 // pred_fallthru
          _
        // Predicated region
        $region33: #{gcn_vae_forward.4} parent=15 // pred_check
          %p383 = pneg %p145
        $region34: #{gcn_vae_forward.4} parent=15 // pred_check_branch
          %385 = sbr.rel (%p383) target = $region36
        $region35: #{gcn_vae_forward.4} parent=15 // pred_region
          %p386 = scmp.lt.s32.totalorder %s21, 3
          %s387 = scalar_select %p386, %s21, 3
          %s388 = smul.addr %s387, 4
          %s389 = smul.addr %s388, 8
          %s390 = scalar_lea.vmem %s4, %s389
        $region36: #{gcn_vae_forward.4} parent=15 // pred_fallthru
          _
        // Predicated region
        $region37: #{gcn_vae_forward.4} parent=15 // pred_check
          %p391 = pneg %p171
        $region38: #{gcn_vae_forward.4} parent=15 // pred_check_branch
          %393 = sbr.rel (%p391) target = $region40
        $region39: #{gcn_vae_forward.4} parent=15 // pred_region
          %p394 = scmp.lt.s32.totalorder %s21, 3
          %s395 = scalar_select %p394, %s21, 3
          %s396 = smul.addr %s395, 4
          %s397 = smul.addr %s396, 8
          %s398 = scalar_lea.vmem %s5, %s397
        $region40: #{gcn_vae_forward.4} parent=15 // pred_fallthru
          _
        // Predicated region
        $region41: #{gcn_vae_forward.4} parent=15 // pred_check
          %p399 = pneg %p197
        $region42: #{gcn_vae_forward.4} parent=15 // pred_check_branch
          %401 = sbr.rel (%p399) target = $region44
        $region43: #{gcn_vae_forward.4} parent=15 // pred_region
          %p402 = scmp.lt.s32.totalorder %s21, 3
          %s403 = scalar_select %p402, %s21, 3
          %s404 = smul.addr %s403, 2
          %s405 = scalar_lea.vmem %s6, %s404
        $region44: #{gcn_vae_forward.4} parent=15 // pred_fallthru
          _
        // Predicated region
        $region45: #{gcn_vae_forward.4} parent=15 // pred_check
          %p406 = pneg %p223
        $region46: #{gcn_vae_forward.4} parent=15 // pred_check_branch
          %408 = sbr.rel (%p406) target = $region48
        $region47: #{gcn_vae_forward.4} parent=15 // pred_region
          %p409 = scmp.lt.s32.totalorder %s21, 3
          %s410 = scalar_select %p409, %s21, 3
          %s411 = smul.addr %s410, 2
          %s412 = scalar_lea.vmem %s7, %s411
        $region48: #{gcn_vae_forward.4} parent=15 // pred_fallthru
          _
        // Predicated region
        $region49: #{gcn_vae_forward.4} parent=15 // pred_check
          %p413 = pneg %p249
        $region50: #{gcn_vae_forward.4} parent=15 // pred_check_branch
          %415 = sbr.rel (%p413) target = $region52
        $region51: #{gcn_vae_forward.4} parent=15 // pred_region
          %s416 = sand.u32 %s239, 1
          %s417 = scalar_lea.sflag [#allocation5], %s416
          %s418 = sand.u32 %s239, 1
          %s419 = smul.addr %s418, 32
          %s420 = scalar_lea.vmem [#allocation4], %s419
          %422 = vsyncadd %s417, 0
          %s423 = smul.addr %s21, 4
          %s424 = smul.addr %s423, 8
          %s425 = scalar_lea.hbm %s8, %s424
          %s426 = sshll.u32 %s425, 4
          %s427 = int_to_ptr.hbm [resolvable:$true] %s426
          %s428 = sshll.u32 %s420, 4
          %s429 = int_to_ptr.vmem [resolvable:$true] %s428
          %434 = dma.hbm_to_vmem [thread:$0]  %s427, 512, %s429, %s417, 128, 128, 8
        $region52: #{gcn_vae_forward.4} parent=15 // pred_fallthru
          _
        // Predicated region
        $region53: #{gcn_vae_forward.4} parent=15 // pred_check
          %p435 = pneg %p275
        $region54: #{gcn_vae_forward.4} parent=15 // pred_check_branch
          %437 = sbr.rel (%p435) target = $region56
        $region55: #{gcn_vae_forward.4} parent=15 // pred_region
          %p438 = scmp.lt.s32.totalorder %s21, 3
          %s439 = scalar_select %p438, %s21, 3
          %s440 = scalar_lea.vmem %s9, %s439
        $region56: #{gcn_vae_forward.4} parent=15 // pred_fallthru
          _
      $region16: #{gcn_vae_forward.4} parent=5 // pred_fallthru
        _
      %p441 = scmp.le.s32.totalorder 1, %s21
      %p442 = scmp.lt.s32.totalorder %s21, 5
      %p443 = pnand %p441, %p442
      %p444 = pneg %p443
      // Predicated region
      $region57: #{gcn_vae_forward.4} parent=5 // pred_check
        _
      $region58: #{gcn_vae_forward.4} parent=5 // pred_check_branch
        %446 = sbr.rel (%p443) target = $region60
      $region59: #{gcn_vae_forward.4} parent=5 // pred_region
        %s447 = ssub.s32 %s21, 1
        %s448 = sand.u32 %s242, 1
        %s449 = scalar_lea.sflag [#allocation5], %s448
        %s450 = sand.u32 %s242, 1
        %s451 = smul.addr %s450, 32
        %s452 = scalar_lea.vmem [#allocation4], %s451
        // Predicated region
        $region61: #{gcn_vae_forward.4} parent=59 // pred_check
          %p453 = pneg %p255
        $region62: #{gcn_vae_forward.4} parent=59 // pred_check_branch
          %455 = sbr.rel (%p453) target = $region64
        $region63: #{gcn_vae_forward.4} parent=59 // pred_region
          %457 = dma.done %s449, 512
        $region64: #{gcn_vae_forward.4} parent=59 // pred_fallthru
          _
        %p458 = scmp.lt.s32.totalorder %s26, 3
        %s459 = scalar_select %p458, %s26, 3
        %s460 = smul.addr %s459, 6
        %s461 = smul.addr %s460, 8
        %s462 = scalar_lea.vmem %s0, %s461
        %p463 = pneg %p47
        %p464 = pneg %p44
        %p465 = scmp.lt.s32.totalorder %s26, 3
        %s466 = scalar_select %p465, %s26, 3
        %s467 = smul.addr %s466, 6
        %s468 = smul.addr %s467, 8
        %s469 = scalar_lea.vmem %s1, %s468
        %p470 = pneg %p73
        %p471 = pneg %p70
        %p472 = scmp.lt.s32.totalorder %s26, 3
        %s473 = scalar_select %p472, %s26, 3
        %s474 = smul.addr %s473, 8
        %s475 = scalar_lea.vmem %s2, %s474
        %p476 = pneg %p99
        %p477 = pneg %p96
        %p478 = scmp.lt.s32.totalorder %s26, 3
        %s479 = scalar_select %p478, %s26, 3
        %s480 = smul.addr %s479, 4
        %s481 = smul.addr %s480, 8
        %s482 = scalar_lea.vmem %s3, %s481
        %p483 = pneg %p125
        %p484 = pneg %p122
        %p485 = scmp.lt.s32.totalorder %s26, 3
        %s486 = scalar_select %p485, %s26, 3
        %s487 = smul.addr %s486, 4
        %s488 = smul.addr %s487, 8
        %s489 = scalar_lea.vmem %s4, %s488
        %p490 = pneg %p151
        %p491 = pneg %p148
        %p492 = scmp.lt.s32.totalorder %s26, 3
        %s493 = scalar_select %p492, %s26, 3
        %s494 = smul.addr %s493, 4
        %s495 = smul.addr %s494, 8
        %s496 = scalar_lea.vmem %s5, %s495
        %p497 = pneg %p177
        %p498 = pneg %p174
        %p499 = scmp.lt.s32.totalorder %s26, 3
        %s500 = scalar_select %p499, %s26, 3
        %s501 = smul.addr %s500, 2
        %s502 = scalar_lea.vmem %s6, %s501
        %p503 = pneg %p203
        %p504 = pneg %p200
        %p505 = scmp.lt.s32.totalorder %s26, 3
        %s506 = scalar_select %p505, %s26, 3
        %s507 = smul.addr %s506, 2
        %s508 = scalar_lea.vmem %s7, %s507
        %p509 = pneg %p229
        %p510 = pneg %p226
        %s511 = sand.u32 %s242, 1
        %s512 = scalar_lea.sflag [#allocation5], %s511
        %s513 = sand.u32 %s242, 1
        %s514 = smul.addr %s513, 32
        %s515 = scalar_lea.vmem [#allocation4], %s514
        %p516 = pneg %p255
        %p517 = pneg %p252
        %p518 = scmp.lt.s32.totalorder %s26, 3
        %s519 = scalar_select %p518, %s26, 3
        %s520 = scalar_lea.vmem %s9, %s519
        %p521 = pneg %p281
        %p522 = pneg %p278
        %p523 = pneg %p307
        %p524 = pneg %p304
        %p525 = scmp.lt.s32.totalorder %s26, 3
        %s526 = scalar_select %p525, %s26, 3
        %s527 = smul.addr %s526, 6
        %s528 = smul.addr %s527, 8
        %s529 = scalar_lea.vmem %s10, %s528
        %p530 = pneg %p333
        %p531 = pneg %p330
        %p532 = scmp.lt.s32.totalorder %s26, 3
        %s533 = scalar_select %p532, %s26, 3
        %s534 = smul.addr %s533, 6
        %s535 = smul.addr %s534, 8
        %s536 = scalar_lea.vmem %s11, %s535
        %p537 = scmp.lt.s32.totalorder %s26, 3
        %s538 = scalar_select %p537, %s26, 3
        %s539 = smul.addr %s538, 6
        %s540 = smul.addr %s539, 8
        %s541 = scalar_lea.vmem %s0, %s540
        %p542 = scmp.lt.s32.totalorder %s26, 3
        %s543 = scalar_select %p542, %s26, 3
        %s544 = smul.addr %s543, 6
        %s545 = smul.addr %s544, 8
        %s546 = scalar_lea.vmem %s1, %s545
        %p547 = scmp.lt.s32.totalorder %s26, 3
        %s548 = scalar_select %p547, %s26, 3
        %s549 = smul.addr %s548, 8
        %s550 = scalar_lea.vmem %s2, %s549
        %p551 = scmp.lt.s32.totalorder %s26, 3
        %s552 = scalar_select %p551, %s26, 3
        %s553 = smul.addr %s552, 4
        %s554 = smul.addr %s553, 8
        %s555 = scalar_lea.vmem %s3, %s554
        %p556 = scmp.lt.s32.totalorder %s26, 3
        %s557 = scalar_select %p556, %s26, 3
        %s558 = smul.addr %s557, 4
        %s559 = smul.addr %s558, 8
        %s560 = scalar_lea.vmem %s4, %s559
        %p561 = scmp.lt.s32.totalorder %s26, 3
        %s562 = scalar_select %p561, %s26, 3
        %s563 = smul.addr %s562, 4
        %s564 = smul.addr %s563, 8
        %s565 = scalar_lea.vmem %s5, %s564
        %p566 = scmp.lt.s32.totalorder %s26, 3
        %s567 = scalar_select %p566, %s26, 3
        %s568 = smul.addr %s567, 2
        %s569 = scalar_lea.vmem %s6, %s568
        %p570 = scmp.lt.s32.totalorder %s26, 3
        %s571 = scalar_select %p570, %s26, 3
        %s572 = smul.addr %s571, 2
        %s573 = scalar_lea.vmem %s7, %s572
        %p574 = scmp.lt.s32.totalorder %s26, 3
        %s575 = scalar_select %p574, %s26, 3
        %s576 = scalar_lea.vmem %s9, %s575
        %p577 = scmp.lt.s32.totalorder %s26, 3
        %s578 = scalar_select %p577, %s26, 3
        %s579 = smul.addr %s578, 6
        %s580 = smul.addr %s579, 8
        %s581 = scalar_lea.vmem %s10, %s580
        %p582 = scmp.lt.s32.totalorder %s26, 3
        %s583 = scalar_select %p582, %s26, 3
        %s584 = smul.addr %s583, 6
        %s585 = smul.addr %s584, 8
        %s586 = scalar_lea.vmem %s11, %s585
        %v588 = vld [vmem:[%s541] sm:$0xff]
        %v589 = vld [vmem:[%s541 + $0x8] sm:$0xff]
        %v590 = vld [vmem:[%s541 + $0x10] sm:$0xff]
        %v591 = vld [vmem:[%s541 + $0x18] sm:$0xff]
        %v592 = vld [vmem:[%s541 + $0x20] sm:$0xff]
        %v593 = vld [vmem:[%s541 + $0x28] sm:$0xff]
        %v594 = vld [vmem:[%s550] sm:$0xff]
        %v595 = vld [vmem:[%s555] sm:$0xff]
        %v596 = vld [vmem:[%s555 + $0x8] sm:$0xff]
        %v597 = vld [vmem:[%s555 + $0x10] sm:$0xff]
        %v598 = vld [vmem:[%s555 + $0x18] sm:$0xff]
        %v599 = vld [vmem:[%s560] sm:$0xff]
        %v600 = vld [vmem:[%s560 + $0x8] sm:$0xff]
        %v601 = vld [vmem:[%s560 + $0x10] sm:$0xff]
        %v602 = vld [vmem:[%s560 + $0x18] sm:$0xff]
        %v603 = vld [vmem:[%s565] sm:$0xff]
        %v604 = vld [vmem:[%s565 + $0x8] sm:$0xff]
        %v605 = vld [vmem:[%s565 + $0x10] sm:$0xff]
        %v606 = vld [vmem:[%s565 + $0x18] sm:$0xff]
        %v607 = vld [vmem:[%s569] sm:$0x3]
        %v608 = vld [vmem:[%s573] sm:$0x3]
        %v609 = vpack.c.bf16 %v589, %v588
        %v610 = vpack.c.bf16 %v591, %v590
        %v611 = vpack.c.bf16 %v593, %v592
        %v612 = vpack.c.bf16 %v594, %v594
        %v613 = vperm.slane %v607, 0
        %vm614 = vcmask 64512
        %v616 = vsel %vm614, %v609, 0
        %v619 = vsel %vm614, %v610, 0
        %v622 = vsel %vm614, %v611, 0
        %vm624 = vcmask 1043456
        %v626 = vsel %vm624, %v612, 0
        %628 = vmatpush.bf16.msra.mxu0 0
        %629 = vmatpush.bf16.msra.mxu0 0
        %630 = vmatpush.bf16.msra.mxu0 0
        %631 = vmatpush.bf16.msra.mxu0 0
        %632 = vmatpush.bf16.msra.mxu0 0
        %633 = vmatpush.bf16.msra.mxu0 0
        %634 = vmatpush.bf16.msra.mxu0 0
        %635 = vmatpush.bf16.msra.mxu0 %v626
        %636 = vmatmul.bf16.gmra.mxu0 %v616
        %v637 = vpop.f32.mrf.mxu0
        %v638 = vadd.f32 %v613, %v637
        %v639 = vpop.f32.mrf.mxu0
        %v640 = vadd.f32 %v613, %v639
        %641 = vmatmul.bf16.gmra.mxu0 %v619
        %v642 = vpop.f32.mrf.mxu0
        %v643 = vadd.f32 %v613, %v642
        %v644 = vpop.f32.mrf.mxu0
        %v645 = vadd.f32 %v613, %v644
        %646 = vmatmul.bf16.gmra.mxu0 %v622
        %v647 = vpop.f32.mrf.mxu0
        %v648 = vadd.f32 %v613, %v647
        %v649 = vpop.f32.mrf.mxu0
        %v650 = vadd.f32 %v613, %v649
        %651 = vdwg.mxu0
        %vm652 = vcmask 785408
        %653 = vst.msk [vmem:[#allocation2] sm:$0xff] %vm652, %v638
        %654 = vst.msk [vmem:[#allocation2 + $0x8] sm:$0xff] %vm652, %v640
        %655 = vst.msk [vmem:[#allocation2 + $0x10] sm:$0xff] %vm652, %v643
        %656 = vst.msk [vmem:[#allocation2 + $0x18] sm:$0xff] %vm652, %v645
        %657 = vst.msk [vmem:[#allocation2 + $0x20] sm:$0xff] %vm652, %v648
        %658 = vst.msk [vmem:[#allocation2 + $0x28] sm:$0xff] %vm652, %v650
        %v659 = vpack.c.bf16 %v596, %v595
        %v660 = vpack.c.bf16 %v598, %v597
        %v661 = vpack.c.bf16 %v600, %v599
        %v662 = vpack.c.bf16 %v602, %v601
        %v663 = vpack.c.bf16 %v604, %v603
        %v664 = vpack.c.bf16 %v606, %v605
        %v665 = vld [vmem:[#allocation2] sm:$0xff]
        %vm666 = vcmask 261120
        %v668 = vsel %vm666, 0, 0
        %670 = vmatpush.bf16.msra.mxu0 0
        %671 = vmatpush.bf16.msra.mxu0 0
        %672 = vmatpush.bf16.msra.mxu0 0
        %673 = vmatpush.bf16.msra.mxu0 0
        %674 = vmatpush.bf16.msra.mxu0 0
        %675 = vmatpush.bf16.msra.mxu0 0
        %676 = vmatpush.bf16.msra.mxu0 %v660
        %677 = vmatpush.bf16.msra.mxu0 %v659
        %678 = vmatmul.bf16.gmra.mxu0 %v668
        %v679 = vpop.f32.mrf.mxu0
        %v680 = vadd.f32 0.0, %v679
        %v681 = vpop.f32.mrf.mxu0
        %682 = vdwg.mxu0
        %v683 = vadd.f32 %v665, %v680
        %v684 = vxor.u32 %v683, 2147483648
        %v685 = vmul.f32 %v684, 1.442695
        %v686 = vpow.pop %v685
        %v687 = vadd.f32 %v686, 1.0
        %v688 = vrcp.pop %v687
        %v689 = vmul.f32 %v687, %v688
        %v690 = vsub.f32 1.0, %v689
        %v691 = vmul.f32 %v688, %v690
        %v692 = vadd.f32 %v688, %v691
        %vm693 = vweird.f32 %v687
        %vm694 = vweird.f32 %v688
        %vm695 = vmor %vm693, %vm694
        %v696 = vsel %vm695, %v688, %v692
        %v697 = vand.u32 2147483647, %v687
        %vm698 = vcmp.eq.f32.partialorder %v697, 8.507059e+37
        %v699 = vand.u32 %v687, 2147483648
        %v700 = vor.u32 1.1754944e-38, %v699
        %v701 = vsel %vm698, %v700, %v696
        %v702 = vmul.f32 1.0, %v701
        %v703 = vperm.slane %v608, 0
        %705 = vrot.lane.b32.xlu0 %v703, 64
        %v706 = vpop.permute.xlu0 %705
        %v708 = vadd.f32 %v680, %v706
        %710 = vrot.lane.b32.xlu0 %v708, 64
        %v711 = vpop.permute.xlu0 %710
        %v713 = vmul.f32 %v702, %v711
        %715 = vrot.lane.b32.xlu0 %v713, 64
        %v716 = vpop.permute.xlu0 %715
        %v718 = vadd.f32 %v665, %v716
        %v719 = vtanh.pop %v718
        %v720 = vsub.f32 1.0, %v702
        %722 = vrot.lane.b32.xlu0 %v719, 96
        %v723 = vpop.permute.xlu0 %722
        %v725 = vmul.f32 %v720, %v723
        %v726 = vmul.f32 %v702, 0.0
        %v727 = vadd.f32 %v725, %v726
        %v728 = vpack.c.bf16 %v727, %v727
        %v729 = vperm.slane %v607, 1
        %731 = vrot.lane.b32.xlu0 %v728, 96
        %v732 = vpop.permute.xlu0 %731
        %v734 = vsel %vm666, %v732, 0
        %736 = vmatpush.bf16.msra.mxu0 0
        %737 = vmatpush.bf16.msra.mxu0 0
        %738 = vmatpush.bf16.msra.mxu0 0
        %739 = vmatpush.bf16.msra.mxu0 0
        %740 = vmatpush.bf16.msra.mxu0 0
        %741 = vmatpush.bf16.msra.mxu0 0
        %742 = vmatpush.bf16.msra.mxu0 %v662
        %743 = vmatpush.bf16.msra.mxu0 %v661
        %744 = vmatmul.bf16.gmra.mxu0 %v734
        %v745 = vpop.f32.mrf.mxu0
        %v746 = vadd.f32 %v729, %v745
        %v747 = vpop.f32.mrf.mxu0
        %748 = vdwg.mxu0
        %749 = vmatpush.bf16.msra.mxu0 0
        %750 = vmatpush.bf16.msra.mxu0 0
        %751 = vmatpush.bf16.msra.mxu0 0
        %752 = vmatpush.bf16.msra.mxu0 0
        %753 = vmatpush.bf16.msra.mxu0 0
        %754 = vmatpush.bf16.msra.mxu0 0
        %755 = vmatpush.bf16.msra.mxu0 %v664
        %756 = vmatpush.bf16.msra.mxu0 %v663
        %757 = vmatmul.bf16.gmra.mxu0 %v668
        %v758 = vpop.f32.mrf.mxu0
        %v759 = vadd.f32 0.0, %v758
        %v760 = vpop.f32.mrf.mxu0
        %761 = vdwg.mxu0
        %v762 = vadd.f32 %v746, %v759
        %v763 = vxor.u32 %v762, 2147483648
        %v764 = vmul.f32 %v763, 1.442695
        %v765 = vpow.pop %v764
        %v766 = vadd.f32 %v765, 1.0
        %v767 = vrcp.pop %v766
        %v768 = vmul.f32 %v766, %v767
        %v769 = vsub.f32 1.0, %v768
        %v770 = vmul.f32 %v767, %v769
        %v771 = vadd.f32 %v767, %v770
        %vm772 = vweird.f32 %v766
        %vm773 = vweird.f32 %v767
        %vm774 = vmor %vm772, %vm773
        %v775 = vsel %vm774, %v767, %v771
        %v776 = vand.u32 2147483647, %v766
        %vm777 = vcmp.eq.f32.partialorder %v776, 8.507059e+37
        %v778 = vand.u32 %v766, 2147483648
        %v779 = vor.u32 1.1754944e-38, %v778
        %v780 = vsel %vm777, %v779, %v775
        %v781 = vmul.f32 1.0, %v780
        %v782 = vperm.slane %v608, 1
        %784 = vrot.lane.b32.xlu0 %v782, 64
        %v785 = vpop.permute.xlu0 %784
        %v787 = vadd.f32 %v759, %v785
        %789 = vrot.lane.b32.xlu0 %v787, 64
        %v790 = vpop.permute.xlu0 %789
        %v792 = vmul.f32 %v781, %v790
        %794 = vrot.lane.b32.xlu0 %v792, 64
        %v795 = vpop.permute.xlu0 %794
        %v797 = vadd.f32 %v746, %v795
        %v798 = vtanh.pop %v797
        %v799 = vsub.f32 1.0, %v781
        %801 = vrot.lane.b32.xlu0 %v798, 96
        %v802 = vpop.permute.xlu0 %801
        %v804 = vmul.f32 %v799, %v802
        %v805 = vmul.f32 %v781, 0.0
        %v806 = vadd.f32 %v804, %v805
        %808 = vrot.lane.b32.xlu0 %v806, 96
        %v809 = vpop.permute.xlu0 %808
        %811 = vst.msk [vmem:[#allocation3] sm:$0xff] %vm666, %v809
        %s812 = scalar_lea.vmem [#allocation2], 8
        %v813 = vld [vmem:[%s812] sm:$0xff]
        %814 = vmatpush.bf16.msra.mxu0 0
        %815 = vmatpush.bf16.msra.mxu0 0
        %816 = vmatpush.bf16.msra.mxu0 0
        %817 = vmatpush.bf16.msra.mxu0 0
        %818 = vmatpush.bf16.msra.mxu0 0
        %819 = vmatpush.bf16.msra.mxu0 0
        %820 = vmatpush.bf16.msra.mxu0 %v660
        %821 = vmatpush.bf16.msra.mxu0 %v659
        %822 = vmatmul.bf16.gmra.mxu0 %v734
        %v823 = vpop.f32.mrf.mxu0
        %v824 = vadd.f32 0.0, %v823
        %v825 = vpop.f32.mrf.mxu0
        %826 = vdwg.mxu0
        %v827 = vadd.f32 %v813, %v824
        %v828 = vxor.u32 %v827, 2147483648
        %v829 = vmul.f32 %v828, 1.442695
        %v830 = vpow.pop %v829
        %v831 = vadd.f32 %v830, 1.0
        %v832 = vrcp.pop %v831
        %v833 = vmul.f32 %v831, %v832
        %v834 = vsub.f32 1.0, %v833
        %v835 = vmul.f32 %v832, %v834
        %v836 = vadd.f32 %v832, %v835
        %vm837 = vweird.f32 %v831
        %vm838 = vweird.f32 %v832
        %vm839 = vmor %vm837, %vm838
        %v840 = vsel %vm839, %v832, %v836
        %v841 = vand.u32 2147483647, %v831
        %vm842 = vcmp.eq.f32.partialorder %v841, 8.507059e+37
        %v843 = vand.u32 %v831, 2147483648
        %v844 = vor.u32 1.1754944e-38, %v843
        %v845 = vsel %vm842, %v844, %v840
        %v846 = vmul.f32 1.0, %v845
        %v847 = vadd.f32 %v824, %v706
        %849 = vrot.lane.b32.xlu0 %v847, 64
        %v850 = vpop.permute.xlu0 %849
        %v852 = vmul.f32 %v846, %v850
        %854 = vrot.lane.b32.xlu0 %v852, 64
        %v855 = vpop.permute.xlu0 %854
        %v857 = vadd.f32 %v813, %v855
        %v858 = vtanh.pop %v857
        %v859 = vsub.f32 1.0, %v846
        %861 = vrot.lane.b32.xlu0 %v858, 96
        %v862 = vpop.permute.xlu0 %861
        %v864 = vmul.f32 %v859, %v862
        %v865 = vmul.f32 %v846, %v727
        %v866 = vadd.f32 %v864, %v865
        %v867 = vpack.c.bf16 %v866, %v866
        %869 = vrot.lane.b32.xlu0 %v867, 96
        %v870 = vpop.permute.xlu0 %869
        %v872 = vsel %vm666, %v870, 0
        %874 = vmatpush.bf16.msra.mxu0 0
        %875 = vmatpush.bf16.msra.mxu0 0
        %876 = vmatpush.bf16.msra.mxu0 0
        %877 = vmatpush.bf16.msra.mxu0 0
        %878 = vmatpush.bf16.msra.mxu0 0
        %879 = vmatpush.bf16.msra.mxu0 0
        %880 = vmatpush.bf16.msra.mxu0 %v662
        %881 = vmatpush.bf16.msra.mxu0 %v661
        %882 = vmatmul.bf16.gmra.mxu0 %v872
        %v883 = vpop.f32.mrf.mxu0
        %v884 = vadd.f32 %v729, %v883
        %v885 = vpop.f32.mrf.mxu0
        %886 = vdwg.mxu0
        %v887 = vpack.c.bf16 %v806, %v806
        %889 = vrot.lane.b32.xlu0 %v887, 96
        %v890 = vpop.permute.xlu0 %889
        %v892 = vsel %vm666, %v890, 0
        %894 = vmatpush.bf16.msra.mxu0 0
        %895 = vmatpush.bf16.msra.mxu0 0
        %896 = vmatpush.bf16.msra.mxu0 0
        %897 = vmatpush.bf16.msra.mxu0 0
        %898 = vmatpush.bf16.msra.mxu0 0
        %899 = vmatpush.bf16.msra.mxu0 0
        %900 = vmatpush.bf16.msra.mxu0 %v664
        %901 = vmatpush.bf16.msra.mxu0 %v663
        %902 = vmatmul.bf16.gmra.mxu0 %v892
        %v903 = vpop.f32.mrf.mxu0
        %v904 = vadd.f32 0.0, %v903
        %v905 = vpop.f32.mrf.mxu0
        %906 = vdwg.mxu0
        %v907 = vadd.f32 %v884, %v904
        %v908 = vxor.u32 %v907, 2147483648
        %v909 = vmul.f32 %v908, 1.442695
        %v910 = vpow.pop %v909
        %v911 = vadd.f32 %v910, 1.0
        %v912 = vrcp.pop %v911
        %v913 = vmul.f32 %v911, %v912
        %v914 = vsub.f32 1.0, %v913
        %v915 = vmul.f32 %v912, %v914
        %v916 = vadd.f32 %v912, %v915
        %vm917 = vweird.f32 %v911
        %vm918 = vweird.f32 %v912
        %vm919 = vmor %vm917, %vm918
        %v920 = vsel %vm919, %v912, %v916
        %v921 = vand.u32 2147483647, %v911
        %vm922 = vcmp.eq.f32.partialorder %v921, 8.507059e+37
        %v923 = vand.u32 %v911, 2147483648
        %v924 = vor.u32 1.1754944e-38, %v923
        %v925 = vsel %vm922, %v924, %v920
        %v926 = vmul.f32 1.0, %v925
        %v927 = vadd.f32 %v904, %v785
        %929 = vrot.lane.b32.xlu0 %v927, 64
        %v930 = vpop.permute.xlu0 %929
        %v932 = vmul.f32 %v926, %v930
        %934 = vrot.lane.b32.xlu0 %v932, 64
        %v935 = vpop.permute.xlu0 %934
        %v937 = vadd.f32 %v884, %v935
        %v938 = vtanh.pop %v937
        %v939 = vsub.f32 1.0, %v926
        %941 = vrot.lane.b32.xlu0 %v938, 96
        %v942 = vpop.permute.xlu0 %941
        %v944 = vmul.f32 %v939, %v942
        %v945 = vmul.f32 %v926, %v806
        %v946 = vadd.f32 %v944, %v945
        %948 = vrot.lane.b32.xlu0 %v946, 96
        %v949 = vpop.permute.xlu0 %948
        %s951 = scalar_lea.vmem [#allocation3], 8
        %952 = vst.msk [vmem:[%s951] sm:$0xff] %vm666, %v949
        %s953 = scalar_lea.vmem [#allocation2], 16
        %v954 = vld [vmem:[%s953] sm:$0xff]
        %955 = vmatpush.bf16.msra.mxu0 0
        %956 = vmatpush.bf16.msra.mxu0 0
        %957 = vmatpush.bf16.msra.mxu0 0
        %958 = vmatpush.bf16.msra.mxu0 0
        %959 = vmatpush.bf16.msra.mxu0 0
        %960 = vmatpush.bf16.msra.mxu0 0
        %961 = vmatpush.bf16.msra.mxu0 %v660
        %962 = vmatpush.bf16.msra.mxu0 %v659
        %963 = vmatmul.bf16.gmra.mxu0 %v872
        %v964 = vpop.f32.mrf.mxu0
        %v965 = vadd.f32 0.0, %v964
        %v966 = vpop.f32.mrf.mxu0
        %967 = vdwg.mxu0
        %v968 = vadd.f32 %v954, %v965
        %v969 = vxor.u32 %v968, 2147483648
        %v970 = vmul.f32 %v969, 1.442695
        %v971 = vpow.pop %v970
        %v972 = vadd.f32 %v971, 1.0
        %v973 = vrcp.pop %v972
        %v974 = vmul.f32 %v972, %v973
        %v975 = vsub.f32 1.0, %v974
        %v976 = vmul.f32 %v973, %v975
        %v977 = vadd.f32 %v973, %v976
        %vm978 = vweird.f32 %v972
        %vm979 = vweird.f32 %v973
        %vm980 = vmor %vm978, %vm979
        %v981 = vsel %vm980, %v973, %v977
        %v982 = vand.u32 2147483647, %v972
        %vm983 = vcmp.eq.f32.partialorder %v982, 8.507059e+37
        %v984 = vand.u32 %v972, 2147483648
        %v985 = vor.u32 1.1754944e-38, %v984
        %v986 = vsel %vm983, %v985, %v981
        %v987 = vmul.f32 1.0, %v986
        %v988 = vadd.f32 %v965, %v706
        %990 = vrot.lane.b32.xlu0 %v988, 64
        %v991 = vpop.permute.xlu0 %990
        %v993 = vmul.f32 %v987, %v991
        %995 = vrot.lane.b32.xlu0 %v993, 64
        %v996 = vpop.permute.xlu0 %995
        %v998 = vadd.f32 %v954, %v996
        %v999 = vtanh.pop %v998
        %v1000 = vsub.f32 1.0, %v987
        %1002 = vrot.lane.b32.xlu0 %v999, 96
        %v1003 = vpop.permute.xlu0 %1002
        %v1005 = vmul.f32 %v1000, %v1003
        %v1006 = vmul.f32 %v987, %v866
        %v1007 = vadd.f32 %v1005, %v1006
        %v1008 = vpack.c.bf16 %v1007, %v1007
        %1010 = vrot.lane.b32.xlu0 %v1008, 96
        %v1011 = vpop.permute.xlu0 %1010
        %v1013 = vsel %vm666, %v1011, 0
        %1015 = vmatpush.bf16.msra.mxu0 0
        %1016 = vmatpush.bf16.msra.mxu0 0
        %1017 = vmatpush.bf16.msra.mxu0 0
        %1018 = vmatpush.bf16.msra.mxu0 0
        %1019 = vmatpush.bf16.msra.mxu0 0
        %1020 = vmatpush.bf16.msra.mxu0 0
        %1021 = vmatpush.bf16.msra.mxu0 %v662
        %1022 = vmatpush.bf16.msra.mxu0 %v661
        %1023 = vmatmul.bf16.gmra.mxu0 %v1013
        %v1024 = vpop.f32.mrf.mxu0
        %v1025 = vadd.f32 %v729, %v1024
        %v1026 = vpop.f32.mrf.mxu0
        %1027 = vdwg.mxu0
        %v1028 = vpack.c.bf16 %v946, %v946
        %1030 = vrot.lane.b32.xlu0 %v1028, 96
        %v1031 = vpop.permute.xlu0 %1030
        %v1033 = vsel %vm666, %v1031, 0
        %1035 = vmatpush.bf16.msra.mxu0 0
        %1036 = vmatpush.bf16.msra.mxu0 0
        %1037 = vmatpush.bf16.msra.mxu0 0
        %1038 = vmatpush.bf16.msra.mxu0 0
        %1039 = vmatpush.bf16.msra.mxu0 0
        %1040 = vmatpush.bf16.msra.mxu0 0
        %1041 = vmatpush.bf16.msra.mxu0 %v664
        %1042 = vmatpush.bf16.msra.mxu0 %v663
        %1043 = vmatmul.bf16.gmra.mxu0 %v1033
        %v1044 = vpop.f32.mrf.mxu0
        %v1045 = vadd.f32 0.0, %v1044
        %v1046 = vpop.f32.mrf.mxu0
        %1047 = vdwg.mxu0
        %v1048 = vadd.f32 %v1025, %v1045
        %v1049 = vxor.u32 %v1048, 2147483648
        %v1050 = vmul.f32 %v1049, 1.442695
        %v1051 = vpow.pop %v1050
        %v1052 = vadd.f32 %v1051, 1.0
        %v1053 = vrcp.pop %v1052
        %v1054 = vmul.f32 %v1052, %v1053
        %v1055 = vsub.f32 1.0, %v1054
        %v1056 = vmul.f32 %v1053, %v1055
        %v1057 = vadd.f32 %v1053, %v1056
        %vm1058 = vweird.f32 %v1052
        %vm1059 = vweird.f32 %v1053
        %vm1060 = vmor %vm1058, %vm1059
        %v1061 = vsel %vm1060, %v1053, %v1057
        %v1062 = vand.u32 2147483647, %v1052
        %vm1063 = vcmp.eq.f32.partialorder %v1062, 8.507059e+37
        %v1064 = vand.u32 %v1052, 2147483648
        %v1065 = vor.u32 1.1754944e-38, %v1064
        %v1066 = vsel %vm1063, %v1065, %v1061
        %v1067 = vmul.f32 1.0, %v1066
        %v1068 = vadd.f32 %v1045, %v785
        %1070 = vrot.lane.b32.xlu0 %v1068, 64
        %v1071 = vpop.permute.xlu0 %1070
        %v1073 = vmul.f32 %v1067, %v1071
        %1075 = vrot.lane.b32.xlu0 %v1073, 64
        %v1076 = vpop.permute.xlu0 %1075
        %v1078 = vadd.f32 %v1025, %v1076
        %v1079 = vtanh.pop %v1078
        %v1080 = vsub.f32 1.0, %v1067
        %1082 = vrot.lane.b32.xlu0 %v1079, 96
        %v1083 = vpop.permute.xlu0 %1082
        %v1085 = vmul.f32 %v1080, %v1083
        %v1086 = vmul.f32 %v1067, %v946
        %v1087 = vadd.f32 %v1085, %v1086
        %1089 = vrot.lane.b32.xlu0 %v1087, 96
        %v1090 = vpop.permute.xlu0 %1089
        %s1092 = scalar_lea.vmem [#allocation3], 16
        %1093 = vst.msk [vmem:[%s1092] sm:$0xff] %vm666, %v1090
        %s1094 = scalar_lea.vmem [#allocation2], 24
        %v1095 = vld [vmem:[%s1094] sm:$0xff]
        %1096 = vmatpush.bf16.msra.mxu0 0
        %1097 = vmatpush.bf16.msra.mxu0 0
        %1098 = vmatpush.bf16.msra.mxu0 0
        %1099 = vmatpush.bf16.msra.mxu0 0
        %1100 = vmatpush.bf16.msra.mxu0 0
        %1101 = vmatpush.bf16.msra.mxu0 0
        %1102 = vmatpush.bf16.msra.mxu0 %v660
        %1103 = vmatpush.bf16.msra.mxu0 %v659
        %1104 = vmatmul.bf16.gmra.mxu0 %v1013
        %v1105 = vpop.f32.mrf.mxu0
        %v1106 = vadd.f32 0.0, %v1105
        %v1107 = vpop.f32.mrf.mxu0
        %1108 = vdwg.mxu0
        %v1109 = vadd.f32 %v1095, %v1106
        %v1110 = vxor.u32 %v1109, 2147483648
        %v1111 = vmul.f32 %v1110, 1.442695
        %v1112 = vpow.pop %v1111
        %v1113 = vadd.f32 %v1112, 1.0
        %v1114 = vrcp.pop %v1113
        %v1115 = vmul.f32 %v1113, %v1114
        %v1116 = vsub.f32 1.0, %v1115
        %v1117 = vmul.f32 %v1114, %v1116
        %v1118 = vadd.f32 %v1114, %v1117
        %vm1119 = vweird.f32 %v1113
        %vm1120 = vweird.f32 %v1114
        %vm1121 = vmor %vm1119, %vm1120
        %v1122 = vsel %vm1121, %v1114, %v1118
        %v1123 = vand.u32 2147483647, %v1113
        %vm1124 = vcmp.eq.f32.partialorder %v1123, 8.507059e+37
        %v1125 = vand.u32 %v1113, 2147483648
        %v1126 = vor.u32 1.1754944e-38, %v1125
        %v1127 = vsel %vm1124, %v1126, %v1122
        %v1128 = vmul.f32 1.0, %v1127
        %v1129 = vadd.f32 %v1106, %v706
        %1131 = vrot.lane.b32.xlu0 %v1129, 64
        %v1132 = vpop.permute.xlu0 %1131
        %v1134 = vmul.f32 %v1128, %v1132
        %1136 = vrot.lane.b32.xlu0 %v1134, 64
        %v1137 = vpop.permute.xlu0 %1136
        %v1139 = vadd.f32 %v1095, %v1137
        %v1140 = vtanh.pop %v1139
        %v1141 = vsub.f32 1.0, %v1128
        %1143 = vrot.lane.b32.xlu0 %v1140, 96
        %v1144 = vpop.permute.xlu0 %1143
        %v1146 = vmul.f32 %v1141, %v1144
        %v1147 = vmul.f32 %v1128, %v1007
        %v1148 = vadd.f32 %v1146, %v1147
        %v1149 = vpack.c.bf16 %v1148, %v1148
        %1151 = vrot.lane.b32.xlu0 %v1149, 96
        %v1152 = vpop.permute.xlu0 %1151
        %v1154 = vsel %vm666, %v1152, 0
        %1156 = vmatpush.bf16.msra.mxu0 0
        %1157 = vmatpush.bf16.msra.mxu0 0
        %1158 = vmatpush.bf16.msra.mxu0 0
        %1159 = vmatpush.bf16.msra.mxu0 0
        %1160 = vmatpush.bf16.msra.mxu0 0
        %1161 = vmatpush.bf16.msra.mxu0 0
        %1162 = vmatpush.bf16.msra.mxu0 %v662
        %1163 = vmatpush.bf16.msra.mxu0 %v661
        %1164 = vmatmul.bf16.gmra.mxu0 %v1154
        %v1165 = vpop.f32.mrf.mxu0
        %v1166 = vadd.f32 %v729, %v1165
        %v1167 = vpop.f32.mrf.mxu0
        %1168 = vdwg.mxu0
        %v1169 = vpack.c.bf16 %v1087, %v1087
        %1171 = vrot.lane.b32.xlu0 %v1169, 96
        %v1172 = vpop.permute.xlu0 %1171
        %v1174 = vsel %vm666, %v1172, 0
        %1176 = vmatpush.bf16.msra.mxu0 0
        %1177 = vmatpush.bf16.msra.mxu0 0
        %1178 = vmatpush.bf16.msra.mxu0 0
        %1179 = vmatpush.bf16.msra.mxu0 0
        %1180 = vmatpush.bf16.msra.mxu0 0
        %1181 = vmatpush.bf16.msra.mxu0 0
        %1182 = vmatpush.bf16.msra.mxu0 %v664
        %1183 = vmatpush.bf16.msra.mxu0 %v663
        %1184 = vmatmul.bf16.gmra.mxu0 %v1174
        %v1185 = vpop.f32.mrf.mxu0
        %v1186 = vadd.f32 0.0, %v1185
        %v1187 = vpop.f32.mrf.mxu0
        %1188 = vdwg.mxu0
        %v1189 = vadd.f32 %v1166, %v1186
        %v1190 = vxor.u32 %v1189, 2147483648
        %v1191 = vmul.f32 %v1190, 1.442695
        %v1192 = vpow.pop %v1191
        %v1193 = vadd.f32 %v1192, 1.0
        %v1194 = vrcp.pop %v1193
        %v1195 = vmul.f32 %v1193, %v1194
        %v1196 = vsub.f32 1.0, %v1195
        %v1197 = vmul.f32 %v1194, %v1196
        %v1198 = vadd.f32 %v1194, %v1197
        %vm1199 = vweird.f32 %v1193
        %vm1200 = vweird.f32 %v1194
        %vm1201 = vmor %vm1199, %vm1200
        %v1202 = vsel %vm1201, %v1194, %v1198
        %v1203 = vand.u32 2147483647, %v1193
        %vm1204 = vcmp.eq.f32.partialorder %v1203, 8.507059e+37
        %v1205 = vand.u32 %v1193, 2147483648
        %v1206 = vor.u32 1.1754944e-38, %v1205
        %v1207 = vsel %vm1204, %v1206, %v1202
        %v1208 = vmul.f32 1.0, %v1207
        %v1209 = vadd.f32 %v1186, %v785
        %1211 = vrot.lane.b32.xlu0 %v1209, 64
        %v1212 = vpop.permute.xlu0 %1211
        %v1214 = vmul.f32 %v1208, %v1212
        %1216 = vrot.lane.b32.xlu0 %v1214, 64
        %v1217 = vpop.permute.xlu0 %1216
        %v1219 = vadd.f32 %v1166, %v1217
        %v1220 = vtanh.pop %v1219
        %v1221 = vsub.f32 1.0, %v1208
        %1223 = vrot.lane.b32.xlu0 %v1220, 96
        %v1224 = vpop.permute.xlu0 %1223
        %v1226 = vmul.f32 %v1221, %v1224
        %v1227 = vmul.f32 %v1208, %v1087
        %v1228 = vadd.f32 %v1226, %v1227
        %1230 = vrot.lane.b32.xlu0 %v1228, 96
        %v1231 = vpop.permute.xlu0 %1230
        %s1233 = scalar_lea.vmem [#allocation3], 24
        %1234 = vst.msk [vmem:[%s1233] sm:$0xff] %vm666, %v1231
        %s1235 = scalar_lea.vmem [#allocation2], 32
        %v1236 = vld [vmem:[%s1235] sm:$0xff]
        %1237 = vmatpush.bf16.msra.mxu0 0
        %1238 = vmatpush.bf16.msra.mxu0 0
        %1239 = vmatpush.bf16.msra.mxu0 0
        %1240 = vmatpush.bf16.msra.mxu0 0
        %1241 = vmatpush.bf16.msra.mxu0 0
        %1242 = vmatpush.bf16.msra.mxu0 0
        %1243 = vmatpush.bf16.msra.mxu0 %v660
        %1244 = vmatpush.bf16.msra.mxu0 %v659
        %1245 = vmatmul.bf16.gmra.mxu0 %v1154
        %v1246 = vpop.f32.mrf.mxu0
        %v1247 = vadd.f32 0.0, %v1246
        %v1248 = vpop.f32.mrf.mxu0
        %1249 = vdwg.mxu0
        %v1250 = vadd.f32 %v1236, %v1247
        %v1251 = vxor.u32 %v1250, 2147483648
        %v1252 = vmul.f32 %v1251, 1.442695
        %v1253 = vpow.pop %v1252
        %v1254 = vadd.f32 %v1253, 1.0
        %v1255 = vrcp.pop %v1254
        %v1256 = vmul.f32 %v1254, %v1255
        %v1257 = vsub.f32 1.0, %v1256
        %v1258 = vmul.f32 %v1255, %v1257
        %v1259 = vadd.f32 %v1255, %v1258
        %vm1260 = vweird.f32 %v1254
        %vm1261 = vweird.f32 %v1255
        %vm1262 = vmor %vm1260, %vm1261
        %v1263 = vsel %vm1262, %v1255, %v1259
        %v1264 = vand.u32 2147483647, %v1254
        %vm1265 = vcmp.eq.f32.partialorder %v1264, 8.507059e+37
        %v1266 = vand.u32 %v1254, 2147483648
        %v1267 = vor.u32 1.1754944e-38, %v1266
        %v1268 = vsel %vm1265, %v1267, %v1263
        %v1269 = vmul.f32 1.0, %v1268
        %v1270 = vadd.f32 %v1247, %v706
        %1272 = vrot.lane.b32.xlu0 %v1270, 64
        %v1273 = vpop.permute.xlu0 %1272
        %v1275 = vmul.f32 %v1269, %v1273
        %1277 = vrot.lane.b32.xlu0 %v1275, 64
        %v1278 = vpop.permute.xlu0 %1277
        %v1280 = vadd.f32 %v1236, %v1278
        %v1281 = vtanh.pop %v1280
        %v1282 = vsub.f32 1.0, %v1269
        %1284 = vrot.lane.b32.xlu0 %v1281, 96
        %v1285 = vpop.permute.xlu0 %1284
        %v1287 = vmul.f32 %v1282, %v1285
        %v1288 = vmul.f32 %v1269, %v1148
        %v1289 = vadd.f32 %v1287, %v1288
        %v1290 = vpack.c.bf16 %v1289, %v1289
        %1292 = vrot.lane.b32.xlu0 %v1290, 96
        %v1293 = vpop.permute.xlu0 %1292
        %v1295 = vsel %vm666, %v1293, 0
        %1297 = vmatpush.bf16.msra.mxu0 0
        %1298 = vmatpush.bf16.msra.mxu0 0
        %1299 = vmatpush.bf16.msra.mxu0 0
        %1300 = vmatpush.bf16.msra.mxu0 0
        %1301 = vmatpush.bf16.msra.mxu0 0
        %1302 = vmatpush.bf16.msra.mxu0 0
        %1303 = vmatpush.bf16.msra.mxu0 %v662
        %1304 = vmatpush.bf16.msra.mxu0 %v661
        %1305 = vmatmul.bf16.gmra.mxu0 %v1295
        %v1306 = vpop.f32.mrf.mxu0
        %v1307 = vadd.f32 %v729, %v1306
        %v1308 = vpop.f32.mrf.mxu0
        %1309 = vdwg.mxu0
        %v1310 = vpack.c.bf16 %v1228, %v1228
        %1312 = vrot.lane.b32.xlu0 %v1310, 96
        %v1313 = vpop.permute.xlu0 %1312
        %v1315 = vsel %vm666, %v1313, 0
        %1317 = vmatpush.bf16.msra.mxu0 0
        %1318 = vmatpush.bf16.msra.mxu0 0
        %1319 = vmatpush.bf16.msra.mxu0 0
        %1320 = vmatpush.bf16.msra.mxu0 0
        %1321 = vmatpush.bf16.msra.mxu0 0
        %1322 = vmatpush.bf16.msra.mxu0 0
        %1323 = vmatpush.bf16.msra.mxu0 %v664
        %1324 = vmatpush.bf16.msra.mxu0 %v663
        %1325 = vmatmul.bf16.gmra.mxu0 %v1315
        %v1326 = vpop.f32.mrf.mxu0
        %v1327 = vadd.f32 0.0, %v1326
        %v1328 = vpop.f32.mrf.mxu0
        %1329 = vdwg.mxu0
        %v1330 = vadd.f32 %v1307, %v1327
        %v1331 = vxor.u32 %v1330, 2147483648
        %v1332 = vmul.f32 %v1331, 1.442695
        %v1333 = vpow.pop %v1332
        %v1334 = vadd.f32 %v1333, 1.0
        %v1335 = vrcp.pop %v1334
        %v1336 = vmul.f32 %v1334, %v1335
        %v1337 = vsub.f32 1.0, %v1336
        %v1338 = vmul.f32 %v1335, %v1337
        %v1339 = vadd.f32 %v1335, %v1338
        %vm1340 = vweird.f32 %v1334
        %vm1341 = vweird.f32 %v1335
        %vm1342 = vmor %vm1340, %vm1341
        %v1343 = vsel %vm1342, %v1335, %v1339
        %v1344 = vand.u32 2147483647, %v1334
        %vm1345 = vcmp.eq.f32.partialorder %v1344, 8.507059e+37
        %v1346 = vand.u32 %v1334, 2147483648
        %v1347 = vor.u32 1.1754944e-38, %v1346
        %v1348 = vsel %vm1345, %v1347, %v1343
        %v1349 = vmul.f32 1.0, %v1348
        %v1350 = vadd.f32 %v1327, %v785
        %1352 = vrot.lane.b32.xlu0 %v1350, 64
        %v1353 = vpop.permute.xlu0 %1352
        %v1355 = vmul.f32 %v1349, %v1353
        %1357 = vrot.lane.b32.xlu0 %v1355, 64
        %v1358 = vpop.permute.xlu0 %1357
        %v1360 = vadd.f32 %v1307, %v1358
        %v1361 = vtanh.pop %v1360
        %v1362 = vsub.f32 1.0, %v1349
        %1364 = vrot.lane.b32.xlu0 %v1361, 96
        %v1365 = vpop.permute.xlu0 %1364
        %v1367 = vmul.f32 %v1362, %v1365
        %v1368 = vmul.f32 %v1349, %v1228
        %v1369 = vadd.f32 %v1367, %v1368
        %1371 = vrot.lane.b32.xlu0 %v1369, 96
        %v1372 = vpop.permute.xlu0 %1371
        %s1374 = scalar_lea.vmem [#allocation3], 32
        %1375 = vst.msk [vmem:[%s1374] sm:$0xff] %vm666, %v1372
        %s1376 = scalar_lea.vmem [#allocation2], 40
        %v1377 = vld [vmem:[%s1376] sm:$0xff]
        %1378 = vmatpush.bf16.msra.mxu0 0
        %1379 = vmatpush.bf16.msra.mxu0 0
        %1380 = vmatpush.bf16.msra.mxu0 0
        %1381 = vmatpush.bf16.msra.mxu0 0
        %1382 = vmatpush.bf16.msra.mxu0 0
        %1383 = vmatpush.bf16.msra.mxu0 0
        %1384 = vmatpush.bf16.msra.mxu0 %v660
        %1385 = vmatpush.bf16.msra.mxu0 %v659
        %1386 = vmatmul.bf16.gmra.mxu0 %v1295
        %v1387 = vpop.f32.mrf.mxu0
        %v1388 = vadd.f32 0.0, %v1387
        %v1389 = vpop.f32.mrf.mxu0
        %1390 = vdwg.mxu0
        %v1391 = vadd.f32 %v1377, %v1388
        %v1392 = vxor.u32 %v1391, 2147483648
        %v1393 = vmul.f32 %v1392, 1.442695
        %v1394 = vpow.pop %v1393
        %v1395 = vadd.f32 %v1394, 1.0
        %v1396 = vrcp.pop %v1395
        %v1397 = vmul.f32 %v1395, %v1396
        %v1398 = vsub.f32 1.0, %v1397
        %v1399 = vmul.f32 %v1396, %v1398
        %v1400 = vadd.f32 %v1396, %v1399
        %vm1401 = vweird.f32 %v1395
        %vm1402 = vweird.f32 %v1396
        %vm1403 = vmor %vm1401, %vm1402
        %v1404 = vsel %vm1403, %v1396, %v1400
        %v1405 = vand.u32 2147483647, %v1395
        %vm1406 = vcmp.eq.f32.partialorder %v1405, 8.507059e+37
        %v1407 = vand.u32 %v1395, 2147483648
        %v1408 = vor.u32 1.1754944e-38, %v1407
        %v1409 = vsel %vm1406, %v1408, %v1404
        %v1410 = vmul.f32 1.0, %v1409
        %v1411 = vadd.f32 %v1388, %v706
        %1413 = vrot.lane.b32.xlu0 %v1411, 64
        %v1414 = vpop.permute.xlu0 %1413
        %v1416 = vmul.f32 %v1410, %v1414
        %1418 = vrot.lane.b32.xlu0 %v1416, 64
        %v1419 = vpop.permute.xlu0 %1418
        %v1421 = vadd.f32 %v1377, %v1419
        %v1422 = vtanh.pop %v1421
        %v1423 = vsub.f32 1.0, %v1410
        %1425 = vrot.lane.b32.xlu0 %v1422, 96
        %v1426 = vpop.permute.xlu0 %1425
        %v1428 = vmul.f32 %v1423, %v1426
        %v1429 = vmul.f32 %v1410, %v1289
        %v1430 = vadd.f32 %v1428, %v1429
        %v1431 = vpack.c.bf16 %v1430, %v1430
        %1433 = vrot.lane.b32.xlu0 %v1431, 96
        %v1434 = vpop.permute.xlu0 %1433
        %v1436 = vsel %vm666, %v1434, 0
        %1438 = vmatpush.bf16.msra.mxu0 0
        %1439 = vmatpush.bf16.msra.mxu0 0
        %1440 = vmatpush.bf16.msra.mxu0 0
        %1441 = vmatpush.bf16.msra.mxu0 0
        %1442 = vmatpush.bf16.msra.mxu0 0
        %1443 = vmatpush.bf16.msra.mxu0 0
        %1444 = vmatpush.bf16.msra.mxu0 %v662
        %1445 = vmatpush.bf16.msra.mxu0 %v661
        %1446 = vmatmul.bf16.gmra.mxu0 %v1436
        %v1447 = vpop.f32.mrf.mxu0
        %v1448 = vadd.f32 %v729, %v1447
        %v1449 = vpop.f32.mrf.mxu0
        %1450 = vdwg.mxu0
        %v1451 = vpack.c.bf16 %v1369, %v1369
        %1453 = vrot.lane.b32.xlu0 %v1451, 96
        %v1454 = vpop.permute.xlu0 %1453
        %v1456 = vsel %vm666, %v1454, 0
        %1458 = vmatpush.bf16.msra.mxu0 0
        %1459 = vmatpush.bf16.msra.mxu0 0
        %1460 = vmatpush.bf16.msra.mxu0 0
        %1461 = vmatpush.bf16.msra.mxu0 0
        %1462 = vmatpush.bf16.msra.mxu0 0
        %1463 = vmatpush.bf16.msra.mxu0 0
        %1464 = vmatpush.bf16.msra.mxu0 %v664
        %1465 = vmatpush.bf16.msra.mxu0 %v663
        %1466 = vmatmul.bf16.gmra.mxu0 %v1456
        %v1467 = vpop.f32.mrf.mxu0
        %v1468 = vadd.f32 0.0, %v1467
        %v1469 = vpop.f32.mrf.mxu0
        %1470 = vdwg.mxu0
        %v1471 = vadd.f32 %v1448, %v1468
        %v1472 = vxor.u32 %v1471, 2147483648
        %v1473 = vmul.f32 %v1472, 1.442695
        %v1474 = vpow.pop %v1473
        %v1475 = vadd.f32 %v1474, 1.0
        %v1476 = vrcp.pop %v1475
        %v1477 = vmul.f32 %v1475, %v1476
        %v1478 = vsub.f32 1.0, %v1477
        %v1479 = vmul.f32 %v1476, %v1478
        %v1480 = vadd.f32 %v1476, %v1479
        %vm1481 = vweird.f32 %v1475
        %vm1482 = vweird.f32 %v1476
        %vm1483 = vmor %vm1481, %vm1482
        %v1484 = vsel %vm1483, %v1476, %v1480
        %v1485 = vand.u32 2147483647, %v1475
        %vm1486 = vcmp.eq.f32.partialorder %v1485, 8.507059e+37
        %v1487 = vand.u32 %v1475, 2147483648
        %v1488 = vor.u32 1.1754944e-38, %v1487
        %v1489 = vsel %vm1486, %v1488, %v1484
        %v1490 = vmul.f32 1.0, %v1489
        %v1491 = vadd.f32 %v1468, %v785
        %1493 = vrot.lane.b32.xlu0 %v1491, 64
        %v1494 = vpop.permute.xlu0 %1493
        %v1496 = vmul.f32 %v1490, %v1494
        %1498 = vrot.lane.b32.xlu0 %v1496, 64
        %v1499 = vpop.permute.xlu0 %1498
        %v1501 = vadd.f32 %v1448, %v1499
        %v1502 = vtanh.pop %v1501
        %v1503 = vsub.f32 1.0, %v1490
        %1505 = vrot.lane.b32.xlu0 %v1502, 96
        %v1506 = vpop.permute.xlu0 %1505
        %v1508 = vmul.f32 %v1503, %v1506
        %v1509 = vmul.f32 %v1490, %v1369
        %v1510 = vadd.f32 %v1508, %v1509
        %1512 = vrot.lane.b32.xlu0 %v1510, 96
        %v1513 = vpop.permute.xlu0 %1512
        %s1515 = scalar_lea.vmem [#allocation3], 40
        %1516 = vst.msk [vmem:[%s1515] sm:$0xff] %vm666, %v1513
        %v1517 = vld [vmem:[#allocation3] sm:$0xff]
        %v1518 = vld [vmem:[#allocation3 + $0x8] sm:$0xff]
        %v1519 = vld [vmem:[#allocation3 + $0x10] sm:$0xff]
        %v1520 = vld [vmem:[#allocation3 + $0x18] sm:$0xff]
        %v1521 = vld [vmem:[#allocation3 + $0x20] sm:$0xff]
        %v1522 = vld [vmem:[#allocation3 + $0x28] sm:$0xff]
        %v1523 = vsel %vm666, %v1517, 0.0
        %1524 = vadd.xlane.f32.xlu0 %v1523
        %v1525 = vpop.xlane.xlu0 %1524
        %v1526 = vsel %vm666, %v1518, 0.0
        %1527 = vadd.xlane.f32.xlu0 %v1526
        %v1528 = vpop.xlane.xlu0 %1527
        %v1529 = vsel %vm666, %v1519, 0.0
        %1530 = vadd.xlane.f32.xlu0 %v1529
        %v1531 = vpop.xlane.xlu0 %1530
        %v1532 = vsel %vm666, %v1520, 0.0
        %1533 = vadd.xlane.f32.xlu0 %v1532
        %v1534 = vpop.xlane.xlu0 %1533
        %v1535 = vsel %vm666, %v1521, 0.0
        %1536 = vadd.xlane.f32.xlu0 %v1535
        %v1537 = vpop.xlane.xlu0 %1536
        %v1538 = vsel %vm666, %v1522, 0.0
        %1539 = vadd.xlane.f32.xlu0 %v1538
        %v1540 = vpop.xlane.xlu0 %1539
        %v1541 = vrcp.pop 32.0
        %v1542 = vmul.f32 32.0, %v1541
        %v1543 = vsub.f32 1.0, %v1542
        %v1544 = vmul.f32 %v1541, %v1543
        %v1545 = vadd.f32 %v1541, %v1544
        %vm1546 = vweird.f32 %v1541
        %v1547 = vsel %vm1546, %v1541, %v1545
        %v1548 = vmul.f32 %v1525, %v1547
        %v1549 = vmul.f32 %v1528, %v1547
        %v1550 = vmul.f32 %v1531, %v1547
        %v1551 = vmul.f32 %v1534, %v1547
        %v1552 = vmul.f32 %v1537, %v1547
        %v1553 = vmul.f32 %v1540, %v1547
        %v1554 = vsub.f32 %v1517, %v1548
        %v1555 = vsub.f32 %v1518, %v1549
        %v1556 = vsub.f32 %v1519, %v1550
        %v1557 = vsub.f32 %v1520, %v1551
        %v1558 = vsub.f32 %v1521, %v1552
        %v1559 = vsub.f32 %v1522, %v1553
        %v1560 = vmul.f32 %v1554, %v1554
        %v1561 = vmul.f32 %v1555, %v1555
        %v1562 = vmul.f32 %v1556, %v1556
        %v1563 = vmul.f32 %v1557, %v1557
        %v1564 = vmul.f32 %v1558, %v1558
        %v1565 = vmul.f32 %v1559, %v1559
        %v1566 = vsel %vm666, %v1560, 0.0
        %1567 = vadd.xlane.f32.xlu0 %v1566
        %v1568 = vpop.xlane.xlu0 %1567
        %v1569 = vsel %vm666, %v1561, 0.0
        %1570 = vadd.xlane.f32.xlu0 %v1569
        %v1571 = vpop.xlane.xlu0 %1570
        %v1572 = vsel %vm666, %v1562, 0.0
        %1573 = vadd.xlane.f32.xlu0 %v1572
        %v1574 = vpop.xlane.xlu0 %1573
        %v1575 = vsel %vm666, %v1563, 0.0
        %1576 = vadd.xlane.f32.xlu0 %v1575
        %v1577 = vpop.xlane.xlu0 %1576
        %v1578 = vsel %vm666, %v1564, 0.0
        %1579 = vadd.xlane.f32.xlu0 %v1578
        %v1580 = vpop.xlane.xlu0 %1579
        %v1581 = vsel %vm666, %v1565, 0.0
        %1582 = vadd.xlane.f32.xlu0 %v1581
        %v1583 = vpop.xlane.xlu0 %1582
        %v1584 = vmul.f32 %v1568, %v1547
        %v1585 = vmul.f32 %v1571, %v1547
        %v1586 = vmul.f32 %v1574, %v1547
        %v1587 = vmul.f32 %v1577, %v1547
        %v1588 = vmul.f32 %v1580, %v1547
        %v1589 = vmul.f32 %v1583, %v1547
        %v1590 = vadd.f32 %v1584, 1e-05
        %v1591 = vadd.f32 %v1585, 1e-05
        %v1592 = vadd.f32 %v1586, 1e-05
        %v1593 = vadd.f32 %v1587, 1e-05
        %v1594 = vadd.f32 %v1588, 1e-05
        %v1595 = vadd.f32 %v1589, 1e-05
        %v1596 = vrsqrt.pop %v1590
        %v1597 = vmul.f32 %v1596, %v1590
        %v1598 = vmul.f32 %v1597, %v1596
        %v1599 = vmul.f32 0.5, %v1598
        %v1600 = vsub.f32 1.5, %v1599
        %v1601 = vmul.f32 %v1596, %v1600
        %vm1602 = vweird.f32 %v1590
        %vm1603 = vweird.f32 %v1596
        %vm1604 = vmor %vm1602, %vm1603
        %v1605 = vsel %vm1604, %v1596, %v1601
        %v1606 = vrsqrt.pop %v1591
        %v1607 = vmul.f32 %v1606, %v1591
        %v1608 = vmul.f32 %v1607, %v1606
        %v1609 = vmul.f32 0.5, %v1608
        %v1610 = vsub.f32 1.5, %v1609
        %v1611 = vmul.f32 %v1606, %v1610
        %vm1612 = vweird.f32 %v1591
        %vm1613 = vweird.f32 %v1606
        %vm1614 = vmor %vm1612, %vm1613
        %v1615 = vsel %vm1614, %v1606, %v1611
        %v1616 = vrsqrt.pop %v1592
        %v1617 = vmul.f32 %v1616, %v1592
        %v1618 = vmul.f32 %v1617, %v1616
        %v1619 = vmul.f32 0.5, %v1618
        %v1620 = vsub.f32 1.5, %v1619
        %v1621 = vmul.f32 %v1616, %v1620
        %vm1622 = vweird.f32 %v1592
        %vm1623 = vweird.f32 %v1616
        %vm1624 = vmor %vm1622, %vm1623
        %v1625 = vsel %vm1624, %v1616, %v1621
        %v1626 = vrsqrt.pop %v1593
        %v1627 = vmul.f32 %v1626, %v1593
        %v1628 = vmul.f32 %v1627, %v1626
        %v1629 = vmul.f32 0.5, %v1628
        %v1630 = vsub.f32 1.5, %v1629
        %v1631 = vmul.f32 %v1626, %v1630
        %vm1632 = vweird.f32 %v1593
        %vm1633 = vweird.f32 %v1626
        %vm1634 = vmor %vm1632, %vm1633
        %v1635 = vsel %vm1634, %v1626, %v1631
        %v1636 = vrsqrt.pop %v1594
        %v1637 = vmul.f32 %v1636, %v1594
        %v1638 = vmul.f32 %v1637, %v1636
        %v1639 = vmul.f32 0.5, %v1638
        %v1640 = vsub.f32 1.5, %v1639
        %v1641 = vmul.f32 %v1636, %v1640
        %vm1642 = vweird.f32 %v1594
        %vm1643 = vweird.f32 %v1636
        %vm1644 = vmor %vm1642, %vm1643
        %v1645 = vsel %vm1644, %v1636, %v1641
        %v1646 = vrsqrt.pop %v1595
        %v1647 = vmul.f32 %v1646, %v1595
        %v1648 = vmul.f32 %v1647, %v1646
        %v1649 = vmul.f32 0.5, %v1648
        %v1650 = vsub.f32 1.5, %v1649
        %v1651 = vmul.f32 %v1646, %v1650
        %vm1652 = vweird.f32 %v1595
        %vm1653 = vweird.f32 %v1646
        %vm1654 = vmor %vm1652, %vm1653
        %v1655 = vsel %vm1654, %v1646, %v1651
        %v1656 = vmul.f32 %v1554, %v1605
        %v1657 = vmul.f32 %v1555, %v1615
        %v1658 = vmul.f32 %v1556, %v1625
        %v1659 = vmul.f32 %v1557, %v1635
        %v1660 = vmul.f32 %v1558, %v1645
        %v1661 = vmul.f32 %v1559, %v1655
        %v1662 = vpack.c.bf16 %v1657, %v1656
        %v1663 = vpack.c.bf16 %v1659, %v1658
        %v1664 = vpack.c.bf16 %v1661, %v1660
        %v1665 = vld [vmem:[%s452] sm:$0xff]
        %v1666 = vld [vmem:[%s452 + $0x8] sm:$0xff]
        %v1667 = vld [vmem:[%s452 + $0x10] sm:$0xff]
        %v1668 = vld [vmem:[%s452 + $0x18] sm:$0xff]
        %v1669 = vpack.c.bf16 %v1666, %v1665
        %v1670 = vpack.c.bf16 %v1668, %v1667
        %v1671 = vld [vmem:[%s576] sm:$0x1]
        %v1673 = vperm.slane %v1671, 0
        %v1676 = vsel %vm666, %v1662, 0
        %v1679 = vsel %vm666, %v1663, 0
        %v1682 = vsel %vm666, %v1664, 0
        %1684 = vmatpush.bf16.msra.mxu0 0
        %1685 = vmatpush.bf16.msra.mxu0 0
        %1686 = vmatpush.bf16.msra.mxu0 0
        %1687 = vmatpush.bf16.msra.mxu0 0
        %1688 = vmatpush.bf16.msra.mxu0 0
        %1689 = vmatpush.bf16.msra.mxu0 0
        %1690 = vmatpush.bf16.msra.mxu0 %v1670
        %1691 = vmatpush.bf16.msra.mxu0 %v1669
        %1692 = vmatmul.bf16.gmra.mxu0 %v1676
        %v1693 = vpop.f32.mrf.mxu0
        %v1694 = vadd.f32 %v1673, %v1693
        %v1695 = vpop.f32.mrf.mxu0
        %v1696 = vadd.f32 %v1673, %v1695
        %1697 = vmatmul.bf16.gmra.mxu0 %v1679
        %v1698 = vpop.f32.mrf.mxu0
        %v1699 = vadd.f32 %v1673, %v1698
        %v1700 = vpop.f32.mrf.mxu0
        %v1701 = vadd.f32 %v1673, %v1700
        %1702 = vmatmul.bf16.gmra.mxu0 %v1682
        %v1703 = vpop.f32.mrf.mxu0
        %v1704 = vadd.f32 %v1673, %v1703
        %v1705 = vpop.f32.mrf.mxu0
        %v1706 = vadd.f32 %v1673, %v1705
        %1707 = vdwg.mxu0
        %v1708 = vld [vmem:[%s546] sm:$0xff]
        %v1709 = vld [vmem:[%s546 + $0x8] sm:$0xff]
        %v1710 = vld [vmem:[%s546 + $0x10] sm:$0xff]
        %v1711 = vld [vmem:[%s546 + $0x18] sm:$0xff]
        %v1712 = vld [vmem:[%s546 + $0x20] sm:$0xff]
        %v1713 = vld [vmem:[%s546 + $0x28] sm:$0xff]
        %v1714 = vmul.f32 %v1694, 0.5
        %v1715 = vmul.f32 %v1696, 0.5
        %v1716 = vmul.f32 %v1699, 0.5
        %v1717 = vmul.f32 %v1701, 0.5
        %v1718 = vmul.f32 %v1704, 0.5
        %v1719 = vmul.f32 %v1706, 0.5
        %v1720 = vmul.f32 %v1714, 1.442695
        %v1721 = vpow.pop %v1720
        %v1722 = vmul.f32 %v1715, 1.442695
        %v1723 = vpow.pop %v1722
        %v1724 = vmul.f32 %v1716, 1.442695
        %v1725 = vpow.pop %v1724
        %v1726 = vmul.f32 %v1717, 1.442695
        %v1727 = vpow.pop %v1726
        %v1728 = vmul.f32 %v1718, 1.442695
        %v1729 = vpow.pop %v1728
        %v1730 = vmul.f32 %v1719, 1.442695
        %v1731 = vpow.pop %v1730
        %1738 = vrot.lane.b32.xlu0 %v1708, 16
        %v1739 = vpop.permute.xlu0 %1738
        %1740 = vrot.lane.b32.xlu0 %v1709, 16
        %v1741 = vpop.permute.xlu0 %1740
        %1742 = vrot.lane.b32.xlu0 %v1710, 16
        %v1743 = vpop.permute.xlu0 %1742
        %1744 = vrot.lane.b32.xlu0 %v1711, 16
        %v1745 = vpop.permute.xlu0 %1744
        %1746 = vrot.lane.b32.xlu0 %v1712, 16
        %v1747 = vpop.permute.xlu0 %1746
        %1748 = vrot.lane.b32.xlu0 %v1713, 16
        %v1749 = vpop.permute.xlu0 %1748
        %v1756 = vmul.f32 %v1721, %v1739
        %v1757 = vmul.f32 %v1723, %v1741
        %v1758 = vmul.f32 %v1725, %v1743
        %v1759 = vmul.f32 %v1727, %v1745
        %v1760 = vmul.f32 %v1729, %v1747
        %v1761 = vmul.f32 %v1731, %v1749
        %1768 = vrot.lane.b32.xlu0 %v1756, 112
        %v1769 = vpop.permute.xlu0 %1768
        %1770 = vrot.lane.b32.xlu0 %v1757, 112
        %v1771 = vpop.permute.xlu0 %1770
        %1772 = vrot.lane.b32.xlu0 %v1758, 112
        %v1773 = vpop.permute.xlu0 %1772
        %1774 = vrot.lane.b32.xlu0 %v1759, 112
        %v1775 = vpop.permute.xlu0 %1774
        %1776 = vrot.lane.b32.xlu0 %v1760, 112
        %v1777 = vpop.permute.xlu0 %1776
        %1778 = vrot.lane.b32.xlu0 %v1761, 112
        %v1779 = vpop.permute.xlu0 %1778
        %v1786 = vadd.f32 %v1694, %v1769
        %v1787 = vadd.f32 %v1696, %v1771
        %v1788 = vadd.f32 %v1699, %v1773
        %v1789 = vadd.f32 %v1701, %v1775
        %v1790 = vadd.f32 %v1704, %v1777
        %v1791 = vadd.f32 %v1706, %v1779
        %vm1792 = vcmask 130048
        %1793 = vst.msk [vmem:[%s581] sm:$0xff] %vm1792, %v1786
        %1794 = vst.msk [vmem:[%s581 + $0x8] sm:$0xff] %vm1792, %v1787
        %1795 = vst.msk [vmem:[%s581 + $0x10] sm:$0xff] %vm1792, %v1788
        %1796 = vst.msk [vmem:[%s581 + $0x18] sm:$0xff] %vm1792, %v1789
        %1797 = vst.msk [vmem:[%s581 + $0x20] sm:$0xff] %vm1792, %v1790
        %1798 = vst.msk [vmem:[%s581 + $0x28] sm:$0xff] %vm1792, %v1791
        %1799 = vst.msk [vmem:[%s586] sm:$0xff] %vm666, %v1694
        %1800 = vst.msk [vmem:[%s586 + $0x8] sm:$0xff] %vm666, %v1696
        %1801 = vst.msk [vmem:[%s586 + $0x10] sm:$0xff] %vm666, %v1699
        %1802 = vst.msk [vmem:[%s586 + $0x18] sm:$0xff] %vm666, %v1701
        %1803 = vst.msk [vmem:[%s586 + $0x20] sm:$0xff] %vm666, %v1704
        %1804 = vst.msk [vmem:[%s586 + $0x28] sm:$0xff] %vm666, %v1706
        %p1805 = scmp.lt.s32.totalorder %s26, 3
        %s1806 = scalar_select %p1805, %s26, 3
        %s1807 = smul.addr %s1806, 6
        %s1808 = smul.addr %s1807, 8
        %s1809 = scalar_lea.vmem %s10, %s1808
        %p1810 = scmp.lt.s32.totalorder %s26, 3
        %s1811 = scalar_select %p1810, %s26, 3
        %s1812 = smul.addr %s1811, 6
        %s1813 = smul.addr %s1812, 8
        %s1814 = scalar_lea.vmem %s11, %s1813
        // Predicated region
        $region65: #{gcn_vae_forward.4} parent=59 // pred_check
          %p1815 = pneg %p304
        $region66: #{gcn_vae_forward.4} parent=59 // pred_check_branch
          %1817 = sbr.rel (%p1815) target = $region68
        $region67: #{gcn_vae_forward.4} parent=59 // pred_region
          _
        $region68: #{gcn_vae_forward.4} parent=59 // pred_fallthru
          _
        // Predicated region
        $region69: #{gcn_vae_forward.4} parent=59 // pred_check
          %p1818 = pneg %p330
        $region70: #{gcn_vae_forward.4} parent=59 // pred_check_branch
          %1820 = sbr.rel (%p1818) target = $region72
        $region71: #{gcn_vae_forward.4} parent=59 // pred_region
          _
        $region72: #{gcn_vae_forward.4} parent=59 // pred_fallthru
          _
      $region60: #{gcn_vae_forward.4} parent=5 // pred_fallthru
        _
      %p1821 = scmp.le.s32.totalorder 2, %s21
      // Predicated region
      $region73: #{gcn_vae_forward.4} parent=5 // pred_check
        %p1822 = pneg %p1821
      $region74: #{gcn_vae_forward.4} parent=5 // pred_check_branch
        %1824 = sbr.rel (%p1822) target = $region76
      $region75: #{gcn_vae_forward.4} parent=5 // pred_region
        %s1825 = ssub.s32 %s21, 2
        // Predicated region
        $region77: #{gcn_vae_forward.4} parent=75 // pred_check
          %p1826 = pneg %p310
        $region78: #{gcn_vae_forward.4} parent=75 // pred_check_branch
          %1828 = sbr.rel (%p1826) target = $region80
        $region79: #{gcn_vae_forward.4} parent=75 // pred_region
          %p1829 = scmp.lt.s32.totalorder %s27, 3
          %s1830 = scalar_select %p1829, %s27, 3
          %s1831 = smul.addr %s1830, 6
          %s1832 = smul.addr %s1831, 8
          %s1833 = scalar_lea.vmem %s10, %s1832
        $region80: #{gcn_vae_forward.4} parent=75 // pred_fallthru
          _
        // Predicated region
        $region81: #{gcn_vae_forward.4} parent=75 // pred_check
          %p1834 = pneg %p336
        $region82: #{gcn_vae_forward.4} parent=75 // pred_check_branch
          %1836 = sbr.rel (%p1834) target = $region84
        $region83: #{gcn_vae_forward.4} parent=75 // pred_region
          %p1837 = scmp.lt.s32.totalorder %s27, 3
          %s1838 = scalar_select %p1837, %s27, 3
          %s1839 = smul.addr %s1838, 6
          %s1840 = smul.addr %s1839, 8
          %s1841 = scalar_lea.vmem %s11, %s1840
        $region84: #{gcn_vae_forward.4} parent=75 // pred_fallthru
          _
      $region76: #{gcn_vae_forward.4} parent=5 // pred_fallthru
        _
    $region6: #{gcn_vae_forward.4} parent=1 // loop_footer
      %s25 = sadd.s32 1, %s21
    $region7: #{gcn_vae_forward.4} parent=1 // loop_footer_branch
      %20 = sbr.rel target = $region3
    $region8: #{gcn_vae_forward.4} parent=1 // loop_exit
      _
    %1842 = vsyncpa [#allocation5], 1
    %s1843 = scalar_lea.sflag [#allocation5], 1
    %1844 = vsyncpa %s1843, 1

// kernel: gcn_vae_forward.5
$region0: #{gcn_vae_forward.5}
  #allocation0 [shape = 'u32[]', space=smem, size = 0x4, offset = 0x4, fixed_abs, tag = 'smem constant byte address 0x4 - core index']
  #allocation1 [shape = 'u32[72,128]{1,0:T(1,128)}', space=vmem, size = 0x9000, scoped, tag = 'internal scratch']
  #allocation2 [shape = 'f32[48,96]{1,0:T(8,128)}', space=vmem, size = 0x6000, scoped, tag = 'scratch operand']
  #allocation3 [shape = 'f32[48,32]{1,0:T(8,128)}', space=vmem, size = 0x6000, scoped, tag = 'scratch operand']
  %s0 = inlined_call_operand.vmem [shape: f32[4,6,8,16], index: 0, kind: input, shape index: {}]
  %s1 = inlined_call_operand.vmem [shape: f32[4,16,96], index: 1, kind: input, shape index: {}]
  %s2 = inlined_call_operand.vmem [shape: f32[4,32,96], index: 2, kind: input, shape index: {}]
  %s3 = inlined_call_operand.vmem [shape: f32[4,32,96], index: 3, kind: input, shape index: {}]
  %s4 = inlined_call_operand.vmem [shape: f32[4,32,96], index: 4, kind: input, shape index: {}]
  %s5 = inlined_call_operand.vmem [shape: f32[4,2,96], index: 5, kind: input, shape index: {}]
  %s6 = inlined_call_operand.vmem [shape: f32[4,2,32], index: 6, kind: input, shape index: {}]
  %s7 = inlined_call_operand.vmem [shape: f32[4,32,8], index: 7, kind: input, shape index: {}]
  %s8 = inlined_call_operand.vmem [shape: f32[4,1,8], index: 8, kind: input, shape index: {}]
  %s9 = inlined_call_operand.vmem [shape: f32[4,6,8,8], index: 9, kind: output, shape index: {}]
  %s10 = sld [smem:[#allocation0]]
  $region69: #{gcn_vae_forward.5} parent=0
    _
  %s12 = ssub.s32 1, %s10
  %s13 = scalar_select 0, %s12, %s10
  loop: start=0, step=1, limit=6
  $region2: #{gcn_vae_forward.5} parent=0 // loop_pre_header
    _
  $region3: #{gcn_vae_forward.5} parent=0 // loop_header
    %s15 = sphi 0, %s19
    %p16 = scmp.ge.s32.totalorder %s15, 6
    %s25 = sphi 0, %s27
    %s28 = sphi 0, %s25
    %s29 = sphi 0, %s28
    %s45 = sphi 0, %s29
    %s51 = sphi 0, %s53
    %s54 = sphi 0, %s51
    %s55 = sphi 0, %s54
    %s71 = sphi 0, %s55
    %s77 = sphi 0, %s79
    %s80 = sphi 0, %s77
    %s81 = sphi 0, %s80
    %s97 = sphi 0, %s81
    %s103 = sphi 0, %s105
    %s106 = sphi 0, %s103
    %s107 = sphi 0, %s106
    %s123 = sphi 0, %s107
    %s129 = sphi 0, %s131
    %s132 = sphi 0, %s129
    %s133 = sphi 0, %s132
    %s149 = sphi 0, %s133
    %s155 = sphi 0, %s157
    %s158 = sphi 0, %s155
    %s159 = sphi 0, %s158
    %s175 = sphi 0, %s159
    %s181 = sphi 0, %s183
    %s184 = sphi 0, %s181
    %s185 = sphi 0, %s184
    %s201 = sphi 0, %s185
    %s207 = sphi 0, %s209
    %s210 = sphi 0, %s207
    %s211 = sphi 0, %s210
    %s227 = sphi 0, %s211
    %s233 = sphi 0, %s235
    %s236 = sphi 0, %s233
    %s237 = sphi 0, %s236
    %s253 = sphi 0, %s237
    %s259 = sphi 0, %s261
    %s262 = sphi 0, %s259
    %s263 = sphi 0, %s262
    %s279 = sphi 0, %s263
  $region4: #{gcn_vae_forward.5} parent=0 // loop_header_branch
    %18 = sbr.rel (%p16) target = $region8
  $region5: #{gcn_vae_forward.5} parent=0 // loop_body
    %s20 = ssub.s32 %s15, 1
    %s21 = ssub.s32 %s15, 2
    %s22 = sadd.s32 %s15, 1
    %s23 = ssub.s32 %s15, %s22
    %p24 = scmp.eq.s32.totalorder %s23, 0
    %s26 = sadd.s32 %s25, 1
    %s27 = scalar_select %p24, %s25, %s26
    %p30 = pneg %p24
    %p31 = scmp.eq.s32.totalorder %s15, 3
    %p32 = por %p30, %p31
    %p33 = scmp.ne.s32.totalorder %s25, %s28
    %p34 = scmp.eq.s32.totalorder %s15, 0
    %p35 = por %p33, %p34
    %p36 = scmp.ne.s32.totalorder %s25, %s28
    %p37 = scmp.eq.s32.totalorder %s20, 3
    %p38 = por %p36, %p37
    %p39 = scmp.ne.s32.totalorder %s28, %s29
    %p40 = scmp.eq.s32.totalorder %s20, 0
    %p41 = por %p39, %p40
    %p42 = scmp.ne.s32.totalorder %s28, %s29
    %p43 = scmp.eq.s32.totalorder %s21, 3
    %p44 = por %p42, %p43
    %p46 = scmp.ne.s32.totalorder %s29, %s45
    %p47 = scmp.eq.s32.totalorder %s21, 0
    %p48 = por %p46, %p47
    %s49 = ssub.s32 %s15, %s22
    %p50 = scmp.eq.s32.totalorder %s49, 0
    %s52 = sadd.s32 %s51, 1
    %s53 = scalar_select %p50, %s51, %s52
    %p56 = pneg %p50
    %p57 = scmp.eq.s32.totalorder %s15, 3
    %p58 = por %p56, %p57
    %p59 = scmp.ne.s32.totalorder %s51, %s54
    %p60 = scmp.eq.s32.totalorder %s15, 0
    %p61 = por %p59, %p60
    %p62 = scmp.ne.s32.totalorder %s51, %s54
    %p63 = scmp.eq.s32.totalorder %s20, 3
    %p64 = por %p62, %p63
    %p65 = scmp.ne.s32.totalorder %s54, %s55
    %p66 = scmp.eq.s32.totalorder %s20, 0
    %p67 = por %p65, %p66
    %p68 = scmp.ne.s32.totalorder %s54, %s55
    %p69 = scmp.eq.s32.totalorder %s21, 3
    %p70 = por %p68, %p69
    %p72 = scmp.ne.s32.totalorder %s55, %s71
    %p73 = scmp.eq.s32.totalorder %s21, 0
    %p74 = por %p72, %p73
    %s75 = ssub.s32 %s15, %s22
    %p76 = scmp.eq.s32.totalorder %s75, 0
    %s78 = sadd.s32 %s77, 1
    %s79 = scalar_select %p76, %s77, %s78
    %p82 = pneg %p76
    %p83 = scmp.eq.s32.totalorder %s15, 3
    %p84 = por %p82, %p83
    %p85 = scmp.ne.s32.totalorder %s77, %s80
    %p86 = scmp.eq.s32.totalorder %s15, 0
    %p87 = por %p85, %p86
    %p88 = scmp.ne.s32.totalorder %s77, %s80
    %p89 = scmp.eq.s32.totalorder %s20, 3
    %p90 = por %p88, %p89
    %p91 = scmp.ne.s32.totalorder %s80, %s81
    %p92 = scmp.eq.s32.totalorder %s20, 0
    %p93 = por %p91, %p92
    %p94 = scmp.ne.s32.totalorder %s80, %s81
    %p95 = scmp.eq.s32.totalorder %s21, 3
    %p96 = por %p94, %p95
    %p98 = scmp.ne.s32.totalorder %s81, %s97
    %p99 = scmp.eq.s32.totalorder %s21, 0
    %p100 = por %p98, %p99
    %s101 = ssub.s32 %s15, %s22
    %p102 = scmp.eq.s32.totalorder %s101, 0
    %s104 = sadd.s32 %s103, 1
    %s105 = scalar_select %p102, %s103, %s104
    %p108 = pneg %p102
    %p109 = scmp.eq.s32.totalorder %s15, 3
    %p110 = por %p108, %p109
    %p111 = scmp.ne.s32.totalorder %s103, %s106
    %p112 = scmp.eq.s32.totalorder %s15, 0
    %p113 = por %p111, %p112
    %p114 = scmp.ne.s32.totalorder %s103, %s106
    %p115 = scmp.eq.s32.totalorder %s20, 3
    %p116 = por %p114, %p115
    %p117 = scmp.ne.s32.totalorder %s106, %s107
    %p118 = scmp.eq.s32.totalorder %s20, 0
    %p119 = por %p117, %p118
    %p120 = scmp.ne.s32.totalorder %s106, %s107
    %p121 = scmp.eq.s32.totalorder %s21, 3
    %p122 = por %p120, %p121
    %p124 = scmp.ne.s32.totalorder %s107, %s123
    %p125 = scmp.eq.s32.totalorder %s21, 0
    %p126 = por %p124, %p125
    %s127 = ssub.s32 %s15, %s22
    %p128 = scmp.eq.s32.totalorder %s127, 0
    %s130 = sadd.s32 %s129, 1
    %s131 = scalar_select %p128, %s129, %s130
    %p134 = pneg %p128
    %p135 = scmp.eq.s32.totalorder %s15, 3
    %p136 = por %p134, %p135
    %p137 = scmp.ne.s32.totalorder %s129, %s132
    %p138 = scmp.eq.s32.totalorder %s15, 0
    %p139 = por %p137, %p138
    %p140 = scmp.ne.s32.totalorder %s129, %s132
    %p141 = scmp.eq.s32.totalorder %s20, 3
    %p142 = por %p140, %p141
    %p143 = scmp.ne.s32.totalorder %s132, %s133
    %p144 = scmp.eq.s32.totalorder %s20, 0
    %p145 = por %p143, %p144
    %p146 = scmp.ne.s32.totalorder %s132, %s133
    %p147 = scmp.eq.s32.totalorder %s21, 3
    %p148 = por %p146, %p147
    %p150 = scmp.ne.s32.totalorder %s133, %s149
    %p151 = scmp.eq.s32.totalorder %s21, 0
    %p152 = por %p150, %p151
    %s153 = ssub.s32 %s15, %s22
    %p154 = scmp.eq.s32.totalorder %s153, 0
    %s156 = sadd.s32 %s155, 1
    %s157 = scalar_select %p154, %s155, %s156
    %p160 = pneg %p154
    %p161 = scmp.eq.s32.totalorder %s15, 3
    %p162 = por %p160, %p161
    %p163 = scmp.ne.s32.totalorder %s155, %s158
    %p164 = scmp.eq.s32.totalorder %s15, 0
    %p165 = por %p163, %p164
    %p166 = scmp.ne.s32.totalorder %s155, %s158
    %p167 = scmp.eq.s32.totalorder %s20, 3
    %p168 = por %p166, %p167
    %p169 = scmp.ne.s32.totalorder %s158, %s159
    %p170 = scmp.eq.s32.totalorder %s20, 0
    %p171 = por %p169, %p170
    %p172 = scmp.ne.s32.totalorder %s158, %s159
    %p173 = scmp.eq.s32.totalorder %s21, 3
    %p174 = por %p172, %p173
    %p176 = scmp.ne.s32.totalorder %s159, %s175
    %p177 = scmp.eq.s32.totalorder %s21, 0
    %p178 = por %p176, %p177
    %s179 = ssub.s32 %s15, %s22
    %p180 = scmp.eq.s32.totalorder %s179, 0
    %s182 = sadd.s32 %s181, 1
    %s183 = scalar_select %p180, %s181, %s182
    %p186 = pneg %p180
    %p187 = scmp.eq.s32.totalorder %s15, 3
    %p188 = por %p186, %p187
    %p189 = scmp.ne.s32.totalorder %s181, %s184
    %p190 = scmp.eq.s32.totalorder %s15, 0
    %p191 = por %p189, %p190
    %p192 = scmp.ne.s32.totalorder %s181, %s184
    %p193 = scmp.eq.s32.totalorder %s20, 3
    %p194 = por %p192, %p193
    %p195 = scmp.ne.s32.totalorder %s184, %s185
    %p196 = scmp.eq.s32.totalorder %s20, 0
    %p197 = por %p195, %p196
    %p198 = scmp.ne.s32.totalorder %s184, %s185
    %p199 = scmp.eq.s32.totalorder %s21, 3
    %p200 = por %p198, %p199
    %p202 = scmp.ne.s32.totalorder %s185, %s201
    %p203 = scmp.eq.s32.totalorder %s21, 0
    %p204 = por %p202, %p203
    %s205 = ssub.s32 %s15, %s22
    %p206 = scmp.eq.s32.totalorder %s205, 0
    %s208 = sadd.s32 %s207, 1
    %s209 = scalar_select %p206, %s207, %s208
    %p212 = pneg %p206
    %p213 = scmp.eq.s32.totalorder %s15, 3
    %p214 = por %p212, %p213
    %p215 = scmp.ne.s32.totalorder %s207, %s210
    %p216 = scmp.eq.s32.totalorder %s15, 0
    %p217 = por %p215, %p216
    %p218 = scmp.ne.s32.totalorder %s207, %s210
    %p219 = scmp.eq.s32.totalorder %s20, 3
    %p220 = por %p218, %p219
    %p221 = scmp.ne.s32.totalorder %s210, %s211
    %p222 = scmp.eq.s32.totalorder %s20, 0
    %p223 = por %p221, %p222
    %p224 = scmp.ne.s32.totalorder %s210, %s211
    %p225 = scmp.eq.s32.totalorder %s21, 3
    %p226 = por %p224, %p225
    %p228 = scmp.ne.s32.totalorder %s211, %s227
    %p229 = scmp.eq.s32.totalorder %s21, 0
    %p230 = por %p228, %p229
    %s231 = ssub.s32 %s15, %s22
    %p232 = scmp.eq.s32.totalorder %s231, 0
    %s234 = sadd.s32 %s233, 1
    %s235 = scalar_select %p232, %s233, %s234
    %p238 = pneg %p232
    %p239 = scmp.eq.s32.totalorder %s15, 3
    %p240 = por %p238, %p239
    %p241 = scmp.ne.s32.totalorder %s233, %s236
    %p242 = scmp.eq.s32.totalorder %s15, 0
    %p243 = por %p241, %p242
    %p244 = scmp.ne.s32.totalorder %s233, %s236
    %p245 = scmp.eq.s32.totalorder %s20, 3
    %p246 = por %p244, %p245
    %p247 = scmp.ne.s32.totalorder %s236, %s237
    %p248 = scmp.eq.s32.totalorder %s20, 0
    %p249 = por %p247, %p248
    %p250 = scmp.ne.s32.totalorder %s236, %s237
    %p251 = scmp.eq.s32.totalorder %s21, 3
    %p252 = por %p250, %p251
    %p254 = scmp.ne.s32.totalorder %s237, %s253
    %p255 = scmp.eq.s32.totalorder %s21, 0
    %p256 = por %p254, %p255
    %s257 = ssub.s32 %s15, %s22
    %p258 = scmp.eq.s32.totalorder %s257, 0
    %s260 = sadd.s32 %s259, 1
    %s261 = scalar_select %p258, %s259, %s260
    %p264 = pneg %p258
    %p265 = scmp.eq.s32.totalorder %s15, 3
    %p266 = por %p264, %p265
    %p267 = scmp.ne.s32.totalorder %s259, %s262
    %p268 = scmp.eq.s32.totalorder %s15, 0
    %p269 = por %p267, %p268
    %p270 = scmp.ne.s32.totalorder %s259, %s262
    %p271 = scmp.eq.s32.totalorder %s20, 3
    %p272 = por %p270, %p271
    %p273 = scmp.ne.s32.totalorder %s262, %s263
    %p274 = scmp.eq.s32.totalorder %s20, 0
    %p275 = por %p273, %p274
    %p276 = scmp.ne.s32.totalorder %s262, %s263
    %p277 = scmp.eq.s32.totalorder %s21, 3
    %p278 = por %p276, %p277
    %p280 = scmp.ne.s32.totalorder %s263, %s279
    %p281 = scmp.eq.s32.totalorder %s21, 0
    %p282 = por %p280, %p281
    %p283 = scmp.le.s32.totalorder 1, %s15
    %p284 = scmp.lt.s32.totalorder %s15, 5
    %p285 = pnand %p283, %p284
    %p286 = pneg %p285
    // Predicated region
    $region9: #{gcn_vae_forward.5} parent=5 // pred_check
      _
    $region10: #{gcn_vae_forward.5} parent=5 // pred_check_branch
      %288 = sbr.rel (%p285) target = $region12
    $region11: #{gcn_vae_forward.5} parent=5 // pred_region
      %s289 = ssub.s32 %s15, 1
    $region12: #{gcn_vae_forward.5} parent=5 // pred_fallthru
      _
    %p290 = scmp.lt.s32.totalorder %s15, 4
    // Predicated region
    $region13: #{gcn_vae_forward.5} parent=5 // pred_check
      %p291 = pneg %p290
    $region14: #{gcn_vae_forward.5} parent=5 // pred_check_branch
      %293 = sbr.rel (%p291) target = $region16
    $region15: #{gcn_vae_forward.5} parent=5 // pred_region
      // Predicated region
      $region17: #{gcn_vae_forward.5} parent=15 // pred_check
        %p294 = pneg %p35
      $region18: #{gcn_vae_forward.5} parent=15 // pred_check_branch
        %296 = sbr.rel (%p294) target = $region20
      $region19: #{gcn_vae_forward.5} parent=15 // pred_region
        %p297 = scmp.lt.s32.totalorder %s15, 3
        %s298 = scalar_select %p297, %s15, 3
        %s299 = smul.addr %s298, 6
        %s300 = smul.addr %s299, 8
        %s301 = scalar_lea.vmem %s0, %s300
      $region20: #{gcn_vae_forward.5} parent=15 // pred_fallthru
        _
      // Predicated region
      $region21: #{gcn_vae_forward.5} parent=15 // pred_check
        %p302 = pneg %p61
      $region22: #{gcn_vae_forward.5} parent=15 // pred_check_branch
        %304 = sbr.rel (%p302) target = $region24
      $region23: #{gcn_vae_forward.5} parent=15 // pred_region
        %p305 = scmp.lt.s32.totalorder %s15, 3
        %s306 = scalar_select %p305, %s15, 3
        %s307 = smul.addr %s306, 2
        %s308 = smul.addr %s307, 8
        %s309 = scalar_lea.vmem %s1, %s308
      $region24: #{gcn_vae_forward.5} parent=15 // pred_fallthru
        _
      // Predicated region
      $region25: #{gcn_vae_forward.5} parent=15 // pred_check
        %p310 = pneg %p87
      $region26: #{gcn_vae_forward.5} parent=15 // pred_check_branch
        %312 = sbr.rel (%p310) target = $region28
      $region27: #{gcn_vae_forward.5} parent=15 // pred_region
        %p313 = scmp.lt.s32.totalorder %s15, 3
        %s314 = scalar_select %p313, %s15, 3
        %s315 = smul.addr %s314, 4
        %s316 = smul.addr %s315, 8
        %s317 = scalar_lea.vmem %s2, %s316
      $region28: #{gcn_vae_forward.5} parent=15 // pred_fallthru
        _
      // Predicated region
      $region29: #{gcn_vae_forward.5} parent=15 // pred_check
        %p318 = pneg %p113
      $region30: #{gcn_vae_forward.5} parent=15 // pred_check_branch
        %320 = sbr.rel (%p318) target = $region32
      $region31: #{gcn_vae_forward.5} parent=15 // pred_region
        %p321 = scmp.lt.s32.totalorder %s15, 3
        %s322 = scalar_select %p321, %s15, 3
        %s323 = smul.addr %s322, 4
        %s324 = smul.addr %s323, 8
        %s325 = scalar_lea.vmem %s3, %s324
      $region32: #{gcn_vae_forward.5} parent=15 // pred_fallthru
        _
      // Predicated region
      $region33: #{gcn_vae_forward.5} parent=15 // pred_check
        %p326 = pneg %p139
      $region34: #{gcn_vae_forward.5} parent=15 // pred_check_branch
        %328 = sbr.rel (%p326) target = $region36
      $region35: #{gcn_vae_forward.5} parent=15 // pred_region
        %p329 = scmp.lt.s32.totalorder %s15, 3
        %s330 = scalar_select %p329, %s15, 3
        %s331 = smul.addr %s330, 4
        %s332 = smul.addr %s331, 8
        %s333 = scalar_lea.vmem %s4, %s332
      $region36: #{gcn_vae_forward.5} parent=15 // pred_fallthru
        _
      // Predicated region
      $region37: #{gcn_vae_forward.5} parent=15 // pred_check
        %p334 = pneg %p165
      $region38: #{gcn_vae_forward.5} parent=15 // pred_check_branch
        %336 = sbr.rel (%p334) target = $region40
      $region39: #{gcn_vae_forward.5} parent=15 // pred_region
        %p337 = scmp.lt.s32.totalorder %s15, 3
        %s338 = scalar_select %p337, %s15, 3
        %s339 = smul.addr %s338, 2
        %s340 = scalar_lea.vmem %s5, %s339
      $region40: #{gcn_vae_forward.5} parent=15 // pred_fallthru
        _
      // Predicated region
      $region41: #{gcn_vae_forward.5} parent=15 // pred_check
        %p341 = pneg %p191
      $region42: #{gcn_vae_forward.5} parent=15 // pred_check_branch
        %343 = sbr.rel (%p341) target = $region44
      $region43: #{gcn_vae_forward.5} parent=15 // pred_region
        %p344 = scmp.lt.s32.totalorder %s15, 3
        %s345 = scalar_select %p344, %s15, 3
        %s346 = smul.addr %s345, 2
        %s347 = scalar_lea.vmem %s6, %s346
      $region44: #{gcn_vae_forward.5} parent=15 // pred_fallthru
        _
      // Predicated region
      $region45: #{gcn_vae_forward.5} parent=15 // pred_check
        %p348 = pneg %p217
      $region46: #{gcn_vae_forward.5} parent=15 // pred_check_branch
        %350 = sbr.rel (%p348) target = $region48
      $region47: #{gcn_vae_forward.5} parent=15 // pred_region
        %p351 = scmp.lt.s32.totalorder %s15, 3
        %s352 = scalar_select %p351, %s15, 3
        %s353 = smul.addr %s352, 4
        %s354 = smul.addr %s353, 8
        %s355 = scalar_lea.vmem %s7, %s354
      $region48: #{gcn_vae_forward.5} parent=15 // pred_fallthru
        _
      // Predicated region
      $region49: #{gcn_vae_forward.5} parent=15 // pred_check
        %p356 = pneg %p243
      $region50: #{gcn_vae_forward.5} parent=15 // pred_check_branch
        %358 = sbr.rel (%p356) target = $region52
      $region51: #{gcn_vae_forward.5} parent=15 // pred_region
        %p359 = scmp.lt.s32.totalorder %s15, 3
        %s360 = scalar_select %p359, %s15, 3
        %s361 = scalar_lea.vmem %s8, %s360
      $region52: #{gcn_vae_forward.5} parent=15 // pred_fallthru
        _
    $region16: #{gcn_vae_forward.5} parent=5 // pred_fallthru
      _
    %p362 = scmp.le.s32.totalorder 1, %s15
    %p363 = scmp.lt.s32.totalorder %s15, 5
    %p364 = pnand %p362, %p363
    %p365 = pneg %p364
    // Predicated region
    $region53: #{gcn_vae_forward.5} parent=5 // pred_check
      _
    $region54: #{gcn_vae_forward.5} parent=5 // pred_check_branch
      %367 = sbr.rel (%p364) target = $region56
    $region55: #{gcn_vae_forward.5} parent=5 // pred_region
      %s368 = ssub.s32 %s15, 1
      %p369 = scmp.lt.s32.totalorder %s20, 3
      %s370 = scalar_select %p369, %s20, 3
      %s371 = smul.addr %s370, 6
      %s372 = smul.addr %s371, 8
      %s373 = scalar_lea.vmem %s0, %s372
      %p374 = pneg %p41
      %p375 = pneg %p38
      %p376 = scmp.lt.s32.totalorder %s20, 3
      %s377 = scalar_select %p376, %s20, 3
      %s378 = smul.addr %s377, 2
      %s379 = smul.addr %s378, 8
      %s380 = scalar_lea.vmem %s1, %s379
      %p381 = pneg %p67
      %p382 = pneg %p64
      %p383 = scmp.lt.s32.totalorder %s20, 3
      %s384 = scalar_select %p383, %s20, 3
      %s385 = smul.addr %s384, 4
      %s386 = smul.addr %s385, 8
      %s387 = scalar_lea.vmem %s2, %s386
      %p388 = pneg %p93
      %p389 = pneg %p90
      %p390 = scmp.lt.s32.totalorder %s20, 3
      %s391 = scalar_select %p390, %s20, 3
      %s392 = smul.addr %s391, 4
      %s393 = smul.addr %s392, 8
      %s394 = scalar_lea.vmem %s3, %s393
      %p395 = pneg %p119
      %p396 = pneg %p116
      %p397 = scmp.lt.s32.totalorder %s20, 3
      %s398 = scalar_select %p397, %s20, 3
      %s399 = smul.addr %s398, 4
      %s400 = smul.addr %s399, 8
      %s401 = scalar_lea.vmem %s4, %s400
      %p402 = pneg %p145
      %p403 = pneg %p142
      %p404 = scmp.lt.s32.totalorder %s20, 3
      %s405 = scalar_select %p404, %s20, 3
      %s406 = smul.addr %s405, 2
      %s407 = scalar_lea.vmem %s5, %s406
      %p408 = pneg %p171
      %p409 = pneg %p168
      %p410 = scmp.lt.s32.totalorder %s20, 3
      %s411 = scalar_select %p410, %s20, 3
      %s412 = smul.addr %s411, 2
      %s413 = scalar_lea.vmem %s6, %s412
      %p414 = pneg %p197
      %p415 = pneg %p194
      %p416 = scmp.lt.s32.totalorder %s20, 3
      %s417 = scalar_select %p416, %s20, 3
      %s418 = smul.addr %s417, 4
      %s419 = smul.addr %s418, 8
      %s420 = scalar_lea.vmem %s7, %s419
      %p421 = pneg %p223
      %p422 = pneg %p220
      %p423 = scmp.lt.s32.totalorder %s20, 3
      %s424 = scalar_select %p423, %s20, 3
      %s425 = scalar_lea.vmem %s8, %s424
      %p426 = pneg %p249
      %p427 = pneg %p246
      %p428 = pneg %p275
      %p429 = pneg %p272
      %p430 = scmp.lt.s32.totalorder %s20, 3
      %s431 = scalar_select %p430, %s20, 3
      %s432 = smul.addr %s431, 6
      %s433 = smul.addr %s432, 8
      %s434 = scalar_lea.vmem %s9, %s433
      %p435 = scmp.lt.s32.totalorder %s20, 3
      %s436 = scalar_select %p435, %s20, 3
      %s437 = smul.addr %s436, 6
      %s438 = smul.addr %s437, 8
      %s439 = scalar_lea.vmem %s0, %s438
      %p440 = scmp.lt.s32.totalorder %s20, 3
      %s441 = scalar_select %p440, %s20, 3
      %s442 = smul.addr %s441, 2
      %s443 = smul.addr %s442, 8
      %s444 = scalar_lea.vmem %s1, %s443
      %p445 = scmp.lt.s32.totalorder %s20, 3
      %s446 = scalar_select %p445, %s20, 3
      %s447 = smul.addr %s446, 4
      %s448 = smul.addr %s447, 8
      %s449 = scalar_lea.vmem %s2, %s448
      %p450 = scmp.lt.s32.totalorder %s20, 3
      %s451 = scalar_select %p450, %s20, 3
      %s452 = smul.addr %s451, 4
      %s453 = smul.addr %s452, 8
      %s454 = scalar_lea.vmem %s3, %s453
      %p455 = scmp.lt.s32.totalorder %s20, 3
      %s456 = scalar_select %p455, %s20, 3
      %s457 = smul.addr %s456, 4
      %s458 = smul.addr %s457, 8
      %s459 = scalar_lea.vmem %s4, %s458
      %p460 = scmp.lt.s32.totalorder %s20, 3
      %s461 = scalar_select %p460, %s20, 3
      %s462 = smul.addr %s461, 2
      %s463 = scalar_lea.vmem %s5, %s462
      %p464 = scmp.lt.s32.totalorder %s20, 3
      %s465 = scalar_select %p464, %s20, 3
      %s466 = smul.addr %s465, 2
      %s467 = scalar_lea.vmem %s6, %s466
      %p468 = scmp.lt.s32.totalorder %s20, 3
      %s469 = scalar_select %p468, %s20, 3
      %s470 = smul.addr %s469, 4
      %s471 = smul.addr %s470, 8
      %s472 = scalar_lea.vmem %s7, %s471
      %p473 = scmp.lt.s32.totalorder %s20, 3
      %s474 = scalar_select %p473, %s20, 3
      %s475 = scalar_lea.vmem %s8, %s474
      %p476 = scmp.lt.s32.totalorder %s20, 3
      %s477 = scalar_select %p476, %s20, 3
      %s478 = smul.addr %s477, 6
      %s479 = smul.addr %s478, 8
      %s480 = scalar_lea.vmem %s9, %s479
      %v482 = vld [vmem:[%s439] sm:$0xff]
      %v483 = vld [vmem:[%s439 + $0x8] sm:$0xff]
      %v484 = vld [vmem:[%s439 + $0x10] sm:$0xff]
      %v485 = vld [vmem:[%s439 + $0x18] sm:$0xff]
      %v486 = vld [vmem:[%s439 + $0x20] sm:$0xff]
      %v487 = vld [vmem:[%s439 + $0x28] sm:$0xff]
      %v488 = vld [vmem:[%s444] sm:$0xff]
      %v489 = vld [vmem:[%s444 + $0x8] sm:$0xff]
      %v490 = vld [vmem:[%s449] sm:$0xff]
      %v491 = vld [vmem:[%s449 + $0x8] sm:$0xff]
      %v492 = vld [vmem:[%s449 + $0x10] sm:$0xff]
      %v493 = vld [vmem:[%s449 + $0x18] sm:$0xff]
      %v494 = vld [vmem:[%s454] sm:$0xff]
      %v495 = vld [vmem:[%s454 + $0x8] sm:$0xff]
      %v496 = vld [vmem:[%s454 + $0x10] sm:$0xff]
      %v497 = vld [vmem:[%s454 + $0x18] sm:$0xff]
      %v498 = vld [vmem:[%s459] sm:$0xff]
      %v499 = vld [vmem:[%s459 + $0x8] sm:$0xff]
      %v500 = vld [vmem:[%s459 + $0x10] sm:$0xff]
      %v501 = vld [vmem:[%s459 + $0x18] sm:$0xff]
      %v502 = vld [vmem:[%s463] sm:$0x3]
      %v503 = vld [vmem:[%s467] sm:$0x3]
      %v504 = vpack.c.bf16 %v483, %v482
      %v505 = vpack.c.bf16 %v485, %v484
      %v506 = vpack.c.bf16 %v487, %v486
      %v507 = vpack.c.bf16 %v489, %v488
      %v508 = vperm.slane %v502, 0
      %vm509 = vcmask 130048
      %v511 = vsel %vm509, %v504, 0
      %v514 = vsel %vm509, %v505, 0
      %v517 = vsel %vm509, %v506, 0
      %519 = vmatpush.bf16.msra.mxu0 0
      %520 = vmatpush.bf16.msra.mxu0 0
      %521 = vmatpush.bf16.msra.mxu0 0
      %522 = vmatpush.bf16.msra.mxu0 0
      %523 = vmatpush.bf16.msra.mxu0 0
      %524 = vmatpush.bf16.msra.mxu0 0
      %525 = vmatpush.bf16.msra.mxu0 0
      %526 = vmatpush.bf16.msra.mxu0 %v507
      %527 = vmatmul.bf16.gmra.mxu0 %v511
      %v528 = vpop.f32.mrf.mxu0
      %v529 = vadd.f32 %v508, %v528
      %v530 = vpop.f32.mrf.mxu0
      %v531 = vadd.f32 %v508, %v530
      %532 = vmatmul.bf16.gmra.mxu0 %v514
      %v533 = vpop.f32.mrf.mxu0
      %v534 = vadd.f32 %v508, %v533
      %v535 = vpop.f32.mrf.mxu0
      %v536 = vadd.f32 %v508, %v535
      %537 = vmatmul.bf16.gmra.mxu0 %v517
      %v538 = vpop.f32.mrf.mxu0
      %v539 = vadd.f32 %v508, %v538
      %v540 = vpop.f32.mrf.mxu0
      %v541 = vadd.f32 %v508, %v540
      %542 = vdwg.mxu0
      %vm543 = vcmask 785408
      %544 = vst.msk [vmem:[#allocation2] sm:$0xff] %vm543, %v529
      %545 = vst.msk [vmem:[#allocation2 + $0x8] sm:$0xff] %vm543, %v531
      %546 = vst.msk [vmem:[#allocation2 + $0x10] sm:$0xff] %vm543, %v534
      %547 = vst.msk [vmem:[#allocation2 + $0x18] sm:$0xff] %vm543, %v536
      %548 = vst.msk [vmem:[#allocation2 + $0x20] sm:$0xff] %vm543, %v539
      %549 = vst.msk [vmem:[#allocation2 + $0x28] sm:$0xff] %vm543, %v541
      %v550 = vpack.c.bf16 %v491, %v490
      %v551 = vpack.c.bf16 %v493, %v492
      %v552 = vpack.c.bf16 %v495, %v494
      %v553 = vpack.c.bf16 %v497, %v496
      %v554 = vpack.c.bf16 %v499, %v498
      %v555 = vpack.c.bf16 %v501, %v500
      %v556 = vld [vmem:[#allocation2] sm:$0xff]
      %vm557 = vcmask 261120
      %v559 = vsel %vm557, 0, 0
      %561 = vmatpush.bf16.msra.mxu0 0
      %562 = vmatpush.bf16.msra.mxu0 0
      %563 = vmatpush.bf16.msra.mxu0 0
      %564 = vmatpush.bf16.msra.mxu0 0
      %565 = vmatpush.bf16.msra.mxu0 0
      %566 = vmatpush.bf16.msra.mxu0 0
      %567 = vmatpush.bf16.msra.mxu0 %v551
      %568 = vmatpush.bf16.msra.mxu0 %v550
      %569 = vmatmul.bf16.gmra.mxu0 %v559
      %v570 = vpop.f32.mrf.mxu0
      %v571 = vadd.f32 0.0, %v570
      %v572 = vpop.f32.mrf.mxu0
      %573 = vdwg.mxu0
      %v574 = vadd.f32 %v556, %v571
      %v575 = vxor.u32 %v574, 2147483648
      %v576 = vmul.f32 %v575, 1.442695
      %v577 = vpow.pop %v576
      %v578 = vadd.f32 %v577, 1.0
      %v579 = vrcp.pop %v578
      %v580 = vmul.f32 %v578, %v579
      %v581 = vsub.f32 1.0, %v580
      %v582 = vmul.f32 %v579, %v581
      %v583 = vadd.f32 %v579, %v582
      %vm584 = vweird.f32 %v578
      %vm585 = vweird.f32 %v579
      %vm586 = vmor %vm584, %vm585
      %v587 = vsel %vm586, %v579, %v583
      %v588 = vand.u32 2147483647, %v578
      %vm589 = vcmp.eq.f32.partialorder %v588, 8.507059e+37
      %v590 = vand.u32 %v578, 2147483648
      %v591 = vor.u32 1.1754944e-38, %v590
      %v592 = vsel %vm589, %v591, %v587
      %v593 = vmul.f32 1.0, %v592
      %v594 = vperm.slane %v503, 0
      %596 = vrot.lane.b32.xlu0 %v594, 64
      %v597 = vpop.permute.xlu0 %596
      %v599 = vadd.f32 %v571, %v597
      %601 = vrot.lane.b32.xlu0 %v599, 64
      %v602 = vpop.permute.xlu0 %601
      %v604 = vmul.f32 %v593, %v602
      %606 = vrot.lane.b32.xlu0 %v604, 64
      %v607 = vpop.permute.xlu0 %606
      %v609 = vadd.f32 %v556, %v607
      %v610 = vtanh.pop %v609
      %v611 = vsub.f32 1.0, %v593
      %613 = vrot.lane.b32.xlu0 %v610, 96
      %v614 = vpop.permute.xlu0 %613
      %v616 = vmul.f32 %v611, %v614
      %v617 = vmul.f32 %v593, 0.0
      %v618 = vadd.f32 %v616, %v617
      %v619 = vpack.c.bf16 %v618, %v618
      %v620 = vperm.slane %v502, 1
      %622 = vrot.lane.b32.xlu0 %v619, 96
      %v623 = vpop.permute.xlu0 %622
      %v625 = vsel %vm557, %v623, 0
      %627 = vmatpush.bf16.msra.mxu0 0
      %628 = vmatpush.bf16.msra.mxu0 0
      %629 = vmatpush.bf16.msra.mxu0 0
      %630 = vmatpush.bf16.msra.mxu0 0
      %631 = vmatpush.bf16.msra.mxu0 0
      %632 = vmatpush.bf16.msra.mxu0 0
      %633 = vmatpush.bf16.msra.mxu0 %v553
      %634 = vmatpush.bf16.msra.mxu0 %v552
      %635 = vmatmul.bf16.gmra.mxu0 %v625
      %v636 = vpop.f32.mrf.mxu0
      %v637 = vadd.f32 %v620, %v636
      %v638 = vpop.f32.mrf.mxu0
      %639 = vdwg.mxu0
      %640 = vmatpush.bf16.msra.mxu0 0
      %641 = vmatpush.bf16.msra.mxu0 0
      %642 = vmatpush.bf16.msra.mxu0 0
      %643 = vmatpush.bf16.msra.mxu0 0
      %644 = vmatpush.bf16.msra.mxu0 0
      %645 = vmatpush.bf16.msra.mxu0 0
      %646 = vmatpush.bf16.msra.mxu0 %v555
      %647 = vmatpush.bf16.msra.mxu0 %v554
      %648 = vmatmul.bf16.gmra.mxu0 %v559
      %v649 = vpop.f32.mrf.mxu0
      %v650 = vadd.f32 0.0, %v649
      %v651 = vpop.f32.mrf.mxu0
      %652 = vdwg.mxu0
      %v653 = vadd.f32 %v637, %v650
      %v654 = vxor.u32 %v653, 2147483648
      %v655 = vmul.f32 %v654, 1.442695
      %v656 = vpow.pop %v655
      %v657 = vadd.f32 %v656, 1.0
      %v658 = vrcp.pop %v657
      %v659 = vmul.f32 %v657, %v658
      %v660 = vsub.f32 1.0, %v659
      %v661 = vmul.f32 %v658, %v660
      %v662 = vadd.f32 %v658, %v661
      %vm663 = vweird.f32 %v657
      %vm664 = vweird.f32 %v658
      %vm665 = vmor %vm663, %vm664
      %v666 = vsel %vm665, %v658, %v662
      %v667 = vand.u32 2147483647, %v657
      %vm668 = vcmp.eq.f32.partialorder %v667, 8.507059e+37
      %v669 = vand.u32 %v657, 2147483648
      %v670 = vor.u32 1.1754944e-38, %v669
      %v671 = vsel %vm668, %v670, %v666
      %v672 = vmul.f32 1.0, %v671
      %v673 = vperm.slane %v503, 1
      %675 = vrot.lane.b32.xlu0 %v673, 64
      %v676 = vpop.permute.xlu0 %675
      %v678 = vadd.f32 %v650, %v676
      %680 = vrot.lane.b32.xlu0 %v678, 64
      %v681 = vpop.permute.xlu0 %680
      %v683 = vmul.f32 %v672, %v681
      %685 = vrot.lane.b32.xlu0 %v683, 64
      %v686 = vpop.permute.xlu0 %685
      %v688 = vadd.f32 %v637, %v686
      %v689 = vtanh.pop %v688
      %v690 = vsub.f32 1.0, %v672
      %692 = vrot.lane.b32.xlu0 %v689, 96
      %v693 = vpop.permute.xlu0 %692
      %v695 = vmul.f32 %v690, %v693
      %v696 = vmul.f32 %v672, 0.0
      %v697 = vadd.f32 %v695, %v696
      %699 = vrot.lane.b32.xlu0 %v697, 96
      %v700 = vpop.permute.xlu0 %699
      %702 = vst.msk [vmem:[#allocation3] sm:$0xff] %vm557, %v700
      %s703 = scalar_lea.vmem [#allocation2], 8
      %v704 = vld [vmem:[%s703] sm:$0xff]
      %705 = vmatpush.bf16.msra.mxu0 0
      %706 = vmatpush.bf16.msra.mxu0 0
      %707 = vmatpush.bf16.msra.mxu0 0
      %708 = vmatpush.bf16.msra.mxu0 0
      %709 = vmatpush.bf16.msra.mxu0 0
      %710 = vmatpush.bf16.msra.mxu0 0
      %711 = vmatpush.bf16.msra.mxu0 %v551
      %712 = vmatpush.bf16.msra.mxu0 %v550
      %713 = vmatmul.bf16.gmra.mxu0 %v625
      %v714 = vpop.f32.mrf.mxu0
      %v715 = vadd.f32 0.0, %v714
      %v716 = vpop.f32.mrf.mxu0
      %717 = vdwg.mxu0
      %v718 = vadd.f32 %v704, %v715
      %v719 = vxor.u32 %v718, 2147483648
      %v720 = vmul.f32 %v719, 1.442695
      %v721 = vpow.pop %v720
      %v722 = vadd.f32 %v721, 1.0
      %v723 = vrcp.pop %v722
      %v724 = vmul.f32 %v722, %v723
      %v725 = vsub.f32 1.0, %v724
      %v726 = vmul.f32 %v723, %v725
      %v727 = vadd.f32 %v723, %v726
      %vm728 = vweird.f32 %v722
      %vm729 = vweird.f32 %v723
      %vm730 = vmor %vm728, %vm729
      %v731 = vsel %vm730, %v723, %v727
      %v732 = vand.u32 2147483647, %v722
      %vm733 = vcmp.eq.f32.partialorder %v732, 8.507059e+37
      %v734 = vand.u32 %v722, 2147483648
      %v735 = vor.u32 1.1754944e-38, %v734
      %v736 = vsel %vm733, %v735, %v731
      %v737 = vmul.f32 1.0, %v736
      %v738 = vadd.f32 %v715, %v597
      %740 = vrot.lane.b32.xlu0 %v738, 64
      %v741 = vpop.permute.xlu0 %740
      %v743 = vmul.f32 %v737, %v741
      %745 = vrot.lane.b32.xlu0 %v743, 64
      %v746 = vpop.permute.xlu0 %745
      %v748 = vadd.f32 %v704, %v746
      %v749 = vtanh.pop %v748
      %v750 = vsub.f32 1.0, %v737
      %752 = vrot.lane.b32.xlu0 %v749, 96
      %v753 = vpop.permute.xlu0 %752
      %v755 = vmul.f32 %v750, %v753
      %v756 = vmul.f32 %v737, %v618
      %v757 = vadd.f32 %v755, %v756
      %v758 = vpack.c.bf16 %v757, %v757
      %760 = vrot.lane.b32.xlu0 %v758, 96
      %v761 = vpop.permute.xlu0 %760
      %v763 = vsel %vm557, %v761, 0
      %765 = vmatpush.bf16.msra.mxu0 0
      %766 = vmatpush.bf16.msra.mxu0 0
      %767 = vmatpush.bf16.msra.mxu0 0
      %768 = vmatpush.bf16.msra.mxu0 0
      %769 = vmatpush.bf16.msra.mxu0 0
      %770 = vmatpush.bf16.msra.mxu0 0
      %771 = vmatpush.bf16.msra.mxu0 %v553
      %772 = vmatpush.bf16.msra.mxu0 %v552
      %773 = vmatmul.bf16.gmra.mxu0 %v763
      %v774 = vpop.f32.mrf.mxu0
      %v775 = vadd.f32 %v620, %v774
      %v776 = vpop.f32.mrf.mxu0
      %777 = vdwg.mxu0
      %v778 = vpack.c.bf16 %v697, %v697
      %780 = vrot.lane.b32.xlu0 %v778, 96
      %v781 = vpop.permute.xlu0 %780
      %v783 = vsel %vm557, %v781, 0
      %785 = vmatpush.bf16.msra.mxu0 0
      %786 = vmatpush.bf16.msra.mxu0 0
      %787 = vmatpush.bf16.msra.mxu0 0
      %788 = vmatpush.bf16.msra.mxu0 0
      %789 = vmatpush.bf16.msra.mxu0 0
      %790 = vmatpush.bf16.msra.mxu0 0
      %791 = vmatpush.bf16.msra.mxu0 %v555
      %792 = vmatpush.bf16.msra.mxu0 %v554
      %793 = vmatmul.bf16.gmra.mxu0 %v783
      %v794 = vpop.f32.mrf.mxu0
      %v795 = vadd.f32 0.0, %v794
      %v796 = vpop.f32.mrf.mxu0
      %797 = vdwg.mxu0
      %v798 = vadd.f32 %v775, %v795
      %v799 = vxor.u32 %v798, 2147483648
      %v800 = vmul.f32 %v799, 1.442695
      %v801 = vpow.pop %v800
      %v802 = vadd.f32 %v801, 1.0
      %v803 = vrcp.pop %v802
      %v804 = vmul.f32 %v802, %v803
      %v805 = vsub.f32 1.0, %v804
      %v806 = vmul.f32 %v803, %v805
      %v807 = vadd.f32 %v803, %v806
      %vm808 = vweird.f32 %v802
      %vm809 = vweird.f32 %v803
      %vm810 = vmor %vm808, %vm809
      %v811 = vsel %vm810, %v803, %v807
      %v812 = vand.u32 2147483647, %v802
      %vm813 = vcmp.eq.f32.partialorder %v812, 8.507059e+37
      %v814 = vand.u32 %v802, 2147483648
      %v815 = vor.u32 1.1754944e-38, %v814
      %v816 = vsel %vm813, %v815, %v811
      %v817 = vmul.f32 1.0, %v816
      %v818 = vadd.f32 %v795, %v676
      %820 = vrot.lane.b32.xlu0 %v818, 64
      %v821 = vpop.permute.xlu0 %820
      %v823 = vmul.f32 %v817, %v821
      %825 = vrot.lane.b32.xlu0 %v823, 64
      %v826 = vpop.permute.xlu0 %825
      %v828 = vadd.f32 %v775, %v826
      %v829 = vtanh.pop %v828
      %v830 = vsub.f32 1.0, %v817
      %832 = vrot.lane.b32.xlu0 %v829, 96
      %v833 = vpop.permute.xlu0 %832
      %v835 = vmul.f32 %v830, %v833
      %v836 = vmul.f32 %v817, %v697
      %v837 = vadd.f32 %v835, %v836
      %839 = vrot.lane.b32.xlu0 %v837, 96
      %v840 = vpop.permute.xlu0 %839
      %s842 = scalar_lea.vmem [#allocation3], 8
      %843 = vst.msk [vmem:[%s842] sm:$0xff] %vm557, %v840
      %s844 = scalar_lea.vmem [#allocation2], 16
      %v845 = vld [vmem:[%s844] sm:$0xff]
      %846 = vmatpush.bf16.msra.mxu0 0
      %847 = vmatpush.bf16.msra.mxu0 0
      %848 = vmatpush.bf16.msra.mxu0 0
      %849 = vmatpush.bf16.msra.mxu0 0
      %850 = vmatpush.bf16.msra.mxu0 0
      %851 = vmatpush.bf16.msra.mxu0 0
      %852 = vmatpush.bf16.msra.mxu0 %v551
      %853 = vmatpush.bf16.msra.mxu0 %v550
      %854 = vmatmul.bf16.gmra.mxu0 %v763
      %v855 = vpop.f32.mrf.mxu0
      %v856 = vadd.f32 0.0, %v855
      %v857 = vpop.f32.mrf.mxu0
      %858 = vdwg.mxu0
      %v859 = vadd.f32 %v845, %v856
      %v860 = vxor.u32 %v859, 2147483648
      %v861 = vmul.f32 %v860, 1.442695
      %v862 = vpow.pop %v861
      %v863 = vadd.f32 %v862, 1.0
      %v864 = vrcp.pop %v863
      %v865 = vmul.f32 %v863, %v864
      %v866 = vsub.f32 1.0, %v865
      %v867 = vmul.f32 %v864, %v866
      %v868 = vadd.f32 %v864, %v867
      %vm869 = vweird.f32 %v863
      %vm870 = vweird.f32 %v864
      %vm871 = vmor %vm869, %vm870
      %v872 = vsel %vm871, %v864, %v868
      %v873 = vand.u32 2147483647, %v863
      %vm874 = vcmp.eq.f32.partialorder %v873, 8.507059e+37
      %v875 = vand.u32 %v863, 2147483648
      %v876 = vor.u32 1.1754944e-38, %v875
      %v877 = vsel %vm874, %v876, %v872
      %v878 = vmul.f32 1.0, %v877
      %v879 = vadd.f32 %v856, %v597
      %881 = vrot.lane.b32.xlu0 %v879, 64
      %v882 = vpop.permute.xlu0 %881
      %v884 = vmul.f32 %v878, %v882
      %886 = vrot.lane.b32.xlu0 %v884, 64
      %v887 = vpop.permute.xlu0 %886
      %v889 = vadd.f32 %v845, %v887
      %v890 = vtanh.pop %v889
      %v891 = vsub.f32 1.0, %v878
      %893 = vrot.lane.b32.xlu0 %v890, 96
      %v894 = vpop.permute.xlu0 %893
      %v896 = vmul.f32 %v891, %v894
      %v897 = vmul.f32 %v878, %v757
      %v898 = vadd.f32 %v896, %v897
      %v899 = vpack.c.bf16 %v898, %v898
      %901 = vrot.lane.b32.xlu0 %v899, 96
      %v902 = vpop.permute.xlu0 %901
      %v904 = vsel %vm557, %v902, 0
      %906 = vmatpush.bf16.msra.mxu0 0
      %907 = vmatpush.bf16.msra.mxu0 0
      %908 = vmatpush.bf16.msra.mxu0 0
      %909 = vmatpush.bf16.msra.mxu0 0
      %910 = vmatpush.bf16.msra.mxu0 0
      %911 = vmatpush.bf16.msra.mxu0 0
      %912 = vmatpush.bf16.msra.mxu0 %v553
      %913 = vmatpush.bf16.msra.mxu0 %v552
      %914 = vmatmul.bf16.gmra.mxu0 %v904
      %v915 = vpop.f32.mrf.mxu0
      %v916 = vadd.f32 %v620, %v915
      %v917 = vpop.f32.mrf.mxu0
      %918 = vdwg.mxu0
      %v919 = vpack.c.bf16 %v837, %v837
      %921 = vrot.lane.b32.xlu0 %v919, 96
      %v922 = vpop.permute.xlu0 %921
      %v924 = vsel %vm557, %v922, 0
      %926 = vmatpush.bf16.msra.mxu0 0
      %927 = vmatpush.bf16.msra.mxu0 0
      %928 = vmatpush.bf16.msra.mxu0 0
      %929 = vmatpush.bf16.msra.mxu0 0
      %930 = vmatpush.bf16.msra.mxu0 0
      %931 = vmatpush.bf16.msra.mxu0 0
      %932 = vmatpush.bf16.msra.mxu0 %v555
      %933 = vmatpush.bf16.msra.mxu0 %v554
      %934 = vmatmul.bf16.gmra.mxu0 %v924
      %v935 = vpop.f32.mrf.mxu0
      %v936 = vadd.f32 0.0, %v935
      %v937 = vpop.f32.mrf.mxu0
      %938 = vdwg.mxu0
      %v939 = vadd.f32 %v916, %v936
      %v940 = vxor.u32 %v939, 2147483648
      %v941 = vmul.f32 %v940, 1.442695
      %v942 = vpow.pop %v941
      %v943 = vadd.f32 %v942, 1.0
      %v944 = vrcp.pop %v943
      %v945 = vmul.f32 %v943, %v944
      %v946 = vsub.f32 1.0, %v945
      %v947 = vmul.f32 %v944, %v946
      %v948 = vadd.f32 %v944, %v947
      %vm949 = vweird.f32 %v943
      %vm950 = vweird.f32 %v944
      %vm951 = vmor %vm949, %vm950
      %v952 = vsel %vm951, %v944, %v948
      %v953 = vand.u32 2147483647, %v943
      %vm954 = vcmp.eq.f32.partialorder %v953, 8.507059e+37
      %v955 = vand.u32 %v943, 2147483648
      %v956 = vor.u32 1.1754944e-38, %v955
      %v957 = vsel %vm954, %v956, %v952
      %v958 = vmul.f32 1.0, %v957
      %v959 = vadd.f32 %v936, %v676
      %961 = vrot.lane.b32.xlu0 %v959, 64
      %v962 = vpop.permute.xlu0 %961
      %v964 = vmul.f32 %v958, %v962
      %966 = vrot.lane.b32.xlu0 %v964, 64
      %v967 = vpop.permute.xlu0 %966
      %v969 = vadd.f32 %v916, %v967
      %v970 = vtanh.pop %v969
      %v971 = vsub.f32 1.0, %v958
      %973 = vrot.lane.b32.xlu0 %v970, 96
      %v974 = vpop.permute.xlu0 %973
      %v976 = vmul.f32 %v971, %v974
      %v977 = vmul.f32 %v958, %v837
      %v978 = vadd.f32 %v976, %v977
      %980 = vrot.lane.b32.xlu0 %v978, 96
      %v981 = vpop.permute.xlu0 %980
      %s983 = scalar_lea.vmem [#allocation3], 16
      %984 = vst.msk [vmem:[%s983] sm:$0xff] %vm557, %v981
      %s985 = scalar_lea.vmem [#allocation2], 24
      %v986 = vld [vmem:[%s985] sm:$0xff]
      %987 = vmatpush.bf16.msra.mxu0 0
      %988 = vmatpush.bf16.msra.mxu0 0
      %989 = vmatpush.bf16.msra.mxu0 0
      %990 = vmatpush.bf16.msra.mxu0 0
      %991 = vmatpush.bf16.msra.mxu0 0
      %992 = vmatpush.bf16.msra.mxu0 0
      %993 = vmatpush.bf16.msra.mxu0 %v551
      %994 = vmatpush.bf16.msra.mxu0 %v550
      %995 = vmatmul.bf16.gmra.mxu0 %v904
      %v996 = vpop.f32.mrf.mxu0
      %v997 = vadd.f32 0.0, %v996
      %v998 = vpop.f32.mrf.mxu0
      %999 = vdwg.mxu0
      %v1000 = vadd.f32 %v986, %v997
      %v1001 = vxor.u32 %v1000, 2147483648
      %v1002 = vmul.f32 %v1001, 1.442695
      %v1003 = vpow.pop %v1002
      %v1004 = vadd.f32 %v1003, 1.0
      %v1005 = vrcp.pop %v1004
      %v1006 = vmul.f32 %v1004, %v1005
      %v1007 = vsub.f32 1.0, %v1006
      %v1008 = vmul.f32 %v1005, %v1007
      %v1009 = vadd.f32 %v1005, %v1008
      %vm1010 = vweird.f32 %v1004
      %vm1011 = vweird.f32 %v1005
      %vm1012 = vmor %vm1010, %vm1011
      %v1013 = vsel %vm1012, %v1005, %v1009
      %v1014 = vand.u32 2147483647, %v1004
      %vm1015 = vcmp.eq.f32.partialorder %v1014, 8.507059e+37
      %v1016 = vand.u32 %v1004, 2147483648
      %v1017 = vor.u32 1.1754944e-38, %v1016
      %v1018 = vsel %vm1015, %v1017, %v1013
      %v1019 = vmul.f32 1.0, %v1018
      %v1020 = vadd.f32 %v997, %v597
      %1022 = vrot.lane.b32.xlu0 %v1020, 64
      %v1023 = vpop.permute.xlu0 %1022
      %v1025 = vmul.f32 %v1019, %v1023
      %1027 = vrot.lane.b32.xlu0 %v1025, 64
      %v1028 = vpop.permute.xlu0 %1027
      %v1030 = vadd.f32 %v986, %v1028
      %v1031 = vtanh.pop %v1030
      %v1032 = vsub.f32 1.0, %v1019
      %1034 = vrot.lane.b32.xlu0 %v1031, 96
      %v1035 = vpop.permute.xlu0 %1034
      %v1037 = vmul.f32 %v1032, %v1035
      %v1038 = vmul.f32 %v1019, %v898
      %v1039 = vadd.f32 %v1037, %v1038
      %v1040 = vpack.c.bf16 %v1039, %v1039
      %1042 = vrot.lane.b32.xlu0 %v1040, 96
      %v1043 = vpop.permute.xlu0 %1042
      %v1045 = vsel %vm557, %v1043, 0
      %1047 = vmatpush.bf16.msra.mxu0 0
      %1048 = vmatpush.bf16.msra.mxu0 0
      %1049 = vmatpush.bf16.msra.mxu0 0
      %1050 = vmatpush.bf16.msra.mxu0 0
      %1051 = vmatpush.bf16.msra.mxu0 0
      %1052 = vmatpush.bf16.msra.mxu0 0
      %1053 = vmatpush.bf16.msra.mxu0 %v553
      %1054 = vmatpush.bf16.msra.mxu0 %v552
      %1055 = vmatmul.bf16.gmra.mxu0 %v1045
      %v1056 = vpop.f32.mrf.mxu0
      %v1057 = vadd.f32 %v620, %v1056
      %v1058 = vpop.f32.mrf.mxu0
      %1059 = vdwg.mxu0
      %v1060 = vpack.c.bf16 %v978, %v978
      %1062 = vrot.lane.b32.xlu0 %v1060, 96
      %v1063 = vpop.permute.xlu0 %1062
      %v1065 = vsel %vm557, %v1063, 0
      %1067 = vmatpush.bf16.msra.mxu0 0
      %1068 = vmatpush.bf16.msra.mxu0 0
      %1069 = vmatpush.bf16.msra.mxu0 0
      %1070 = vmatpush.bf16.msra.mxu0 0
      %1071 = vmatpush.bf16.msra.mxu0 0
      %1072 = vmatpush.bf16.msra.mxu0 0
      %1073 = vmatpush.bf16.msra.mxu0 %v555
      %1074 = vmatpush.bf16.msra.mxu0 %v554
      %1075 = vmatmul.bf16.gmra.mxu0 %v1065
      %v1076 = vpop.f32.mrf.mxu0
      %v1077 = vadd.f32 0.0, %v1076
      %v1078 = vpop.f32.mrf.mxu0
      %1079 = vdwg.mxu0
      %v1080 = vadd.f32 %v1057, %v1077
      %v1081 = vxor.u32 %v1080, 2147483648
      %v1082 = vmul.f32 %v1081, 1.442695
      %v1083 = vpow.pop %v1082
      %v1084 = vadd.f32 %v1083, 1.0
      %v1085 = vrcp.pop %v1084
      %v1086 = vmul.f32 %v1084, %v1085
      %v1087 = vsub.f32 1.0, %v1086
      %v1088 = vmul.f32 %v1085, %v1087
      %v1089 = vadd.f32 %v1085, %v1088
      %vm1090 = vweird.f32 %v1084
      %vm1091 = vweird.f32 %v1085
      %vm1092 = vmor %vm1090, %vm1091
      %v1093 = vsel %vm1092, %v1085, %v1089
      %v1094 = vand.u32 2147483647, %v1084
      %vm1095 = vcmp.eq.f32.partialorder %v1094, 8.507059e+37
      %v1096 = vand.u32 %v1084, 2147483648
      %v1097 = vor.u32 1.1754944e-38, %v1096
      %v1098 = vsel %vm1095, %v1097, %v1093
      %v1099 = vmul.f32 1.0, %v1098
      %v1100 = vadd.f32 %v1077, %v676
      %1102 = vrot.lane.b32.xlu0 %v1100, 64
      %v1103 = vpop.permute.xlu0 %1102
      %v1105 = vmul.f32 %v1099, %v1103
      %1107 = vrot.lane.b32.xlu0 %v1105, 64
      %v1108 = vpop.permute.xlu0 %1107
      %v1110 = vadd.f32 %v1057, %v1108
      %v1111 = vtanh.pop %v1110
      %v1112 = vsub.f32 1.0, %v1099
      %1114 = vrot.lane.b32.xlu0 %v1111, 96
      %v1115 = vpop.permute.xlu0 %1114
      %v1117 = vmul.f32 %v1112, %v1115
      %v1118 = vmul.f32 %v1099, %v978
      %v1119 = vadd.f32 %v1117, %v1118
      %1121 = vrot.lane.b32.xlu0 %v1119, 96
      %v1122 = vpop.permute.xlu0 %1121
      %s1124 = scalar_lea.vmem [#allocation3], 24
      %1125 = vst.msk [vmem:[%s1124] sm:$0xff] %vm557, %v1122
      %s1126 = scalar_lea.vmem [#allocation2], 32
      %v1127 = vld [vmem:[%s1126] sm:$0xff]
      %1128 = vmatpush.bf16.msra.mxu0 0
      %1129 = vmatpush.bf16.msra.mxu0 0
      %1130 = vmatpush.bf16.msra.mxu0 0
      %1131 = vmatpush.bf16.msra.mxu0 0
      %1132 = vmatpush.bf16.msra.mxu0 0
      %1133 = vmatpush.bf16.msra.mxu0 0
      %1134 = vmatpush.bf16.msra.mxu0 %v551
      %1135 = vmatpush.bf16.msra.mxu0 %v550
      %1136 = vmatmul.bf16.gmra.mxu0 %v1045
      %v1137 = vpop.f32.mrf.mxu0
      %v1138 = vadd.f32 0.0, %v1137
      %v1139 = vpop.f32.mrf.mxu0
      %1140 = vdwg.mxu0
      %v1141 = vadd.f32 %v1127, %v1138
      %v1142 = vxor.u32 %v1141, 2147483648
      %v1143 = vmul.f32 %v1142, 1.442695
      %v1144 = vpow.pop %v1143
      %v1145 = vadd.f32 %v1144, 1.0
      %v1146 = vrcp.pop %v1145
      %v1147 = vmul.f32 %v1145, %v1146
      %v1148 = vsub.f32 1.0, %v1147
      %v1149 = vmul.f32 %v1146, %v1148
      %v1150 = vadd.f32 %v1146, %v1149
      %vm1151 = vweird.f32 %v1145
      %vm1152 = vweird.f32 %v1146
      %vm1153 = vmor %vm1151, %vm1152
      %v1154 = vsel %vm1153, %v1146, %v1150
      %v1155 = vand.u32 2147483647, %v1145
      %vm1156 = vcmp.eq.f32.partialorder %v1155, 8.507059e+37
      %v1157 = vand.u32 %v1145, 2147483648
      %v1158 = vor.u32 1.1754944e-38, %v1157
      %v1159 = vsel %vm1156, %v1158, %v1154
      %v1160 = vmul.f32 1.0, %v1159
      %v1161 = vadd.f32 %v1138, %v597
      %1163 = vrot.lane.b32.xlu0 %v1161, 64
      %v1164 = vpop.permute.xlu0 %1163
      %v1166 = vmul.f32 %v1160, %v1164
      %1168 = vrot.lane.b32.xlu0 %v1166, 64
      %v1169 = vpop.permute.xlu0 %1168
      %v1171 = vadd.f32 %v1127, %v1169
      %v1172 = vtanh.pop %v1171
      %v1173 = vsub.f32 1.0, %v1160
      %1175 = vrot.lane.b32.xlu0 %v1172, 96
      %v1176 = vpop.permute.xlu0 %1175
      %v1178 = vmul.f32 %v1173, %v1176
      %v1179 = vmul.f32 %v1160, %v1039
      %v1180 = vadd.f32 %v1178, %v1179
      %v1181 = vpack.c.bf16 %v1180, %v1180
      %1183 = vrot.lane.b32.xlu0 %v1181, 96
      %v1184 = vpop.permute.xlu0 %1183
      %v1186 = vsel %vm557, %v1184, 0
      %1188 = vmatpush.bf16.msra.mxu0 0
      %1189 = vmatpush.bf16.msra.mxu0 0
      %1190 = vmatpush.bf16.msra.mxu0 0
      %1191 = vmatpush.bf16.msra.mxu0 0
      %1192 = vmatpush.bf16.msra.mxu0 0
      %1193 = vmatpush.bf16.msra.mxu0 0
      %1194 = vmatpush.bf16.msra.mxu0 %v553
      %1195 = vmatpush.bf16.msra.mxu0 %v552
      %1196 = vmatmul.bf16.gmra.mxu0 %v1186
      %v1197 = vpop.f32.mrf.mxu0
      %v1198 = vadd.f32 %v620, %v1197
      %v1199 = vpop.f32.mrf.mxu0
      %1200 = vdwg.mxu0
      %v1201 = vpack.c.bf16 %v1119, %v1119
      %1203 = vrot.lane.b32.xlu0 %v1201, 96
      %v1204 = vpop.permute.xlu0 %1203
      %v1206 = vsel %vm557, %v1204, 0
      %1208 = vmatpush.bf16.msra.mxu0 0
      %1209 = vmatpush.bf16.msra.mxu0 0
      %1210 = vmatpush.bf16.msra.mxu0 0
      %1211 = vmatpush.bf16.msra.mxu0 0
      %1212 = vmatpush.bf16.msra.mxu0 0
      %1213 = vmatpush.bf16.msra.mxu0 0
      %1214 = vmatpush.bf16.msra.mxu0 %v555
      %1215 = vmatpush.bf16.msra.mxu0 %v554
      %1216 = vmatmul.bf16.gmra.mxu0 %v1206
      %v1217 = vpop.f32.mrf.mxu0
      %v1218 = vadd.f32 0.0, %v1217
      %v1219 = vpop.f32.mrf.mxu0
      %1220 = vdwg.mxu0
      %v1221 = vadd.f32 %v1198, %v1218
      %v1222 = vxor.u32 %v1221, 2147483648
      %v1223 = vmul.f32 %v1222, 1.442695
      %v1224 = vpow.pop %v1223
      %v1225 = vadd.f32 %v1224, 1.0
      %v1226 = vrcp.pop %v1225
      %v1227 = vmul.f32 %v1225, %v1226
      %v1228 = vsub.f32 1.0, %v1227
      %v1229 = vmul.f32 %v1226, %v1228
      %v1230 = vadd.f32 %v1226, %v1229
      %vm1231 = vweird.f32 %v1225
      %vm1232 = vweird.f32 %v1226
      %vm1233 = vmor %vm1231, %vm1232
      %v1234 = vsel %vm1233, %v1226, %v1230
      %v1235 = vand.u32 2147483647, %v1225
      %vm1236 = vcmp.eq.f32.partialorder %v1235, 8.507059e+37
      %v1237 = vand.u32 %v1225, 2147483648
      %v1238 = vor.u32 1.1754944e-38, %v1237
      %v1239 = vsel %vm1236, %v1238, %v1234
      %v1240 = vmul.f32 1.0, %v1239
      %v1241 = vadd.f32 %v1218, %v676
      %1243 = vrot.lane.b32.xlu0 %v1241, 64
      %v1244 = vpop.permute.xlu0 %1243
      %v1246 = vmul.f32 %v1240, %v1244
      %1248 = vrot.lane.b32.xlu0 %v1246, 64
      %v1249 = vpop.permute.xlu0 %1248
      %v1251 = vadd.f32 %v1198, %v1249
      %v1252 = vtanh.pop %v1251
      %v1253 = vsub.f32 1.0, %v1240
      %1255 = vrot.lane.b32.xlu0 %v1252, 96
      %v1256 = vpop.permute.xlu0 %1255
      %v1258 = vmul.f32 %v1253, %v1256
      %v1259 = vmul.f32 %v1240, %v1119
      %v1260 = vadd.f32 %v1258, %v1259
      %1262 = vrot.lane.b32.xlu0 %v1260, 96
      %v1263 = vpop.permute.xlu0 %1262
      %s1265 = scalar_lea.vmem [#allocation3], 32
      %1266 = vst.msk [vmem:[%s1265] sm:$0xff] %vm557, %v1263
      %s1267 = scalar_lea.vmem [#allocation2], 40
      %v1268 = vld [vmem:[%s1267] sm:$0xff]
      %1269 = vmatpush.bf16.msra.mxu0 0
      %1270 = vmatpush.bf16.msra.mxu0 0
      %1271 = vmatpush.bf16.msra.mxu0 0
      %1272 = vmatpush.bf16.msra.mxu0 0
      %1273 = vmatpush.bf16.msra.mxu0 0
      %1274 = vmatpush.bf16.msra.mxu0 0
      %1275 = vmatpush.bf16.msra.mxu0 %v551
      %1276 = vmatpush.bf16.msra.mxu0 %v550
      %1277 = vmatmul.bf16.gmra.mxu0 %v1186
      %v1278 = vpop.f32.mrf.mxu0
      %v1279 = vadd.f32 0.0, %v1278
      %v1280 = vpop.f32.mrf.mxu0
      %1281 = vdwg.mxu0
      %v1282 = vadd.f32 %v1268, %v1279
      %v1283 = vxor.u32 %v1282, 2147483648
      %v1284 = vmul.f32 %v1283, 1.442695
      %v1285 = vpow.pop %v1284
      %v1286 = vadd.f32 %v1285, 1.0
      %v1287 = vrcp.pop %v1286
      %v1288 = vmul.f32 %v1286, %v1287
      %v1289 = vsub.f32 1.0, %v1288
      %v1290 = vmul.f32 %v1287, %v1289
      %v1291 = vadd.f32 %v1287, %v1290
      %vm1292 = vweird.f32 %v1286
      %vm1293 = vweird.f32 %v1287
      %vm1294 = vmor %vm1292, %vm1293
      %v1295 = vsel %vm1294, %v1287, %v1291
      %v1296 = vand.u32 2147483647, %v1286
      %vm1297 = vcmp.eq.f32.partialorder %v1296, 8.507059e+37
      %v1298 = vand.u32 %v1286, 2147483648
      %v1299 = vor.u32 1.1754944e-38, %v1298
      %v1300 = vsel %vm1297, %v1299, %v1295
      %v1301 = vmul.f32 1.0, %v1300
      %v1302 = vadd.f32 %v1279, %v597
      %1304 = vrot.lane.b32.xlu0 %v1302, 64
      %v1305 = vpop.permute.xlu0 %1304
      %v1307 = vmul.f32 %v1301, %v1305
      %1309 = vrot.lane.b32.xlu0 %v1307, 64
      %v1310 = vpop.permute.xlu0 %1309
      %v1312 = vadd.f32 %v1268, %v1310
      %v1313 = vtanh.pop %v1312
      %v1314 = vsub.f32 1.0, %v1301
      %1316 = vrot.lane.b32.xlu0 %v1313, 96
      %v1317 = vpop.permute.xlu0 %1316
      %v1319 = vmul.f32 %v1314, %v1317
      %v1320 = vmul.f32 %v1301, %v1180
      %v1321 = vadd.f32 %v1319, %v1320
      %v1322 = vpack.c.bf16 %v1321, %v1321
      %1324 = vrot.lane.b32.xlu0 %v1322, 96
      %v1325 = vpop.permute.xlu0 %1324
      %v1327 = vsel %vm557, %v1325, 0
      %1329 = vmatpush.bf16.msra.mxu0 0
      %1330 = vmatpush.bf16.msra.mxu0 0
      %1331 = vmatpush.bf16.msra.mxu0 0
      %1332 = vmatpush.bf16.msra.mxu0 0
      %1333 = vmatpush.bf16.msra.mxu0 0
      %1334 = vmatpush.bf16.msra.mxu0 0
      %1335 = vmatpush.bf16.msra.mxu0 %v553
      %1336 = vmatpush.bf16.msra.mxu0 %v552
      %1337 = vmatmul.bf16.gmra.mxu0 %v1327
      %v1338 = vpop.f32.mrf.mxu0
      %v1339 = vadd.f32 %v620, %v1338
      %v1340 = vpop.f32.mrf.mxu0
      %1341 = vdwg.mxu0
      %v1342 = vpack.c.bf16 %v1260, %v1260
      %1344 = vrot.lane.b32.xlu0 %v1342, 96
      %v1345 = vpop.permute.xlu0 %1344
      %v1347 = vsel %vm557, %v1345, 0
      %1349 = vmatpush.bf16.msra.mxu0 0
      %1350 = vmatpush.bf16.msra.mxu0 0
      %1351 = vmatpush.bf16.msra.mxu0 0
      %1352 = vmatpush.bf16.msra.mxu0 0
      %1353 = vmatpush.bf16.msra.mxu0 0
      %1354 = vmatpush.bf16.msra.mxu0 0
      %1355 = vmatpush.bf16.msra.mxu0 %v555
      %1356 = vmatpush.bf16.msra.mxu0 %v554
      %1357 = vmatmul.bf16.gmra.mxu0 %v1347
      %v1358 = vpop.f32.mrf.mxu0
      %v1359 = vadd.f32 0.0, %v1358
      %v1360 = vpop.f32.mrf.mxu0
      %1361 = vdwg.mxu0
      %v1362 = vadd.f32 %v1339, %v1359
      %v1363 = vxor.u32 %v1362, 2147483648
      %v1364 = vmul.f32 %v1363, 1.442695
      %v1365 = vpow.pop %v1364
      %v1366 = vadd.f32 %v1365, 1.0
      %v1367 = vrcp.pop %v1366
      %v1368 = vmul.f32 %v1366, %v1367
      %v1369 = vsub.f32 1.0, %v1368
      %v1370 = vmul.f32 %v1367, %v1369
      %v1371 = vadd.f32 %v1367, %v1370
      %vm1372 = vweird.f32 %v1366
      %vm1373 = vweird.f32 %v1367
      %vm1374 = vmor %vm1372, %vm1373
      %v1375 = vsel %vm1374, %v1367, %v1371
      %v1376 = vand.u32 2147483647, %v1366
      %vm1377 = vcmp.eq.f32.partialorder %v1376, 8.507059e+37
      %v1378 = vand.u32 %v1366, 2147483648
      %v1379 = vor.u32 1.1754944e-38, %v1378
      %v1380 = vsel %vm1377, %v1379, %v1375
      %v1381 = vmul.f32 1.0, %v1380
      %v1382 = vadd.f32 %v1359, %v676
      %1384 = vrot.lane.b32.xlu0 %v1382, 64
      %v1385 = vpop.permute.xlu0 %1384
      %v1387 = vmul.f32 %v1381, %v1385
      %1389 = vrot.lane.b32.xlu0 %v1387, 64
      %v1390 = vpop.permute.xlu0 %1389
      %v1392 = vadd.f32 %v1339, %v1390
      %v1393 = vtanh.pop %v1392
      %v1394 = vsub.f32 1.0, %v1381
      %1396 = vrot.lane.b32.xlu0 %v1393, 96
      %v1397 = vpop.permute.xlu0 %1396
      %v1399 = vmul.f32 %v1394, %v1397
      %v1400 = vmul.f32 %v1381, %v1260
      %v1401 = vadd.f32 %v1399, %v1400
      %1403 = vrot.lane.b32.xlu0 %v1401, 96
      %v1404 = vpop.permute.xlu0 %1403
      %s1406 = scalar_lea.vmem [#allocation3], 40
      %1407 = vst.msk [vmem:[%s1406] sm:$0xff] %vm557, %v1404
      %v1408 = vld [vmem:[#allocation3] sm:$0xff]
      %v1409 = vld [vmem:[#allocation3 + $0x8] sm:$0xff]
      %v1410 = vld [vmem:[#allocation3 + $0x10] sm:$0xff]
      %v1411 = vld [vmem:[#allocation3 + $0x18] sm:$0xff]
      %v1412 = vld [vmem:[#allocation3 + $0x20] sm:$0xff]
      %v1413 = vld [vmem:[#allocation3 + $0x28] sm:$0xff]
      %v1414 = vsel %vm557, %v1408, 0.0
      %1415 = vadd.xlane.f32.xlu0 %v1414
      %v1416 = vpop.xlane.xlu0 %1415
      %v1417 = vsel %vm557, %v1409, 0.0
      %1418 = vadd.xlane.f32.xlu0 %v1417
      %v1419 = vpop.xlane.xlu0 %1418
      %v1420 = vsel %vm557, %v1410, 0.0
      %1421 = vadd.xlane.f32.xlu0 %v1420
      %v1422 = vpop.xlane.xlu0 %1421
      %v1423 = vsel %vm557, %v1411, 0.0
      %1424 = vadd.xlane.f32.xlu0 %v1423
      %v1425 = vpop.xlane.xlu0 %1424
      %v1426 = vsel %vm557, %v1412, 0.0
      %1427 = vadd.xlane.f32.xlu0 %v1426
      %v1428 = vpop.xlane.xlu0 %1427
      %v1429 = vsel %vm557, %v1413, 0.0
      %1430 = vadd.xlane.f32.xlu0 %v1429
      %v1431 = vpop.xlane.xlu0 %1430
      %v1432 = vrcp.pop 32.0
      %v1433 = vmul.f32 32.0, %v1432
      %v1434 = vsub.f32 1.0, %v1433
      %v1435 = vmul.f32 %v1432, %v1434
      %v1436 = vadd.f32 %v1432, %v1435
      %vm1437 = vweird.f32 %v1432
      %v1438 = vsel %vm1437, %v1432, %v1436
      %v1439 = vmul.f32 %v1416, %v1438
      %v1440 = vmul.f32 %v1419, %v1438
      %v1441 = vmul.f32 %v1422, %v1438
      %v1442 = vmul.f32 %v1425, %v1438
      %v1443 = vmul.f32 %v1428, %v1438
      %v1444 = vmul.f32 %v1431, %v1438
      %v1445 = vsub.f32 %v1408, %v1439
      %v1446 = vsub.f32 %v1409, %v1440
      %v1447 = vsub.f32 %v1410, %v1441
      %v1448 = vsub.f32 %v1411, %v1442
      %v1449 = vsub.f32 %v1412, %v1443
      %v1450 = vsub.f32 %v1413, %v1444
      %v1451 = vmul.f32 %v1445, %v1445
      %v1452 = vmul.f32 %v1446, %v1446
      %v1453 = vmul.f32 %v1447, %v1447
      %v1454 = vmul.f32 %v1448, %v1448
      %v1455 = vmul.f32 %v1449, %v1449
      %v1456 = vmul.f32 %v1450, %v1450
      %v1457 = vsel %vm557, %v1451, 0.0
      %1458 = vadd.xlane.f32.xlu0 %v1457
      %v1459 = vpop.xlane.xlu0 %1458
      %v1460 = vsel %vm557, %v1452, 0.0
      %1461 = vadd.xlane.f32.xlu0 %v1460
      %v1462 = vpop.xlane.xlu0 %1461
      %v1463 = vsel %vm557, %v1453, 0.0
      %1464 = vadd.xlane.f32.xlu0 %v1463
      %v1465 = vpop.xlane.xlu0 %1464
      %v1466 = vsel %vm557, %v1454, 0.0
      %1467 = vadd.xlane.f32.xlu0 %v1466
      %v1468 = vpop.xlane.xlu0 %1467
      %v1469 = vsel %vm557, %v1455, 0.0
      %1470 = vadd.xlane.f32.xlu0 %v1469
      %v1471 = vpop.xlane.xlu0 %1470
      %v1472 = vsel %vm557, %v1456, 0.0
      %1473 = vadd.xlane.f32.xlu0 %v1472
      %v1474 = vpop.xlane.xlu0 %1473
      %v1475 = vmul.f32 %v1459, %v1438
      %v1476 = vmul.f32 %v1462, %v1438
      %v1477 = vmul.f32 %v1465, %v1438
      %v1478 = vmul.f32 %v1468, %v1438
      %v1479 = vmul.f32 %v1471, %v1438
      %v1480 = vmul.f32 %v1474, %v1438
      %v1481 = vadd.f32 %v1475, 1e-05
      %v1482 = vadd.f32 %v1476, 1e-05
      %v1483 = vadd.f32 %v1477, 1e-05
      %v1484 = vadd.f32 %v1478, 1e-05
      %v1485 = vadd.f32 %v1479, 1e-05
      %v1486 = vadd.f32 %v1480, 1e-05
      %v1487 = vrsqrt.pop %v1481
      %v1488 = vmul.f32 %v1487, %v1481
      %v1489 = vmul.f32 %v1488, %v1487
      %v1490 = vmul.f32 0.5, %v1489
      %v1491 = vsub.f32 1.5, %v1490
      %v1492 = vmul.f32 %v1487, %v1491
      %vm1493 = vweird.f32 %v1481
      %vm1494 = vweird.f32 %v1487
      %vm1495 = vmor %vm1493, %vm1494
      %v1496 = vsel %vm1495, %v1487, %v1492
      %v1497 = vrsqrt.pop %v1482
      %v1498 = vmul.f32 %v1497, %v1482
      %v1499 = vmul.f32 %v1498, %v1497
      %v1500 = vmul.f32 0.5, %v1499
      %v1501 = vsub.f32 1.5, %v1500
      %v1502 = vmul.f32 %v1497, %v1501
      %vm1503 = vweird.f32 %v1482
      %vm1504 = vweird.f32 %v1497
      %vm1505 = vmor %vm1503, %vm1504
      %v1506 = vsel %vm1505, %v1497, %v1502
      %v1507 = vrsqrt.pop %v1483
      %v1508 = vmul.f32 %v1507, %v1483
      %v1509 = vmul.f32 %v1508, %v1507
      %v1510 = vmul.f32 0.5, %v1509
      %v1511 = vsub.f32 1.5, %v1510
      %v1512 = vmul.f32 %v1507, %v1511
      %vm1513 = vweird.f32 %v1483
      %vm1514 = vweird.f32 %v1507
      %vm1515 = vmor %vm1513, %vm1514
      %v1516 = vsel %vm1515, %v1507, %v1512
      %v1517 = vrsqrt.pop %v1484
      %v1518 = vmul.f32 %v1517, %v1484
      %v1519 = vmul.f32 %v1518, %v1517
      %v1520 = vmul.f32 0.5, %v1519
      %v1521 = vsub.f32 1.5, %v1520
      %v1522 = vmul.f32 %v1517, %v1521
      %vm1523 = vweird.f32 %v1484
      %vm1524 = vweird.f32 %v1517
      %vm1525 = vmor %vm1523, %vm1524
      %v1526 = vsel %vm1525, %v1517, %v1522
      %v1527 = vrsqrt.pop %v1485
      %v1528 = vmul.f32 %v1527, %v1485
      %v1529 = vmul.f32 %v1528, %v1527
      %v1530 = vmul.f32 0.5, %v1529
      %v1531 = vsub.f32 1.5, %v1530
      %v1532 = vmul.f32 %v1527, %v1531
      %vm1533 = vweird.f32 %v1485
      %vm1534 = vweird.f32 %v1527
      %vm1535 = vmor %vm1533, %vm1534
      %v1536 = vsel %vm1535, %v1527, %v1532
      %v1537 = vrsqrt.pop %v1486
      %v1538 = vmul.f32 %v1537, %v1486
      %v1539 = vmul.f32 %v1538, %v1537
      %v1540 = vmul.f32 0.5, %v1539
      %v1541 = vsub.f32 1.5, %v1540
      %v1542 = vmul.f32 %v1537, %v1541
      %vm1543 = vweird.f32 %v1486
      %vm1544 = vweird.f32 %v1537
      %vm1545 = vmor %vm1543, %vm1544
      %v1546 = vsel %vm1545, %v1537, %v1542
      %v1547 = vmul.f32 %v1445, %v1496
      %v1548 = vmul.f32 %v1446, %v1506
      %v1549 = vmul.f32 %v1447, %v1516
      %v1550 = vmul.f32 %v1448, %v1526
      %v1551 = vmul.f32 %v1449, %v1536
      %v1552 = vmul.f32 %v1450, %v1546
      %v1553 = vpack.c.bf16 %v1548, %v1547
      %v1554 = vpack.c.bf16 %v1550, %v1549
      %v1555 = vpack.c.bf16 %v1552, %v1551
      %v1556 = vld [vmem:[%s472] sm:$0xff]
      %v1557 = vld [vmem:[%s472 + $0x8] sm:$0xff]
      %v1558 = vld [vmem:[%s472 + $0x10] sm:$0xff]
      %v1559 = vld [vmem:[%s472 + $0x18] sm:$0xff]
      %v1560 = vpack.c.bf16 %v1557, %v1556
      %v1561 = vpack.c.bf16 %v1559, %v1558
      %v1562 = vld [vmem:[%s475] sm:$0x1]
      %v1564 = vperm.slane %v1562, 0
      %v1567 = vsel %vm557, %v1553, 0
      %v1570 = vsel %vm557, %v1554, 0
      %v1573 = vsel %vm557, %v1555, 0
      %1575 = vmatpush.bf16.msra.mxu0 0
      %1576 = vmatpush.bf16.msra.mxu0 0
      %1577 = vmatpush.bf16.msra.mxu0 0
      %1578 = vmatpush.bf16.msra.mxu0 0
      %1579 = vmatpush.bf16.msra.mxu0 0
      %1580 = vmatpush.bf16.msra.mxu0 0
      %1581 = vmatpush.bf16.msra.mxu0 %v1561
      %1582 = vmatpush.bf16.msra.mxu0 %v1560
      %1583 = vmatmul.bf16.gmra.mxu0 %v1567
      %v1584 = vpop.f32.mrf.mxu0
      %v1585 = vadd.f32 %v1564, %v1584
      %v1586 = vpop.f32.mrf.mxu0
      %v1587 = vadd.f32 %v1564, %v1586
      %1588 = vmatmul.bf16.gmra.mxu0 %v1570
      %v1589 = vpop.f32.mrf.mxu0
      %v1590 = vadd.f32 %v1564, %v1589
      %v1591 = vpop.f32.mrf.mxu0
      %v1592 = vadd.f32 %v1564, %v1591
      %1593 = vmatmul.bf16.gmra.mxu0 %v1573
      %v1594 = vpop.f32.mrf.mxu0
      %v1595 = vadd.f32 %v1564, %v1594
      %v1596 = vpop.f32.mrf.mxu0
      %v1597 = vadd.f32 %v1564, %v1596
      %1598 = vdwg.mxu0
      %v1599 = vxor.u32 %v1585, 2147483648
      %v1600 = vxor.u32 %v1587, 2147483648
      %v1601 = vxor.u32 %v1590, 2147483648
      %v1602 = vxor.u32 %v1592, 2147483648
      %v1603 = vxor.u32 %v1595, 2147483648
      %v1604 = vxor.u32 %v1597, 2147483648
      %v1605 = vmul.f32 %v1599, 1.442695
      %v1606 = vpow.pop %v1605
      %v1607 = vmul.f32 %v1600, 1.442695
      %v1608 = vpow.pop %v1607
      %v1609 = vmul.f32 %v1601, 1.442695
      %v1610 = vpow.pop %v1609
      %v1611 = vmul.f32 %v1602, 1.442695
      %v1612 = vpow.pop %v1611
      %v1613 = vmul.f32 %v1603, 1.442695
      %v1614 = vpow.pop %v1613
      %v1615 = vmul.f32 %v1604, 1.442695
      %v1616 = vpow.pop %v1615
      %v1617 = vadd.f32 %v1606, 1.0
      %v1618 = vadd.f32 %v1608, 1.0
      %v1619 = vadd.f32 %v1610, 1.0
      %v1620 = vadd.f32 %v1612, 1.0
      %v1621 = vadd.f32 %v1614, 1.0
      %v1622 = vadd.f32 %v1616, 1.0
      %v1623 = vrcp.pop %v1617
      %v1624 = vmul.f32 %v1617, %v1623
      %v1625 = vsub.f32 1.0, %v1624
      %v1626 = vmul.f32 %v1623, %v1625
      %v1627 = vadd.f32 %v1623, %v1626
      %vm1628 = vweird.f32 %v1617
      %vm1629 = vweird.f32 %v1623
      %vm1630 = vmor %vm1628, %vm1629
      %v1631 = vsel %vm1630, %v1623, %v1627
      %v1632 = vand.u32 2147483647, %v1617
      %vm1633 = vcmp.eq.f32.partialorder %v1632, 8.507059e+37
      %v1634 = vand.u32 %v1617, 2147483648
      %v1635 = vor.u32 1.1754944e-38, %v1634
      %v1636 = vsel %vm1633, %v1635, %v1631
      %v1637 = vmul.f32 1.0, %v1636
      %v1638 = vrcp.pop %v1618
      %v1639 = vmul.f32 %v1618, %v1638
      %v1640 = vsub.f32 1.0, %v1639
      %v1641 = vmul.f32 %v1638, %v1640
      %v1642 = vadd.f32 %v1638, %v1641
      %vm1643 = vweird.f32 %v1618
      %vm1644 = vweird.f32 %v1638
      %vm1645 = vmor %vm1643, %vm1644
      %v1646 = vsel %vm1645, %v1638, %v1642
      %v1647 = vand.u32 2147483647, %v1618
      %vm1648 = vcmp.eq.f32.partialorder %v1647, 8.507059e+37
      %v1649 = vand.u32 %v1618, 2147483648
      %v1650 = vor.u32 1.1754944e-38, %v1649
      %v1651 = vsel %vm1648, %v1650, %v1646
      %v1652 = vmul.f32 1.0, %v1651
      %v1653 = vrcp.pop %v1619
      %v1654 = vmul.f32 %v1619, %v1653
      %v1655 = vsub.f32 1.0, %v1654
      %v1656 = vmul.f32 %v1653, %v1655
      %v1657 = vadd.f32 %v1653, %v1656
      %vm1658 = vweird.f32 %v1619
      %vm1659 = vweird.f32 %v1653
      %vm1660 = vmor %vm1658, %vm1659
      %v1661 = vsel %vm1660, %v1653, %v1657
      %v1662 = vand.u32 2147483647, %v1619
      %vm1663 = vcmp.eq.f32.partialorder %v1662, 8.507059e+37
      %v1664 = vand.u32 %v1619, 2147483648
      %v1665 = vor.u32 1.1754944e-38, %v1664
      %v1666 = vsel %vm1663, %v1665, %v1661
      %v1667 = vmul.f32 1.0, %v1666
      %v1668 = vrcp.pop %v1620
      %v1669 = vmul.f32 %v1620, %v1668
      %v1670 = vsub.f32 1.0, %v1669
      %v1671 = vmul.f32 %v1668, %v1670
      %v1672 = vadd.f32 %v1668, %v1671
      %vm1673 = vweird.f32 %v1620
      %vm1674 = vweird.f32 %v1668
      %vm1675 = vmor %vm1673, %vm1674
      %v1676 = vsel %vm1675, %v1668, %v1672
      %v1677 = vand.u32 2147483647, %v1620
      %vm1678 = vcmp.eq.f32.partialorder %v1677, 8.507059e+37
      %v1679 = vand.u32 %v1620, 2147483648
      %v1680 = vor.u32 1.1754944e-38, %v1679
      %v1681 = vsel %vm1678, %v1680, %v1676
      %v1682 = vmul.f32 1.0, %v1681
      %v1683 = vrcp.pop %v1621
      %v1684 = vmul.f32 %v1621, %v1683
      %v1685 = vsub.f32 1.0, %v1684
      %v1686 = vmul.f32 %v1683, %v1685
      %v1687 = vadd.f32 %v1683, %v1686
      %vm1688 = vweird.f32 %v1621
      %vm1689 = vweird.f32 %v1683
      %vm1690 = vmor %vm1688, %vm1689
      %v1691 = vsel %vm1690, %v1683, %v1687
      %v1692 = vand.u32 2147483647, %v1621
      %vm1693 = vcmp.eq.f32.partialorder %v1692, 8.507059e+37
      %v1694 = vand.u32 %v1621, 2147483648
      %v1695 = vor.u32 1.1754944e-38, %v1694
      %v1696 = vsel %vm1693, %v1695, %v1691
      %v1697 = vmul.f32 1.0, %v1696
      %v1698 = vrcp.pop %v1622
      %v1699 = vmul.f32 %v1622, %v1698
      %v1700 = vsub.f32 1.0, %v1699
      %v1701 = vmul.f32 %v1698, %v1700
      %v1702 = vadd.f32 %v1698, %v1701
      %vm1703 = vweird.f32 %v1622
      %vm1704 = vweird.f32 %v1698
      %vm1705 = vmor %vm1703, %vm1704
      %v1706 = vsel %vm1705, %v1698, %v1702
      %v1707 = vand.u32 2147483647, %v1622
      %vm1708 = vcmp.eq.f32.partialorder %v1707, 8.507059e+37
      %v1709 = vand.u32 %v1622, 2147483648
      %v1710 = vor.u32 1.1754944e-38, %v1709
      %v1711 = vsel %vm1708, %v1710, %v1706
      %v1712 = vmul.f32 1.0, %v1711
      %vm1713 = vcmask 64512
      %1714 = vst.msk [vmem:[%s480] sm:$0xff] %vm1713, %v1637
      %1715 = vst.msk [vmem:[%s480 + $0x8] sm:$0xff] %vm1713, %v1652
      %1716 = vst.msk [vmem:[%s480 + $0x10] sm:$0xff] %vm1713, %v1667
      %1717 = vst.msk [vmem:[%s480 + $0x18] sm:$0xff] %vm1713, %v1682
      %1718 = vst.msk [vmem:[%s480 + $0x20] sm:$0xff] %vm1713, %v1697
      %1719 = vst.msk [vmem:[%s480 + $0x28] sm:$0xff] %vm1713, %v1712
      %p1720 = scmp.lt.s32.totalorder %s20, 3
      %s1721 = scalar_select %p1720, %s20, 3
      %s1722 = smul.addr %s1721, 6
      %s1723 = smul.addr %s1722, 8
      %s1724 = scalar_lea.vmem %s9, %s1723
      // Predicated region
      $region57: #{gcn_vae_forward.5} parent=55 // pred_check
        %p1725 = pneg %p272
      $region58: #{gcn_vae_forward.5} parent=55 // pred_check_branch
        %1727 = sbr.rel (%p1725) target = $region60
      $region59: #{gcn_vae_forward.5} parent=55 // pred_region
        _
      $region60: #{gcn_vae_forward.5} parent=55 // pred_fallthru
        _
    $region56: #{gcn_vae_forward.5} parent=5 // pred_fallthru
      _
    %p1728 = scmp.le.s32.totalorder 2, %s15
    // Predicated region
    $region61: #{gcn_vae_forward.5} parent=5 // pred_check
      %p1729 = pneg %p1728
    $region62: #{gcn_vae_forward.5} parent=5 // pred_check_branch
      %1731 = sbr.rel (%p1729) target = $region64
    $region63: #{gcn_vae_forward.5} parent=5 // pred_region
      %s1732 = ssub.s32 %s15, 2
      // Predicated region
      $region65: #{gcn_vae_forward.5} parent=63 // pred_check
        %p1733 = pneg %p278
      $region66: #{gcn_vae_forward.5} parent=63 // pred_check_branch
        %1735 = sbr.rel (%p1733) target = $region68
      $region67: #{gcn_vae_forward.5} parent=63 // pred_region
        %p1736 = scmp.lt.s32.totalorder %s21, 3
        %s1737 = scalar_select %p1736, %s21, 3
        %s1738 = smul.addr %s1737, 6
        %s1739 = smul.addr %s1738, 8
        %s1740 = scalar_lea.vmem %s9, %s1739
      $region68: #{gcn_vae_forward.5} parent=63 // pred_fallthru
        _
    $region64: #{gcn_vae_forward.5} parent=5 // pred_fallthru
      _
  $region6: #{gcn_vae_forward.5} parent=0 // loop_footer
    %s19 = sadd.s32 1, %s15
  $region7: #{gcn_vae_forward.5} parent=0 // loop_footer_branch
    %14 = sbr.rel target = $region3
  $region8: #{gcn_vae_forward.5} parent=0 // loop_exit
    _

</llo_original>
